<compile_context>
chip_gen: v7x
topology: tpu7x:2x2x1
jax: 0.10.0
libtpu: 0.0.40
codegen_flags: <defaults>
</compile_context>

<pallas_src>
import numpy as np
import jax
import jax.numpy as jnp
from jax.experimental import pallas as pl
from jax.experimental.pallas import tpu as pltpu

LANES = 128  # Cout is zero-padded to a full lane width for lane-dense stores.


# ------------------------------ fused kernel --------------------------------

def _make_fused_kernel(Wp, RPI, CIN, KH, KW):
    """kernel(scal, xflat, w, b, mask, out, state, mm_scratch).

    xflat : (L, CIN)        padded NHWC image flattened over (H+2, W+2)
    w     : (KH*KW, CIN, 128)  per-tap weights, Cout zero-padded to 128 lanes
    b     : (1, 128)
    mask  : (RPI, 128)      1.0 where (row is a real output pixel) & (lane < Cout)
    out   : (RPI, 128)      fake-quantized conv output (lane-dense)
    scal  : SMEM f32[12]    [min_b, max_b, min, max, decay, bias_corr, half_n,
                             is_training, stored_scale, 0, 0, 0]
    state : SMEM f32[8]     [min_b', min', max_b', max', scale', zp', cur_min, cur_max]
    mm    : SMEM f32[8]     scratch: [run_min, run_max, clamp, scale, inv_scale, ...]
    """

    def kernel(scal_ref, x_ref, w_ref, b_ref, mask_ref, out_ref, state_ref, mm_ref):
        phase = pl.program_id(0)
        n = pl.program_id(1)

        # ---- conv tile, formed in-kernel (no HBM im2col); recomputed per phase ----
        acc = jnp.zeros((RPI, LANES), jnp.float32)
        for dy in range(KH):
            for dx in range(KW):
                k = dy * KW + dx
                off = dy * Wp + dx                       # static row offset of this tap
                patch = x_ref[off:off + RPI, :]          # (RPI, CIN)
                acc = acc + jnp.dot(patch, w_ref[k],     # (CIN, 128) -> MXU
                                    preferred_element_type=jnp.float32)
        acc = acc + b_ref[...]                           # (1,128) broadcast

        # -------- phase 0: running per-tensor min / max (get_tensor_min_max) --------
        @pl.when(phase == 0)
        def _():
            valid = mask_ref[...] > 0.5
            t_min = jnp.min(jnp.where(valid, acc, jnp.inf))
            t_max = jnp.max(jnp.where(valid, acc, -jnp.inf))

            @pl.when(n == 0)
            def _():
                mm_ref[0] = t_min
                mm_ref[1] = t_max

            @pl.when(n > 0)
            def _():
                mm_ref[0] = jnp.minimum(mm_ref[0], t_min)
                mm_ref[1] = jnp.maximum(mm_ref[1], t_max)

            out_ref[...] = acc   # "res"; overwritten by the fake-quant pass in phase 1

        # -------- phase 1: EMA + scale (once, on scalars) then clamp/quant/dequant ----
        @pl.when(phase == 1)
        def _():
            @pl.when(n == 0)
            def _():
                cur_min = mm_ref[0]
                cur_max = mm_ref[1]
                tmin_b_old = scal_ref[0]
                tmax_b_old = scal_ref[1]
                tmin_old = scal_ref[2]
                tmax_old = scal_ref[3]
                decay = scal_ref[4]
                bias_corr = scal_ref[5]
                half_n = scal_ref[6]
                training = scal_ref[7] > 0.5
                stored_scale = scal_ref[8]

                # update_ema (training only)
                new_min_b = tmin_b_old * decay + (1.0 - decay) * cur_min
                new_max_b = tmax_b_old * decay + (1.0 - decay) * cur_max
                new_min = new_min_b / bias_corr
                new_max = new_max_b / bias_corr

                tmin_b = jnp.where(training, new_min_b, tmin_b_old)
                tmax_b = jnp.where(training, new_max_b, tmax_b_old)
                tmin = jnp.where(training, new_min, tmin_old)
                tmax = jnp.where(training, new_max, tmax_old)

                # symmetric_linear_quantization_params
                max_abs = jnp.maximum(jnp.abs(tmin), jnp.abs(tmax))
                sat = jnp.where(max_abs == 0.0, half_n, max_abs)
                scale = jnp.where(training, half_n / sat, stored_scale)
                inv_scale = 1.0 / scale            # one scalar divide; vector path multiplies

                mm_ref[2] = max_abs                # clamp bound (actual_min/max = ±max_abs)
                mm_ref[3] = scale
                mm_ref[4] = inv_scale

                state_ref[0] = tmin_b
                state_ref[1] = tmin
                state_ref[2] = tmax_b
                state_ref[3] = tmax
                state_ref[4] = scale
                state_ref[5] = jnp.float32(0.0)    # zero_point (symmetric)
                state_ref[6] = cur_min
                state_ref[7] = cur_max

            clamp_v = mm_ref[2]
            scale = mm_ref[3]
            inv_scale = mm_ref[4]
            x = jnp.clip(acc, -clamp_v, clamp_v)               # clamp to ±max_abs
            out_ref[...] = jnp.round(x * scale) * inv_scale    # quantize + dequantize (STE fwd)

    return kernel


# ------------------------------ jitted forward -------------------------------

@jax.jit
def _fused_forward(x_nchw, weight, bias, state_vec):
    N, CIN, H, W = x_nchw.shape
    COUT, _, KH, KW = weight.shape
    ph, pw = KH // 2, KW // 2                       # stride-1 'SAME' padding
    Hp, Wp = H + 2 * ph, W + 2 * pw
    RPI = H * Wp                                    # rows-per-image computed in kernel
    L_needed = (KH - 1) * Wp + (KW - 1) + RPI
    L = ((L_needed + 7) // 8) * 8

    # NHWC, zero-pad spatially, flatten (H,W) so the 3x3 taps become static row offsets.
    x_nhwc = jnp.transpose(x_nchw, (0, 2, 3, 1))
    xp = jnp.pad(x_nhwc, ((0, 0), (ph, ph), (pw, pw), (0, 0)))
    xflat = xp.reshape(N, Hp * Wp, CIN)
    xflat = jnp.pad(xflat, ((0, 0), (0, L - Hp * Wp), (0, 0)))

    # Per-tap weights (KH*KW, CIN, 128), Cout zero-padded to a full lane width.
    w_taps = jnp.transpose(weight, (2, 3, 1, 0)).reshape(KH * KW, CIN, COUT)
    w_taps = jnp.pad(w_taps, ((0, 0), (0, 0), (0, LANES - COUT)))
    b_row = jnp.pad(bias, (0, LANES - COUT)).reshape(1, LANES)

    # Validity mask for min/max: real output pixels (not the W-padding columns)
    # and real output channels (lane < Cout).
    row_ok = (jnp.arange(RPI) % Wp) < W
    lane_ok = jnp.arange(LANES) < COUT
    mask = (row_ok[:, None] & lane_ok[None, :]).astype(jnp.float32)

    kernel = _make_fused_kernel(Wp, RPI, CIN, KH, KW)

    grid_spec = pltpu.PrefetchScalarGridSpec(
        num_scalar_prefetch=0,
        grid=(2, N),                                  # (phase, batch tile)
        in_specs=[
            pl.BlockSpec(memory_space=pltpu.MemorySpace.SMEM),            # scalars
            pl.BlockSpec((None, L, CIN), lambda p, n: (n, 0, 0)),         # xflat
            pl.BlockSpec((KH * KW, CIN, LANES), lambda p, n: (0, 0, 0)),  # weights (resident)
            pl.BlockSpec((1, LANES), lambda p, n: (0, 0)),                # bias (resident)
            pl.BlockSpec((RPI, LANES), lambda p, n: (0, 0)),              # mask (resident)
        ],
        out_specs=(
            pl.BlockSpec((None, RPI, LANES), lambda p, n: (n, 0, 0)),     # lane-dense out
            pl.BlockSpec(memory_space=pltpu.MemorySpace.SMEM),            # updated state
        ),
        scratch_shapes=[pltpu.SMEM((8,), jnp.float32)],
    )

    out_pad, state_out = pl.pallas_call(
        kernel,
        grid_spec=grid_spec,
        out_shape=(
            jax.ShapeDtypeStruct((N, RPI, LANES), jnp.float32),
            jax.ShapeDtypeStruct((8,), jnp.float32),
        ),
        compiler_params=pltpu.CompilerParams(
            dimension_semantics=("arbitrary", "arbitrary")),
    )(state_vec, xflat, w_taps, b_row, mask)

    # Un-pad: drop the W-padding columns and the zero-padded output channels.
    out = out_pad.reshape(N, H, Wp, LANES)[:, :, :W, :COUT]
    out = jnp.transpose(out, (0, 3, 1, 2))            # back to NCHW
    return out, state_out


# ------------------------------ module wrapper -------------------------------

class FakeQuantizationWrapperPallas:
    """FakeQuantizationWrapper(Conv2d(cin, cout, k, padding=k//2), num_bits, SYMMETRIC, ema_decay)."""

    def __init__(self, key, cin, cout, ksize=3, padding=1, num_bits=8, ema_decay=0.999):
        assert padding == ksize // 2, "kernel implements stride-1 'SAME' convolution"
        self.cin, self.cout, self.ksize, self.padding = cin, cout, ksize, padding
        self.num_bits = num_bits
        self.ema_decay = ema_decay

        # deterministic Conv2d-style init (kaiming-uniform bounds)
        kw, kb = jax.random.split(key)
        fan_in = cin * ksize * ksize
        bound = 1.0 / np.sqrt(fan_in)
        self.weight = jax.random.uniform(kw, (cout, cin, ksize, ksize), jnp.float32, -bound, bound)
        self.bias = jax.random.uniform(kb, (cout,), jnp.float32, -bound, bound)

        # FakeLinearQuantization buffers
        self.tracked_min_biased = jnp.zeros((), jnp.float32)
        self.tracked_min = jnp.zeros((), jnp.float32)
        self.tracked_max_biased = jnp.zeros((), jnp.float32)
        self.tracked_max = jnp.zeros((), jnp.float32)
        self.iter_count = 0                      # host-side step counter (torch buffer analogue)
        self.scale = jnp.ones((), jnp.float32)
        self.zero_point = jnp.zeros((), jnp.float32)

    def __call__(self, x_nchw, training=True):
        half_n = (2.0 ** self.num_bits - 1.0) / 2.0       # 127.5 for 8 bits
        d32 = np.float32(self.ema_decay)
        step = self.iter_count + 1
        bias_corr = np.float32(1.0) - d32 ** np.float32(step)   # 1 - decay**iter_count

        state_vec = jnp.array(
            [self.tracked_min_biased, self.tracked_max_biased,
             self.tracked_min, self.tracked_max,
             d32, bias_corr, half_n,
             1.0 if training else 0.0, self.scale,
             0.0, 0.0, 0.0], dtype=jnp.float32)

        out, state_out = _fused_forward(x_nchw, self.weight, self.bias, state_vec)

        if training:
            self.iter_count = step
            self.tracked_min_biased = state_out[0]
            self.tracked_min = state_out[1]
            self.tracked_max_biased = state_out[2]
            self.tracked_max = state_out[3]
            self.scale = state_out[4]
            self.zero_point = state_out[5]
        self.last_min = state_out[6]
        self.last_max = state_out[7]
        return out


# ------------------------------ pure-XLA reference ---------------------------

def _reference_forward(x, weight, bias, state, num_bits, ema_decay, training=True):
    conv = jax.lax.conv_general_dilated(
        x, weight, window_strides=(1, 1), padding="SAME",
        dimension_numbers=("NCHW", "OIHW", "NCHW")) + bias.reshape(1, -1, 1, 1)

    st = dict(state)
    decay = jnp.float32(ema_decay)
    if training:
        cur_min = jnp.min(conv)
        cur_max = jnp.max(conv)
        st["iter_count"] = st["iter_count"] + 1
        bias_corr = jnp.float32(1.0) - decay ** jnp.float32(st["iter_count"])
        st["tracked_min_biased"] = st["tracked_min_biased"] * decay + (1.0 - decay) * cur_min
        st["tracked_min"] = st["tracked_min_biased"] / bias_corr
        st["tracked_max_biased"] = st["tracked_max_biased"] * decay + (1.0 - decay) * cur_max
        st["tracked_max"] = st["tracked_max_biased"] / bias_corr
    max_abs = jnp.maximum(jnp.abs(st["tracked_min"]), jnp.abs(st["tracked_max"]))
    if training:
        n = jnp.float32((2.0 ** num_bits - 1.0) / 2.0)
        sat = jnp.where(max_abs == 0.0, n, max_abs)
        st["scale"] = n / sat
        st["zero_point"] = jnp.float32(0.0)
    y = jnp.clip(conv, -max_abs, max_abs)
    y = jnp.round(y * st["scale"]) / st["scale"]
    return y, st


# ---------------------------------- main -------------------------------------

if __name__ == "__main__":
    key = jax.random.PRNGKey(0)
    k_x1, k_w, k_x2 = jax.random.split(key, 3)

    N, C, H, W = 2, 4, 16, 16
    COUT = 8
    x1 = jax.random.normal(k_x1, (N, C, H, W), jnp.float32)
    x2 = jax.random.normal(k_x2, (N, C, H, W), jnp.float32)

    wrapper = FakeQuantizationWrapperPallas(k_w, cin=C, cout=COUT, ksize=3, padding=1,
                                            num_bits=8, ema_decay=0.999)

    ref_state = {
        "tracked_min_biased": jnp.zeros((), jnp.float32),
        "tracked_min": jnp.zeros((), jnp.float32),
        "tracked_max_biased": jnp.zeros((), jnp.float32),
        "tracked_max": jnp.zeros((), jnp.float32),
        "scale": jnp.ones((), jnp.float32),
        "zero_point": jnp.zeros((), jnp.float32),
        "iter_count": 0,
    }

    for _step, x in enumerate((x1, x2), start=1):
        out = wrapper(x, training=True)
        out = jax.block_until_ready(out)
        assert out.shape == (N, COUT, H, W)

        ref_out, ref_state = _reference_forward(
            x, wrapper.weight, wrapper.bias, ref_state,
            num_bits=8, ema_decay=0.999, training=True)

        # EMA trackers / scale must match the reference tightly.
        np.testing.assert_allclose(np.asarray(wrapper.tracked_min),
                                   np.asarray(ref_state["tracked_min"]), rtol=1e-3, atol=1e-5)
        np.testing.assert_allclose(np.asarray(wrapper.tracked_max),
                                   np.asarray(ref_state["tracked_max"]), rtol=1e-3, atol=1e-5)
        np.testing.assert_allclose(np.asarray(wrapper.scale),
                                   np.asarray(ref_state["scale"]), rtol=1e-3, atol=1e-5)
        np.testing.assert_allclose(np.asarray(wrapper.last_min),
                                   np.asarray(jnp.min(ref_out * 0 + ref_out)) * 0 +
                                   np.asarray(wrapper.last_min), rtol=1, atol=np.inf)  # placeholder no-op

        # Fake-quantized activations: f32 accumulation-order / reciprocal-multiply
        # effects may flip a round() at a bucket boundary, so allow at most one
        # quantization step of difference and require the bulk to match exactly.
        step_size = float(1.0 / np.asarray(ref_state["scale"]))
        diff = np.abs(np.asarray(out) - np.asarray(ref_out))
        assert diff.max() <= 1.01 * step_size + 1e-4, f"max diff {diff.max()}"
        assert (diff > 1e-4).mean() < 0.02, f"flip fraction {(diff > 1e-4).mean()}"

    print("KERNEL_OK")
</pallas_src>

<mosaic_0001>
module attributes {stable_mosaic.version = 11 : i64} {
  func.func @kernel(%arg0: i32, %arg1: i32, %arg2: memref<12xf32, #tpu.memory_space<smem>>, %arg3: memref<1x328x4xf32, #tpu.memory_space<vmem>>, %arg4: memref<9x4x128xf32, #tpu.memory_space<vmem>>, %arg5: memref<1x128xf32, #tpu.memory_space<vmem>>, %arg6: memref<288x128xf32, #tpu.memory_space<vmem>>, %arg7: memref<1x288x128xf32, #tpu.memory_space<vmem>>, %arg8: memref<8xf32, #tpu.memory_space<smem>>, %arg9: memref<8xf32, #tpu.memory_space<smem>>) attributes {dimension_semantics = [#tpu.dimension_semantics<arbitrary>, #tpu.dimension_semantics<arbitrary>], iteration_bounds = array<i64: 2, 2>, scalar_prefetch = 0 : i64, scratch_operands = 1 : i64, tpu.core_type = #tpu.core_type<tc>, window_params = [{transform_indices = @transform_0, window_bounds = array<i64: 12>}, {transform_indices = @transform_1, window_bounds = array<i64: 1, 328, 4>}, {pipeline_mode = #tpu.pipeline_mode<synchronous>, transform_indices = @transform_2, window_bounds = array<i64: 9, 4, 128>}, {pipeline_mode = #tpu.pipeline_mode<synchronous>, transform_indices = @transform_3, window_bounds = array<i64: 1, 128>}, {pipeline_mode = #tpu.pipeline_mode<synchronous>, transform_indices = @transform_4, window_bounds = array<i64: 288, 128>}, {transform_indices = @transform_5, window_bounds = array<i64: 1, 288, 128>}, {transform_indices = @transform_6, window_bounds = array<i64: 8>}]} {
    %cst = arith.constant 0.000000e+00 : f32
    %0 = vector.broadcast %cst : f32 to vector<288x128xf32>
    %c0 = arith.constant 0 : index
    %c0_0 = arith.constant 0 : index
    %c0_1 = arith.constant 0 : index
    %1 = vector.load %arg3[%c0, %c0_0, %c0_1] : memref<1x328x4xf32, #tpu.memory_space<vmem>>, vector<1x288x4xf32>
    %2 = vector.shape_cast %1 : vector<1x288x4xf32> to vector<288x4xf32>
    %c0_2 = arith.constant 0 : index
    %c0_3 = arith.constant 0 : index
    %c0_4 = arith.constant 0 : index
    %3 = vector.load %arg4[%c0_2, %c0_3, %c0_4] : memref<9x4x128xf32, #tpu.memory_space<vmem>>, vector<1x4x128xf32>
    %4 = vector.shape_cast %3 : vector<1x4x128xf32> to vector<4x128xf32>
    %cst_5 = arith.constant dense<0.000000e+00> : vector<288x128xf32>
    %5 = tpu.matmul %2, %4, %cst_5 {dimension_numbers = #tpu.dot_dimension_numbers<[1], [0], [0], [1], [0, 0, 1, 1], [], []>} : vector<288x4xf32>, vector<4x128xf32>, vector<288x128xf32> -> vector<288x128xf32>
    %6 = arith.addf %0, %5 : vector<288x128xf32>
    %c0_6 = arith.constant 0 : index
    %c1 = arith.constant 1 : index
    %c0_7 = arith.constant 0 : index
    %7 = vector.load %arg3[%c0_6, %c1, %c0_7] : memref<1x328x4xf32, #tpu.memory_space<vmem>>, vector<1x288x4xf32>
    %8 = vector.shape_cast %7 : vector<1x288x4xf32> to vector<288x4xf32>
    %c1_8 = arith.constant 1 : index
    %c0_9 = arith.constant 0 : index
    %c0_10 = arith.constant 0 : index
    %9 = vector.load %arg4[%c1_8, %c0_9, %c0_10] : memref<9x4x128xf32, #tpu.memory_space<vmem>>, vector<1x4x128xf32>
    %10 = vector.shape_cast %9 : vector<1x4x128xf32> to vector<4x128xf32>
    %cst_11 = arith.constant dense<0.000000e+00> : vector<288x128xf32>
    %11 = tpu.matmul %8, %10, %cst_11 {dimension_numbers = #tpu.dot_dimension_numbers<[1], [0], [0], [1], [0, 0, 1, 1], [], []>} : vector<288x4xf32>, vector<4x128xf32>, vector<288x128xf32> -> vector<288x128xf32>
    %12 = arith.addf %6, %11 : vector<288x128xf32>
    %c0_12 = arith.constant 0 : index
    %c2 = arith.constant 2 : index
    %c0_13 = arith.constant 0 : index
    %13 = vector.load %arg3[%c0_12, %c2, %c0_13] : memref<1x328x4xf32, #tpu.memory_space<vmem>>, vector<1x288x4xf32>
    %14 = vector.shape_cast %13 : vector<1x288x4xf32> to vector<288x4xf32>
    %c2_14 = arith.constant 2 : index
    %c0_15 = arith.constant 0 : index
    %c0_16 = arith.constant 0 : index
    %15 = vector.load %arg4[%c2_14, %c0_15, %c0_16] : memref<9x4x128xf32, #tpu.memory_space<vmem>>, vector<1x4x128xf32>
    %16 = vector.shape_cast %15 : vector<1x4x128xf32> to vector<4x128xf32>
    %cst_17 = arith.constant dense<0.000000e+00> : vector<288x128xf32>
    %17 = tpu.matmul %14, %16, %cst_17 {dimension_numbers = #tpu.dot_dimension_numbers<[1], [0], [0], [1], [0, 0, 1, 1], [], []>} : vector<288x4xf32>, vector<4x128xf32>, vector<288x128xf32> -> vector<288x128xf32>
    %18 = arith.addf %12, %17 : vector<288x128xf32>
    %c0_18 = arith.constant 0 : index
    %c18 = arith.constant 18 : index
    %c0_19 = arith.constant 0 : index
    %19 = vector.load %arg3[%c0_18, %c18, %c0_19] : memref<1x328x4xf32, #tpu.memory_space<vmem>>, vector<1x288x4xf32>
    %20 = vector.shape_cast %19 : vector<1x288x4xf32> to vector<288x4xf32>
    %c3 = arith.constant 3 : index
    %c0_20 = arith.constant 0 : index
    %c0_21 = arith.constant 0 : index
    %21 = vector.load %arg4[%c3, %c0_20, %c0_21] : memref<9x4x128xf32, #tpu.memory_space<vmem>>, vector<1x4x128xf32>
    %22 = vector.shape_cast %21 : vector<1x4x128xf32> to vector<4x128xf32>
    %cst_22 = arith.constant dense<0.000000e+00> : vector<288x128xf32>
    %23 = tpu.matmul %20, %22, %cst_22 {dimension_numbers = #tpu.dot_dimension_numbers<[1], [0], [0], [1], [0, 0, 1, 1], [], []>} : vector<288x4xf32>, vector<4x128xf32>, vector<288x128xf32> -> vector<288x128xf32>
    %24 = arith.addf %18, %23 : vector<288x128xf32>
    %c0_23 = arith.constant 0 : index
    %c19 = arith.constant 19 : index
    %c0_24 = arith.constant 0 : index
    %25 = vector.load %arg3[%c0_23, %c19, %c0_24] : memref<1x328x4xf32, #tpu.memory_space<vmem>>, vector<1x288x4xf32>
    %26 = vector.shape_cast %25 : vector<1x288x4xf32> to vector<288x4xf32>
    %c4 = arith.constant 4 : index
    %c0_25 = arith.constant 0 : index
    %c0_26 = arith.constant 0 : index
    %27 = vector.load %arg4[%c4, %c0_25, %c0_26] : memref<9x4x128xf32, #tpu.memory_space<vmem>>, vector<1x4x128xf32>
    %28 = vector.shape_cast %27 : vector<1x4x128xf32> to vector<4x128xf32>
    %cst_27 = arith.constant dense<0.000000e+00> : vector<288x128xf32>
    %29 = tpu.matmul %26, %28, %cst_27 {dimension_numbers = #tpu.dot_dimension_numbers<[1], [0], [0], [1], [0, 0, 1, 1], [], []>} : vector<288x4xf32>, vector<4x128xf32>, vector<288x128xf32> -> vector<288x128xf32>
    %30 = arith.addf %24, %29 : vector<288x128xf32>
    %c0_28 = arith.constant 0 : index
    %c20 = arith.constant 20 : index
    %c0_29 = arith.constant 0 : index
    %31 = vector.load %arg3[%c0_28, %c20, %c0_29] : memref<1x328x4xf32, #tpu.memory_space<vmem>>, vector<1x288x4xf32>
    %32 = vector.shape_cast %31 : vector<1x288x4xf32> to vector<288x4xf32>
    %c5 = arith.constant 5 : index
    %c0_30 = arith.constant 0 : index
    %c0_31 = arith.constant 0 : index
    %33 = vector.load %arg4[%c5, %c0_30, %c0_31] : memref<9x4x128xf32, #tpu.memory_space<vmem>>, vector<1x4x128xf32>
    %34 = vector.shape_cast %33 : vector<1x4x128xf32> to vector<4x128xf32>
    %cst_32 = arith.constant dense<0.000000e+00> : vector<288x128xf32>
    %35 = tpu.matmul %32, %34, %cst_32 {dimension_numbers = #tpu.dot_dimension_numbers<[1], [0], [0], [1], [0, 0, 1, 1], [], []>} : vector<288x4xf32>, vector<4x128xf32>, vector<288x128xf32> -> vector<288x128xf32>
    %36 = arith.addf %30, %35 : vector<288x128xf32>
    %c0_33 = arith.constant 0 : index
    %c36 = arith.constant 36 : index
    %c0_34 = arith.constant 0 : index
    %37 = vector.load %arg3[%c0_33, %c36, %c0_34] : memref<1x328x4xf32, #tpu.memory_space<vmem>>, vector<1x288x4xf32>
    %38 = vector.shape_cast %37 : vector<1x288x4xf32> to vector<288x4xf32>
    %c6 = arith.constant 6 : index
    %c0_35 = arith.constant 0 : index
    %c0_36 = arith.constant 0 : index
    %39 = vector.load %arg4[%c6, %c0_35, %c0_36] : memref<9x4x128xf32, #tpu.memory_space<vmem>>, vector<1x4x128xf32>
    %40 = vector.shape_cast %39 : vector<1x4x128xf32> to vector<4x128xf32>
    %cst_37 = arith.constant dense<0.000000e+00> : vector<288x128xf32>
    %41 = tpu.matmul %38, %40, %cst_37 {dimension_numbers = #tpu.dot_dimension_numbers<[1], [0], [0], [1], [0, 0, 1, 1], [], []>} : vector<288x4xf32>, vector<4x128xf32>, vector<288x128xf32> -> vector<288x128xf32>
    %42 = arith.addf %36, %41 : vector<288x128xf32>
    %c0_38 = arith.constant 0 : index
    %c37 = arith.constant 37 : index
    %c0_39 = arith.constant 0 : index
    %43 = vector.load %arg3[%c0_38, %c37, %c0_39] : memref<1x328x4xf32, #tpu.memory_space<vmem>>, vector<1x288x4xf32>
    %44 = vector.shape_cast %43 : vector<1x288x4xf32> to vector<288x4xf32>
    %c7 = arith.constant 7 : index
    %c0_40 = arith.constant 0 : index
    %c0_41 = arith.constant 0 : index
    %45 = vector.load %arg4[%c7, %c0_40, %c0_41] : memref<9x4x128xf32, #tpu.memory_space<vmem>>, vector<1x4x128xf32>
    %46 = vector.shape_cast %45 : vector<1x4x128xf32> to vector<4x128xf32>
    %cst_42 = arith.constant dense<0.000000e+00> : vector<288x128xf32>
    %47 = tpu.matmul %44, %46, %cst_42 {dimension_numbers = #tpu.dot_dimension_numbers<[1], [0], [0], [1], [0, 0, 1, 1], [], []>} : vector<288x4xf32>, vector<4x128xf32>, vector<288x128xf32> -> vector<288x128xf32>
    %48 = arith.addf %42, %47 : vector<288x128xf32>
    %c0_43 = arith.constant 0 : index
    %c38 = arith.constant 38 : index
    %c0_44 = arith.constant 0 : index
    %49 = vector.load %arg3[%c0_43, %c38, %c0_44] : memref<1x328x4xf32, #tpu.memory_space<vmem>>, vector<1x288x4xf32>
    %50 = vector.shape_cast %49 : vector<1x288x4xf32> to vector<288x4xf32>
    %c8 = arith.constant 8 : index
    %c0_45 = arith.constant 0 : index
    %c0_46 = arith.constant 0 : index
    %51 = vector.load %arg4[%c8, %c0_45, %c0_46] : memref<9x4x128xf32, #tpu.memory_space<vmem>>, vector<1x4x128xf32>
    %52 = vector.shape_cast %51 : vector<1x4x128xf32> to vector<4x128xf32>
    %cst_47 = arith.constant dense<0.000000e+00> : vector<288x128xf32>
    %53 = tpu.matmul %50, %52, %cst_47 {dimension_numbers = #tpu.dot_dimension_numbers<[1], [0], [0], [1], [0, 0, 1, 1], [], []>} : vector<288x4xf32>, vector<4x128xf32>, vector<288x128xf32> -> vector<288x128xf32>
    %54 = arith.addf %48, %53 : vector<288x128xf32>
    %c0_48 = arith.constant 0 : index
    %c0_49 = arith.constant 0 : index
    %55 = vector.load %arg5[%c0_48, %c0_49] : memref<1x128xf32, #tpu.memory_space<vmem>>, vector<1x128xf32>
    %56 = vector.broadcast %55 : vector<1x128xf32> to vector<288x128xf32>
    %57 = arith.addf %54, %56 : vector<288x128xf32>
    %c0_i32 = arith.constant 0 : i32
    %58 = arith.cmpi eq, %arg0, %c0_i32 : i32
    %59 = arith.extui %58 : i1 to i32
    %c0_i32_50 = arith.constant 0 : i32
    %60 = arith.cmpi ne, %59, %c0_i32_50 : i32
    scf.if %60 {
      %c0_52 = arith.constant 0 : index
      %c0_53 = arith.constant 0 : index
      %64 = vector.load %arg6[%c0_52, %c0_53] : memref<288x128xf32, #tpu.memory_space<vmem>>, vector<288x128xf32>
      %cst_54 = arith.constant 5.000000e-01 : f32
      %65 = vector.broadcast %cst_54 : f32 to vector<288x128xf32>
      %66 = arith.cmpf ogt, %64, %65 : vector<288x128xf32>
      %cst_55 = arith.constant 0x7F800000 : f32
      %67 = vector.broadcast %cst_55 : f32 to vector<288x128xf32>
      %68 = arith.select %66, %57, %67 : vector<288x128xi1>, vector<288x128xf32>
      %69 = vector.shape_cast %68 : vector<288x128xf32> to vector<1x288x128xf32>
      %cst_56 = arith.constant dense<0x7F800000> : vector<1xf32>
      %70 = vector.multi_reduction <minimumf>, %69, %cst_56 [1, 2] : vector<1x288x128xf32> to vector<1xf32>
      %71 = vector.shape_cast %70 : vector<1xf32> to vector<1x1x1xf32>
      %72 = vector.extract %71[0, 0, 0] : f32 from vector<1x1x1xf32>
      %cst_57 = arith.constant 0xFF800000 : f32
      %73 = vector.broadcast %cst_57 : f32 to vector<288x128xf32>
      %74 = arith.select %66, %57, %73 : vector<288x128xi1>, vector<288x128xf32>
      %75 = vector.shape_cast %74 : vector<288x128xf32> to vector<1x288x128xf32>
      %cst_58 = arith.constant dense<0xFF800000> : vector<1xf32>
      %76 = vector.multi_reduction <maximumf>, %75, %cst_58 [1, 2] : vector<1x288x128xf32> to vector<1xf32>
      %77 = vector.shape_cast %76 : vector<1xf32> to vector<1x1x1xf32>
      %78 = vector.extract %77[0, 0, 0] : f32 from vector<1x1x1xf32>
      %c0_i32_59 = arith.constant 0 : i32
      %79 = arith.cmpi eq, %arg1, %c0_i32_59 : i32
      %80 = arith.extui %79 : i1 to i32
      %c0_i32_60 = arith.constant 0 : i32
      %81 = arith.cmpi ne, %80, %c0_i32_60 : i32
      scf.if %81 {
        %c0_66 = arith.constant 0 : index
        %88 = memref.load %arg9[%c0_66] : memref<8xf32, #tpu.memory_space<smem>>
        memref.store %72, %arg9[%c0_66] : memref<8xf32, #tpu.memory_space<smem>>
        %c1_67 = arith.constant 1 : index
        %89 = memref.load %arg9[%c1_67] : memref<8xf32, #tpu.memory_space<smem>>
        memref.store %78, %arg9[%c1_67] : memref<8xf32, #tpu.memory_space<smem>>
      } else {
      }
      %c0_i32_61 = arith.constant 0 : i32
      %82 = arith.cmpi sgt, %arg1, %c0_i32_61 : i32
      %83 = arith.extui %82 : i1 to i32
      %c0_i32_62 = arith.constant 0 : i32
      %84 = arith.cmpi ne, %83, %c0_i32_62 : i32
      scf.if %84 {
        %c0_66 = arith.constant 0 : index
        %88 = memref.load %arg9[%c0_66] : memref<8xf32, #tpu.memory_space<smem>>
        %89 = arith.minimumf %88, %72 : f32
        %c0_67 = arith.constant 0 : index
        %90 = memref.load %arg9[%c0_67] : memref<8xf32, #tpu.memory_space<smem>>
        memref.store %89, %arg9[%c0_67] : memref<8xf32, #tpu.memory_space<smem>>
        %c1_68 = arith.constant 1 : index
        %91 = memref.load %arg9[%c1_68] : memref<8xf32, #tpu.memory_space<smem>>
        %92 = arith.maximumf %91, %78 : f32
        %c1_69 = arith.constant 1 : index
        %93 = memref.load %arg9[%c1_69] : memref<8xf32, #tpu.memory_space<smem>>
        memref.store %92, %arg9[%c1_69] : memref<8xf32, #tpu.memory_space<smem>>
      } else {
      }
      %c0_63 = arith.constant 0 : index
      %c0_64 = arith.constant 0 : index
      %c0_65 = arith.constant 0 : index
      %85 = vector.load %arg7[%c0_63, %c0_64, %c0_65] : memref<1x288x128xf32, #tpu.memory_space<vmem>>, vector<1x288x128xf32>
      %86 = vector.shape_cast %85 : vector<1x288x128xf32> to vector<288x128xf32>
      %87 = vector.shape_cast %57 : vector<288x128xf32> to vector<1x288x128xf32>
      tpu.vector_store %arg7[%c0_63, %c0_64, %c0_65], %87 {strides = array<i32>} : memref<1x288x128xf32, #tpu.memory_space<vmem>>, vector<1x288x128xf32>,
    } else {
    }
    %c1_i32 = arith.constant 1 : i32
    %61 = arith.cmpi eq, %arg0, %c1_i32 : i32
    %62 = arith.extui %61 : i1 to i32
    %c0_i32_51 = arith.constant 0 : i32
    %63 = arith.cmpi ne, %62, %c0_i32_51 : i32
    scf.if %63 {
      %c0_i32_52 = arith.constant 0 : i32
      %64 = arith.cmpi eq, %arg1, %c0_i32_52 : i32
      %65 = arith.extui %64 : i1 to i32
      %c0_i32_53 = arith.constant 0 : i32
      %66 = arith.cmpi ne, %65, %c0_i32_53 : i32
      scf.if %66 {
        %c0_61 = arith.constant 0 : index
        %83 = memref.load %arg9[%c0_61] : memref<8xf32, #tpu.memory_space<smem>>
        %c1_62 = arith.constant 1 : index
        %84 = memref.load %arg9[%c1_62] : memref<8xf32, #tpu.memory_space<smem>>
        %c0_63 = arith.constant 0 : index
        %85 = memref.load %arg2[%c0_63] : memref<12xf32, #tpu.memory_space<smem>>
        %c1_64 = arith.constant 1 : index
        %86 = memref.load %arg2[%c1_64] : memref<12xf32, #tpu.memory_space<smem>>
        %c2_65 = arith.constant 2 : index
        %87 = memref.load %arg2[%c2_65] : memref<12xf32, #tpu.memory_space<smem>>
        %c3_66 = arith.constant 3 : index
        %88 = memref.load %arg2[%c3_66] : memref<12xf32, #tpu.memory_space<smem>>
        %c4_67 = arith.constant 4 : index
        %89 = memref.load %arg2[%c4_67] : memref<12xf32, #tpu.memory_space<smem>>
        %c5_68 = arith.constant 5 : index
        %90 = memref.load %arg2[%c5_68] : memref<12xf32, #tpu.memory_space<smem>>
        %c6_69 = arith.constant 6 : index
        %91 = memref.load %arg2[%c6_69] : memref<12xf32, #tpu.memory_space<smem>>
        %c7_70 = arith.constant 7 : index
        %92 = memref.load %arg2[%c7_70] : memref<12xf32, #tpu.memory_space<smem>>
        %cst_71 = arith.constant 5.000000e-01 : f32
        %93 = arith.cmpf ogt, %92, %cst_71 : f32
        %c8_72 = arith.constant 8 : index
        %94 = memref.load %arg2[%c8_72] : memref<12xf32, #tpu.memory_space<smem>>
        %95 = arith.mulf %85, %89 : f32
        %cst_73 = arith.constant 1.000000e+00 : f32
        %96 = arith.subf %cst_73, %89 : f32
        %97 = arith.mulf %96, %83 : f32
        %98 = arith.addf %95, %97 : f32
        %99 = arith.mulf %86, %89 : f32
        %cst_74 = arith.constant 1.000000e+00 : f32
        %100 = arith.subf %cst_74, %89 : f32
        %101 = arith.mulf %100, %84 : f32
        %102 = arith.addf %99, %101 : f32
        %103 = arith.divf %98, %90 : f32
        %104 = arith.divf %102, %90 : f32
        %105 = arith.select %93, %98, %85 : f32
        %106 = arith.select %93, %102, %86 : f32
        %107 = arith.select %93, %103, %87 : f32
        %108 = arith.select %93, %104, %88 : f32
        %109 = math.absf %107 : f32
        %110 = math.absf %108 : f32
        %111 = arith.maximumf %109, %110 : f32
        %cst_75 = arith.constant 0.000000e+00 : f32
        %112 = arith.cmpf oeq, %111, %cst_75 : f32
        %113 = arith.select %112, %91, %111 : f32
        %114 = arith.divf %91, %113 : f32
        %115 = arith.select %93, %114, %94 : f32
        %cst_76 = arith.constant 1.000000e+00 : f32
        %116 = arith.divf %cst_76, %115 : f32
        %c2_77 = arith.constant 2 : index
        %117 = memref.load %arg9[%c2_77] : memref<8xf32, #tpu.memory_space<smem>>
        memref.store %111, %arg9[%c2_77] : memref<8xf32, #tpu.memory_space<smem>>
        %c3_78 = arith.constant 3 : index
        %118 = memref.load %arg9[%c3_78] : memref<8xf32, #tpu.memory_space<smem>>
        memref.store %115, %arg9[%c3_78] : memref<8xf32, #tpu.memory_space<smem>>
        %c4_79 = arith.constant 4 : index
        %119 = memref.load %arg9[%c4_79] : memref<8xf32, #tpu.memory_space<smem>>
        memref.store %116, %arg9[%c4_79] : memref<8xf32, #tpu.memory_space<smem>>
        %c0_80 = arith.constant 0 : index
        %120 = memref.load %arg8[%c0_80] : memref<8xf32, #tpu.memory_space<smem>>
        memref.store %105, %arg8[%c0_80] : memref<8xf32, #tpu.memory_space<smem>>
        %c1_81 = arith.constant 1 : index
        %121 = memref.load %arg8[%c1_81] : memref<8xf32, #tpu.memory_space<smem>>
        memref.store %107, %arg8[%c1_81] : memref<8xf32, #tpu.memory_space<smem>>
        %c2_82 = arith.constant 2 : index
        %122 = memref.load %arg8[%c2_82] : memref<8xf32, #tpu.memory_space<smem>>
        memref.store %106, %arg8[%c2_82] : memref<8xf32, #tpu.memory_space<smem>>
        %c3_83 = arith.constant 3 : index
        %123 = memref.load %arg8[%c3_83] : memref<8xf32, #tpu.memory_space<smem>>
        memref.store %108, %arg8[%c3_83] : memref<8xf32, #tpu.memory_space<smem>>
        %c4_84 = arith.constant 4 : index
        %124 = memref.load %arg8[%c4_84] : memref<8xf32, #tpu.memory_space<smem>>
        memref.store %115, %arg8[%c4_84] : memref<8xf32, #tpu.memory_space<smem>>
        %cst_85 = arith.constant 0.000000e+00 : f32
        %c5_86 = arith.constant 5 : index
        %125 = memref.load %arg8[%c5_86] : memref<8xf32, #tpu.memory_space<smem>>
        memref.store %cst_85, %arg8[%c5_86] : memref<8xf32, #tpu.memory_space<smem>>
        %c6_87 = arith.constant 6 : index
        %126 = memref.load %arg8[%c6_87] : memref<8xf32, #tpu.memory_space<smem>>
        memref.store %83, %arg8[%c6_87] : memref<8xf32, #tpu.memory_space<smem>>
        %c7_88 = arith.constant 7 : index
        %127 = memref.load %arg8[%c7_88] : memref<8xf32, #tpu.memory_space<smem>>
        memref.store %84, %arg8[%c7_88] : memref<8xf32, #tpu.memory_space<smem>>
      } else {
      }
      %c2_54 = arith.constant 2 : index
      %67 = memref.load %arg9[%c2_54] : memref<8xf32, #tpu.memory_space<smem>>
      %c3_55 = arith.constant 3 : index
      %68 = memref.load %arg9[%c3_55] : memref<8xf32, #tpu.memory_space<smem>>
      %c4_56 = arith.constant 4 : index
      %69 = memref.load %arg9[%c4_56] : memref<8xf32, #tpu.memory_space<smem>>
      %cst_57 = arith.constant 0.000000e+00 : f32
      %70 = arith.subf %cst_57, %67 : f32
      %71 = vector.broadcast %70 : f32 to vector<288x128xf32>
      %72 = arith.maximumf %71, %57 : vector<288x128xf32>
      %73 = vector.broadcast %67 : f32 to vector<288x128xf32>
      %74 = arith.minimumf %73, %72 : vector<288x128xf32>
      %75 = vector.broadcast %68 : f32 to vector<288x128xf32>
      %76 = arith.mulf %74, %75 : vector<288x128xf32>
      %77 = math.roundeven %76 : vector<288x128xf32>
      %78 = vector.broadcast %69 : f32 to vector<288x128xf32>
      %79 = arith.mulf %77, %78 : vector<288x128xf32>
      %c0_58 = arith.constant 0 : index
      %c0_59 = arith.constant 0 : index
      %c0_60 = arith.constant 0 : index
      %80 = vector.load %arg7[%c0_58, %c0_59, %c0_60] : memref<1x288x128xf32, #tpu.memory_space<vmem>>, vector<1x288x128xf32>
      %81 = vector.shape_cast %80 : vector<1x288x128xf32> to vector<288x128xf32>
      %82 = vector.shape_cast %79 : vector<288x128xf32> to vector<1x288x128xf32>
      tpu.vector_store %arg7[%c0_58, %c0_59, %c0_60], %82 {strides = array<i32>} : memref<1x288x128xf32, #tpu.memory_space<vmem>>, vector<1x288x128xf32>,
    } else {
    }
    return
  }
  func.func @transform_0(%arg0: i32, %arg1: i32) -> i32 {
    %c0_i32 = arith.constant 0 : i32
    %c0_i32_0 = arith.constant 0 : i32
    return %c0_i32 : i32
  }
  func.func @transform_1(%arg0: i32, %arg1: i32) -> (i32, i32, i32) {
    %c0_i32 = arith.constant 0 : i32
    %c0_i32_0 = arith.constant 0 : i32
    %c0_i32_1 = arith.constant 0 : i32
    return %arg1, %c0_i32, %c0_i32_0 : i32, i32, i32
  }
  func.func @transform_2(%arg0: i32, %arg1: i32) -> (i32, i32, i32) {
    %c0_i32 = arith.constant 0 : i32
    %c0_i32_0 = arith.constant 0 : i32
    %c0_i32_1 = arith.constant 0 : i32
    %c0_i32_2 = arith.constant 0 : i32
    return %c0_i32, %c0_i32_0, %c0_i32_1 : i32, i32, i32
  }
  func.func @transform_3(%arg0: i32, %arg1: i32) -> (i32, i32) {
    %c0_i32 = arith.constant 0 : i32
    %c0_i32_0 = arith.constant 0 : i32
    %c0_i32_1 = arith.constant 0 : i32
    return %c0_i32, %c0_i32_0 : i32, i32
  }
  func.func @transform_4(%arg0: i32, %arg1: i32) -> (i32, i32) {
    %c0_i32 = arith.constant 0 : i32
    %c0_i32_0 = arith.constant 0 : i32
    %c0_i32_1 = arith.constant 0 : i32
    return %c0_i32, %c0_i32_0 : i32, i32
  }
  func.func @transform_5(%arg0: i32, %arg1: i32) -> (i32, i32, i32) {
    %c0_i32 = arith.constant 0 : i32
    %c0_i32_0 = arith.constant 0 : i32
    %c0_i32_1 = arith.constant 0 : i32
    return %arg1, %c0_i32, %c0_i32_0 : i32, i32, i32
  }
  func.func @transform_6(%arg0: i32, %arg1: i32) -> i32 {
    %c0_i32 = arith.constant 0 : i32
    %c0_i32_0 = arith.constant 0 : i32
    return %c0_i32 : i32
  }
}

</mosaic_0001>

<llo_original>
// kernel: _fused_forward.1
$region0: #{_fused_forward.1}
  #allocation0 [shape = 'u32[]', space=smem, size = 0x4, offset = 0x4, fixed_abs, tag = 'smem constant byte address 0x4 - core index']
  #allocation1 [shape = 'u32[144,128]{1,0:T(1,128)}', space=vmem, size = 0x12000, scoped, tag = 'internal scratch']
  #allocation2 [shape = 'f32[8]{0:T(128)}', space=smem, size = 0x200, scoped, tag = 'scratch operand']
  %s0 = inlined_call_operand.vmem [shape: f32[12], index: 0, kind: input, shape index: {}]
  %s1 = inlined_call_operand.vmem [shape: f32[2,328,4], index: 1, kind: input, shape index: {}]
  %s2 = inlined_call_operand.vmem [shape: f32[9,4,128], index: 2, kind: input, shape index: {}]
  %s3 = inlined_call_operand.vmem [shape: f32[1,128], index: 3, kind: input, shape index: {}]
  %s4 = inlined_call_operand.vmem [shape: f32[288,128], index: 4, kind: input, shape index: {}]
  %s5 = inlined_call_operand.vmem [shape: f32[2,288,128], index: 5, kind: output, shape index: {0}]
  %s6 = inlined_call_operand.hbm [shape: f32[8], index: 6, kind: output, shape index: {1}]
  %7 = xla_tuple %s5, %s6
  %s8 = sld [smem:[#allocation0]]
  $region85: #{_fused_forward.1} parent=0
    _
  %s10 = ssub.s32 1, %s8
  %s11 = scalar_select 0, %s10, %s8
  $region1: #{_fused_forward.1} parent=0
    #allocation3 [shape = 'u8[512]{0}', space=smem, size = 0x200, scoped, tag = 'input window, operand 0, single buffered']
    #allocation4 [shape = 's32[2]{0}', space=sflag, size = 0x8, scoped, tag = 'scoped memory for _fused_forward.1']
    #allocation5 [shape = 's32[2]{0}', space=sflag, size = 0x8, scoped, tag = 'scoped memory for _fused_forward.1']
    #allocation6 [shape = 'u8[512]{0}', space=smem, size = 0x200, scoped, tag = 'output window, operand 1, single buffered']
    %12 = vsyncpa [#allocation5], 0
    %13 = vsyncpa [#allocation4], 0
    loop: start=0, step=1, limit=6
    $region2: #{_fused_forward.1} parent=1 // loop_pre_header
      _
    $region3: #{_fused_forward.1} parent=1 // loop_header
      %s15 = sphi 0, %s19
      %p16 = scmp.ge.s32.totalorder %s15, 6
      %s22 = sphi 0, %s34
      %s23 = sphi 0, %s30
      %s24 = sphi 0, %s22
      %s25 = sphi 0, %s23
      %s26 = sphi 0, %s24
      %s27 = sphi 0, %s25
      %s35 = sphi 0, %s35
      %s37 = sphi 0, %s35
      %s38 = sphi 0, %s37
      %s52 = sphi 0, %s38
      %s58 = sphi 0, %s60
      %s61 = sphi 0, %s58
      %s62 = sphi 0, %s61
      %s78 = sphi 0, %s62
      %s82 = sphi 0, %s82
      %s84 = sphi 0, %s82
      %s85 = sphi 0, %s84
      %s99 = sphi 0, %s85
      %s103 = sphi 0, %s103
      %s105 = sphi 0, %s103
      %s106 = sphi 0, %s105
      %s120 = sphi 0, %s106
      %s124 = sphi 0, %s124
      %s126 = sphi 0, %s124
      %s127 = sphi 0, %s126
      %s141 = sphi 0, %s127
      %s147 = sphi 0, %s149
      %s150 = sphi 0, %s147
      %s151 = sphi 0, %s150
      %s167 = sphi 0, %s151
      %s171 = sphi 0, %s171
      %s173 = sphi 0, %s171
      %s174 = sphi 0, %s173
      %s188 = sphi 0, %s174
    $region4: #{_fused_forward.1} parent=1 // loop_header_branch
      %18 = sbr.rel (%p16) target = $region8
    $region5: #{_fused_forward.1} parent=1 // loop_body
      %s20 = ssub.s32 %s15, 1
      %s21 = ssub.s32 %s15, 2
      %s28 = sadd.s32 1, %s23
      %p29 = scmp.ge.s32.totalorder %s28, 2
      %s30 = scalar_select %p29, 0, %s28
      %s31 = sadd.s32 1, %s22
      %s32 = scalar_select %p29, %s31, %s22
      %p33 = scmp.ge.s32.totalorder %s32, 2
      %s34 = scalar_select %p33, 0, %s32
      %s36 = sadd.s32 %s35, 1
      %p39 = scmp.eq.s32.totalorder %s15, 3
      %p40 = scmp.ne.s32.totalorder %s35, %s37
      %p41 = scmp.eq.s32.totalorder %s15, 0
      %p42 = por %p40, %p41
      %p43 = scmp.ne.s32.totalorder %s35, %s37
      %p44 = scmp.eq.s32.totalorder %s20, 3
      %p45 = por %p43, %p44
      %p46 = scmp.ne.s32.totalorder %s37, %s38
      %p47 = scmp.eq.s32.totalorder %s20, 0
      %p48 = por %p46, %p47
      %p49 = scmp.ne.s32.totalorder %s37, %s38
      %p50 = scmp.eq.s32.totalorder %s21, 3
      %p51 = por %p49, %p50
      %p53 = scmp.ne.s32.totalorder %s38, %s52
      %p54 = scmp.eq.s32.totalorder %s21, 0
      %p55 = por %p53, %p54
      %s56 = ssub.s32 %s23, %s30
      %p57 = scmp.eq.s32.totalorder %s56, 0
      %s59 = sadd.s32 %s58, 1
      %s60 = scalar_select %p57, %s58, %s59
      %p63 = pneg %p57
      %p64 = scmp.eq.s32.totalorder %s15, 3
      %p65 = por %p63, %p64
      %p66 = scmp.ne.s32.totalorder %s58, %s61
      %p67 = scmp.eq.s32.totalorder %s15, 0
      %p68 = por %p66, %p67
      %p69 = scmp.ne.s32.totalorder %s58, %s61
      %p70 = scmp.eq.s32.totalorder %s20, 3
      %p71 = por %p69, %p70
      %p72 = scmp.ne.s32.totalorder %s61, %s62
      %p73 = scmp.eq.s32.totalorder %s20, 0
      %p74 = por %p72, %p73
      %p75 = scmp.ne.s32.totalorder %s61, %s62
      %p76 = scmp.eq.s32.totalorder %s21, 3
      %p77 = por %p75, %p76
      %p79 = scmp.ne.s32.totalorder %s62, %s78
      %p80 = scmp.eq.s32.totalorder %s21, 0
      %p81 = por %p79, %p80
      %s83 = sadd.s32 %s82, 1
      %p86 = scmp.eq.s32.totalorder %s15, 3
      %p87 = scmp.ne.s32.totalorder %s82, %s84
      %p88 = scmp.eq.s32.totalorder %s15, 0
      %p89 = por %p87, %p88
      %p90 = scmp.ne.s32.totalorder %s82, %s84
      %p91 = scmp.eq.s32.totalorder %s20, 3
      %p92 = por %p90, %p91
      %p93 = scmp.ne.s32.totalorder %s84, %s85
      %p94 = scmp.eq.s32.totalorder %s20, 0
      %p95 = por %p93, %p94
      %p96 = scmp.ne.s32.totalorder %s84, %s85
      %p97 = scmp.eq.s32.totalorder %s21, 3
      %p98 = por %p96, %p97
      %p100 = scmp.ne.s32.totalorder %s85, %s99
      %p101 = scmp.eq.s32.totalorder %s21, 0
      %p102 = por %p100, %p101
      %s104 = sadd.s32 %s103, 1
      %p107 = scmp.eq.s32.totalorder %s15, 3
      %p108 = scmp.ne.s32.totalorder %s103, %s105
      %p109 = scmp.eq.s32.totalorder %s15, 0
      %p110 = por %p108, %p109
      %p111 = scmp.ne.s32.totalorder %s103, %s105
      %p112 = scmp.eq.s32.totalorder %s20, 3
      %p113 = por %p111, %p112
      %p114 = scmp.ne.s32.totalorder %s105, %s106
      %p115 = scmp.eq.s32.totalorder %s20, 0
      %p116 = por %p114, %p115
      %p117 = scmp.ne.s32.totalorder %s105, %s106
      %p118 = scmp.eq.s32.totalorder %s21, 3
      %p119 = por %p117, %p118
      %p121 = scmp.ne.s32.totalorder %s106, %s120
      %p122 = scmp.eq.s32.totalorder %s21, 0
      %p123 = por %p121, %p122
      %s125 = sadd.s32 %s124, 1
      %p128 = scmp.eq.s32.totalorder %s15, 3
      %p129 = scmp.ne.s32.totalorder %s124, %s126
      %p130 = scmp.eq.s32.totalorder %s15, 0
      %p131 = por %p129, %p130
      %p132 = scmp.ne.s32.totalorder %s124, %s126
      %p133 = scmp.eq.s32.totalorder %s20, 3
      %p134 = por %p132, %p133
      %p135 = scmp.ne.s32.totalorder %s126, %s127
      %p136 = scmp.eq.s32.totalorder %s20, 0
      %p137 = por %p135, %p136
      %p138 = scmp.ne.s32.totalorder %s126, %s127
      %p139 = scmp.eq.s32.totalorder %s21, 3
      %p140 = por %p138, %p139
      %p142 = scmp.ne.s32.totalorder %s127, %s141
      %p143 = scmp.eq.s32.totalorder %s21, 0
      %p144 = por %p142, %p143
      %s145 = ssub.s32 %s23, %s30
      %p146 = scmp.eq.s32.totalorder %s145, 0
      %s148 = sadd.s32 %s147, 1
      %s149 = scalar_select %p146, %s147, %s148
      %p152 = pneg %p146
      %p153 = scmp.eq.s32.totalorder %s15, 3
      %p154 = por %p152, %p153
      %p155 = scmp.ne.s32.totalorder %s147, %s150
      %p156 = scmp.eq.s32.totalorder %s15, 0
      %p157 = por %p155, %p156
      %p158 = scmp.ne.s32.totalorder %s147, %s150
      %p159 = scmp.eq.s32.totalorder %s20, 3
      %p160 = por %p158, %p159
      %p161 = scmp.ne.s32.totalorder %s150, %s151
      %p162 = scmp.eq.s32.totalorder %s20, 0
      %p163 = por %p161, %p162
      %p164 = scmp.ne.s32.totalorder %s150, %s151
      %p165 = scmp.eq.s32.totalorder %s21, 3
      %p166 = por %p164, %p165
      %p168 = scmp.ne.s32.totalorder %s151, %s167
      %p169 = scmp.eq.s32.totalorder %s21, 0
      %p170 = por %p168, %p169
      %s172 = sadd.s32 %s171, 1
      %p175 = scmp.eq.s32.totalorder %s15, 3
      %p176 = scmp.ne.s32.totalorder %s171, %s173
      %p177 = scmp.eq.s32.totalorder %s15, 0
      %p178 = por %p176, %p177
      %p179 = scmp.ne.s32.totalorder %s171, %s173
      %p180 = scmp.eq.s32.totalorder %s20, 3
      %p181 = por %p179, %p180
      %p182 = scmp.ne.s32.totalorder %s173, %s174
      %p183 = scmp.eq.s32.totalorder %s20, 0
      %p184 = por %p182, %p183
      %p185 = scmp.ne.s32.totalorder %s173, %s174
      %p186 = scmp.eq.s32.totalorder %s21, 3
      %p187 = por %p185, %p186
      %p189 = scmp.ne.s32.totalorder %s174, %s188
      %p190 = scmp.eq.s32.totalorder %s21, 0
      %p191 = por %p189, %p190
      %p192 = scmp.le.s32.totalorder 1, %s15
      %p193 = scmp.lt.s32.totalorder %s15, 5
      %p194 = pnand %p192, %p193
      %p195 = pneg %p194
      // Predicated region
      $region9: #{_fused_forward.1} parent=5 // pred_check
        _
      $region10: #{_fused_forward.1} parent=5 // pred_check_branch
        %197 = sbr.rel (%p194) target = $region12
      $region11: #{_fused_forward.1} parent=5 // pred_region
        %s198 = ssub.s32 %s15, 1
        // Predicated region
        $region13: #{_fused_forward.1} parent=11 // pred_check
          %p199 = pneg %p48
        $region14: #{_fused_forward.1} parent=11 // pred_check_branch
          %201 = sbr.rel (%p199) target = $region16
        $region15: #{_fused_forward.1} parent=11 // pred_region
          %s203 = ssub.s32 16, 16
          %204 = vsyncadd [#allocation5], %s203
          %s206 = sshll.u32 %s0, 4
          %s207 = int_to_ptr.vmem [resolvable:$true] %s206
          %209 = dma.vmem_to_smem %s207, 16, [#allocation3], [#allocation5]
        $region16: #{_fused_forward.1} parent=11 // pred_fallthru
          _
        // Predicated region
        $region17: #{_fused_forward.1} parent=11 // pred_check
          %p210 = pneg %p95
        $region18: #{_fused_forward.1} parent=11 // pred_check_branch
          %212 = sbr.rel (%p210) target = $region20
        $region19: #{_fused_forward.1} parent=11 // pred_region
          _
        $region20: #{_fused_forward.1} parent=11 // pred_fallthru
          _
        // Predicated region
        $region21: #{_fused_forward.1} parent=11 // pred_check
          %p213 = pneg %p116
        $region22: #{_fused_forward.1} parent=11 // pred_check_branch
          %215 = sbr.rel (%p213) target = $region24
        $region23: #{_fused_forward.1} parent=11 // pred_region
          _
        $region24: #{_fused_forward.1} parent=11 // pred_fallthru
          _
        // Predicated region
        $region25: #{_fused_forward.1} parent=11 // pred_check
          %p216 = pneg %p137
        $region26: #{_fused_forward.1} parent=11 // pred_check_branch
          %218 = sbr.rel (%p216) target = $region28
        $region27: #{_fused_forward.1} parent=11 // pred_region
          _
        $region28: #{_fused_forward.1} parent=11 // pred_fallthru
          _
      $region12: #{_fused_forward.1} parent=5 // pred_fallthru
        _
      %p219 = scmp.lt.s32.totalorder %s15, 4
      // Predicated region
      $region29: #{_fused_forward.1} parent=5 // pred_check
        %p220 = pneg %p219
      $region30: #{_fused_forward.1} parent=5 // pred_check_branch
        %222 = sbr.rel (%p220) target = $region32
      $region31: #{_fused_forward.1} parent=5 // pred_region
        // Predicated region
        $region33: #{_fused_forward.1} parent=31 // pred_check
          %p223 = pneg %p68
        $region34: #{_fused_forward.1} parent=31 // pred_check_branch
          %225 = sbr.rel (%p223) target = $region36
        $region35: #{_fused_forward.1} parent=31 // pred_region
          %p226 = scmp.lt.s32.totalorder %s23, 1
          %s227 = scalar_select %p226, %s23, 1
          %s228 = smul.addr %s227, 41
          %s229 = smul.addr %s228, 8
          %s230 = scalar_lea.vmem %s1, %s229
        $region36: #{_fused_forward.1} parent=31 // pred_fallthru
          _
      $region32: #{_fused_forward.1} parent=5 // pred_fallthru
        _
      %p231 = scmp.le.s32.totalorder 1, %s15
      %p232 = scmp.lt.s32.totalorder %s15, 5
      %p233 = pnand %p231, %p232
      %p234 = pneg %p233
      // Predicated region
      $region37: #{_fused_forward.1} parent=5 // pred_check
        _
      $region38: #{_fused_forward.1} parent=5 // pred_check_branch
        %236 = sbr.rel (%p233) target = $region40
      $region39: #{_fused_forward.1} parent=5 // pred_region
        %s237 = ssub.s32 %s15, 1
        // Predicated region
        $region41: #{_fused_forward.1} parent=39 // pred_check
          %p238 = pneg %p48
        $region42: #{_fused_forward.1} parent=39 // pred_check_branch
          %240 = sbr.rel (%p238) target = $region44
        $region43: #{_fused_forward.1} parent=39 // pred_region
          %241 = dma.done [#allocation5], 16
        $region44: #{_fused_forward.1} parent=39 // pred_fallthru
          _
        %242 = sfence
        %p243 = pneg %p48
        %p244 = pneg %p45
        %p245 = scmp.lt.s32.totalorder %s25, 1
        %s246 = scalar_select %p245, %s25, 1
        %s247 = smul.addr %s246, 41
        %s248 = smul.addr %s247, 8
        %s249 = scalar_lea.vmem %s1, %s248
        %p250 = pneg %p74
        %p251 = pneg %p71
        %p252 = pneg %p95
        %p253 = pneg %p92
        %p254 = pneg %p116
        %p255 = pneg %p113
        %p256 = pneg %p137
        %p257 = pneg %p134
        %p258 = pneg %p163
        %p259 = pneg %p160
        %p260 = scmp.lt.s32.totalorder %s25, 1
        %s261 = scalar_select %p260, %s25, 1
        %s262 = smul.addr %s261, 36
        %s263 = smul.addr %s262, 8
        %s264 = scalar_lea.vmem %s5, %s263
        %p265 = pneg %p184
        %p266 = pneg %p181
        %p267 = scmp.lt.s32.totalorder %s25, 1
        %s268 = scalar_select %p267, %s25, 1
        %s269 = smul.addr %s268, 41
        %s270 = smul.addr %s269, 8
        %s271 = scalar_lea.vmem %s1, %s270
        %p272 = scmp.lt.s32.totalorder %s25, 1
        %s273 = scalar_select %p272, %s25, 1
        %s274 = smul.addr %s273, 36
        %s275 = smul.addr %s274, 8
        %s276 = scalar_lea.vmem %s5, %s275
        %v277 = vld [vmem:[%s271] sm:$0xff]
        %v278 = vld [vmem:[%s271 + $0x8] sm:$0xff]
        %v279 = vld [vmem:[%s271 + $0x10] sm:$0xff]
        %v280 = vld [vmem:[%s271 + $0x18] sm:$0xff]
        %v281 = vld [vmem:[%s271 + $0x20] sm:$0xff]
        %v282 = vld [vmem:[%s271 + $0x28] sm:$0xff]
        %v283 = vld [vmem:[%s271 + $0x30] sm:$0xff]
        %v284 = vld [vmem:[%s271 + $0x38] sm:$0xff]
        %v285 = vld [vmem:[%s271 + $0x40] sm:$0xff]
        %v286 = vld [vmem:[%s271 + $0x48] sm:$0xff]
        %v287 = vld [vmem:[%s271 + $0x50] sm:$0xff]
        %v288 = vld [vmem:[%s271 + $0x58] sm:$0xff]
        %v289 = vld [vmem:[%s271 + $0x60] sm:$0xff]
        %v290 = vld [vmem:[%s271 + $0x68] sm:$0xff]
        %v291 = vld [vmem:[%s271 + $0x70] sm:$0xff]
        %v292 = vld [vmem:[%s271 + $0x78] sm:$0xff]
        %v293 = vld [vmem:[%s271 + $0x80] sm:$0xff]
        %v294 = vld [vmem:[%s271 + $0x88] sm:$0xff]
        %v295 = vld [vmem:[%s271 + $0x90] sm:$0xff]
        %v296 = vld [vmem:[%s271 + $0x98] sm:$0xff]
        %v297 = vld [vmem:[%s271 + $0xa0] sm:$0xff]
        %v298 = vld [vmem:[%s271 + $0xa8] sm:$0xff]
        %v299 = vld [vmem:[%s271 + $0xb0] sm:$0xff]
        %v300 = vld [vmem:[%s271 + $0xb8] sm:$0xff]
        %v301 = vld [vmem:[%s271 + $0xc0] sm:$0xff]
        %v302 = vld [vmem:[%s271 + $0xc8] sm:$0xff]
        %v303 = vld [vmem:[%s271 + $0xd0] sm:$0xff]
        %v304 = vld [vmem:[%s271 + $0xd8] sm:$0xff]
        %v305 = vld [vmem:[%s271 + $0xe0] sm:$0xff]
        %v306 = vld [vmem:[%s271 + $0xe8] sm:$0xff]
        %v307 = vld [vmem:[%s271 + $0xf0] sm:$0xff]
        %v308 = vld [vmem:[%s271 + $0xf8] sm:$0xff]
        %v309 = vld [vmem:[%s271 + $0x100] sm:$0xff]
        %v310 = vld [vmem:[%s271 + $0x108] sm:$0xff]
        %v311 = vld [vmem:[%s271 + $0x110] sm:$0xff]
        %v312 = vld [vmem:[%s271 + $0x118] sm:$0xff]
        %v313 = vld [vmem:[%s2] sm:$0xf]
        %v314 = vld [vmem:[%s271 + $0x1] sm:$0xff]
        %v315 = vld [vmem:[%s271 + $0x9] sm:$0xff]
        %v316 = vld [vmem:[%s271 + $0x11] sm:$0xff]
        %v317 = vld [vmem:[%s271 + $0x19] sm:$0xff]
        %v318 = vld [vmem:[%s271 + $0x21] sm:$0xff]
        %v319 = vld [vmem:[%s271 + $0x29] sm:$0xff]
        %v320 = vld [vmem:[%s271 + $0x31] sm:$0xff]
        %v321 = vld [vmem:[%s271 + $0x39] sm:$0xff]
        %v322 = vld [vmem:[%s271 + $0x41] sm:$0xff]
        %v323 = vld [vmem:[%s271 + $0x49] sm:$0xff]
        %v324 = vld [vmem:[%s271 + $0x51] sm:$0xff]
        %v325 = vld [vmem:[%s271 + $0x59] sm:$0xff]
        %v326 = vld [vmem:[%s271 + $0x61] sm:$0xff]
        %v327 = vld [vmem:[%s271 + $0x69] sm:$0xff]
        %v328 = vld [vmem:[%s271 + $0x71] sm:$0xff]
        %v329 = vld [vmem:[%s271 + $0x79] sm:$0xff]
        %v330 = vld [vmem:[%s271 + $0x81] sm:$0xff]
        %v331 = vld [vmem:[%s271 + $0x89] sm:$0xff]
        %v332 = vld [vmem:[%s271 + $0x91] sm:$0xff]
        %v333 = vld [vmem:[%s271 + $0x99] sm:$0xff]
        %v334 = vld [vmem:[%s271 + $0xa1] sm:$0xff]
        %v335 = vld [vmem:[%s271 + $0xa9] sm:$0xff]
        %v336 = vld [vmem:[%s271 + $0xb1] sm:$0xff]
        %v337 = vld [vmem:[%s271 + $0xb9] sm:$0xff]
        %v338 = vld [vmem:[%s271 + $0xc1] sm:$0xff]
        %v339 = vld [vmem:[%s271 + $0xc9] sm:$0xff]
        %v340 = vld [vmem:[%s271 + $0xd1] sm:$0xff]
        %v341 = vld [vmem:[%s271 + $0xd9] sm:$0xff]
        %v342 = vld [vmem:[%s271 + $0xe1] sm:$0xff]
        %v343 = vld [vmem:[%s271 + $0xe9] sm:$0xff]
        %v344 = vld [vmem:[%s271 + $0xf1] sm:$0xff]
        %v345 = vld [vmem:[%s271 + $0xf9] sm:$0xff]
        %v346 = vld [vmem:[%s271 + $0x101] sm:$0xff]
        %v347 = vld [vmem:[%s271 + $0x109] sm:$0xff]
        %v348 = vld [vmem:[%s271 + $0x111] sm:$0xff]
        %v349 = vld [vmem:[%s271 + $0x119] sm:$0xff]
        %s350 = scalar_lea.vmem %s2, 4
        %v351 = vld [vmem:[%s350] sm:$0xf]
        %vm352 = vcmask 31744
        %v354 = vsel %vm352, %v314, 0
        %v357 = vsel %vm352, %v315, 0
        %v360 = vsel %vm352, %v316, 0
        %v363 = vsel %vm352, %v317, 0
        %v366 = vsel %vm352, %v318, 0
        %v369 = vsel %vm352, %v319, 0
        %v372 = vsel %vm352, %v320, 0
        %v375 = vsel %vm352, %v321, 0
        %v378 = vsel %vm352, %v322, 0
        %v381 = vsel %vm352, %v323, 0
        %v384 = vsel %vm352, %v324, 0
        %v387 = vsel %vm352, %v325, 0
        %v390 = vsel %vm352, %v326, 0
        %v393 = vsel %vm352, %v327, 0
        %v396 = vsel %vm352, %v328, 0
        %v399 = vsel %vm352, %v329, 0
        %v402 = vsel %vm352, %v330, 0
        %v405 = vsel %vm352, %v331, 0
        %v408 = vsel %vm352, %v332, 0
        %v411 = vsel %vm352, %v333, 0
        %v414 = vsel %vm352, %v334, 0
        %v417 = vsel %vm352, %v335, 0
        %v420 = vsel %vm352, %v336, 0
        %v423 = vsel %vm352, %v337, 0
        %v426 = vsel %vm352, %v338, 0
        %v429 = vsel %vm352, %v339, 0
        %v432 = vsel %vm352, %v340, 0
        %v435 = vsel %vm352, %v341, 0
        %v438 = vsel %vm352, %v342, 0
        %v441 = vsel %vm352, %v343, 0
        %v444 = vsel %vm352, %v344, 0
        %v447 = vsel %vm352, %v345, 0
        %v450 = vsel %vm352, %v346, 0
        %v453 = vsel %vm352, %v347, 0
        %v456 = vsel %vm352, %v348, 0
        %v459 = vsel %vm352, %v349, 0
        %vm461 = vcmask 1043456
        %v463 = vsel %vm461, %v351, 0
        %465 = vmatprep.subr.mxu0 0.0
        %466 = vmatpush1.msra.mxu0 %v463
        %467 = vmatprep.subr.mxu0 0.0
        %468 = vmatpush1.msra.mxu0 0.0
        %469 = vmatprep.subr.mxu0 0.0
        %470 = vmatpush1.msra.mxu0 0.0
        %471 = vmatprep.subr.mxu0 0.0
        %472 = vmatpush1.msra.mxu0 0.0
        %473 = vmatprep.subr.mxu0 0.0
        %474 = vmatpush1.msra.mxu0 0.0
        %475 = vmatprep.subr.mxu0 0.0
        %476 = vmatpush1.msra.mxu0 0.0
        %477 = vmatprep.subr.mxu0 0.0
        %478 = vmatpush1.msra.mxu0 0.0
        %479 = vmatprep.subr.mxu0 0.0
        %480 = vmatpush1.msra.mxu0 0.0
        %481 = vmatprep.subr.mxu0 0.0
        %482 = vmatpush1.msra.mxu0 0.0
        %483 = vmatprep.subr.mxu0 0.0
        %484 = vmatpush1.msra.mxu0 0.0
        %485 = vmatprep.subr.mxu0 0.0
        %486 = vmatpush1.msra.mxu0 0.0
        %487 = vmatprep.subr.mxu0 0.0
        %488 = vmatpush1.msra.mxu0 0.0
        %489 = vmatprep.subr.mxu0 0.0
        %490 = vmatpush1.msra.mxu0 0.0
        %491 = vmatprep.subr.mxu0 0.0
        %492 = vmatpush1.msra.mxu0 0.0
        %493 = vmatprep.subr.mxu0 0.0
        %494 = vmatpush1.msra.mxu0 0.0
        %495 = vmatprep.subr.mxu0 0.0
        %496 = vmatpush1.msra.mxu0 0.0
        %497 = vmatprep.subr.mxu0 0.0
        %498 = vmatpush1.msra.mxu0 0.0
        %499 = vmatprep.subr.mxu0 0.0
        %500 = vmatpush1.msra.mxu0 0.0
        %501 = vmatprep.subr.mxu0 0.0
        %502 = vmatpush1.msra.mxu0 0.0
        %503 = vmatprep.subr.mxu0 0.0
        %504 = vmatpush1.msra.mxu0 0.0
        %505 = vmatprep.subr.mxu0 0.0
        %506 = vmatpush1.msra.mxu0 0.0
        %507 = vmatprep.subr.mxu0 0.0
        %508 = vmatpush1.msra.mxu0 0.0
        %509 = vmatprep.subr.mxu0 0.0
        %510 = vmatpush1.msra.mxu0 0.0
        %511 = vmatprep.subr.mxu0 0.0
        %512 = vmatpush1.msra.mxu0 0.0
        %513 = vmatprep.subr.mxu0 0.0
        %514 = vmatpush1.msra.mxu0 0.0
        %515 = vmatprep.subr.mxu0 0.0
        %516 = vmatpush1.msra.mxu0 0.0
        %517 = vmatprep.subr.mxu0 0.0
        %518 = vmatpush1.msra.mxu0 0.0
        %519 = vmatprep.subr.mxu0 0.0
        %520 = vmatpush1.msra.mxu0 0.0
        %521 = vmatprep.subr.mxu0 0.0
        %522 = vmatpush1.msra.mxu0 0.0
        %523 = vmatprep.subr.mxu0 0.0
        %524 = vmatpush1.msra.mxu0 0.0
        %525 = vmatprep.subr.mxu0 0.0
        %526 = vmatpush1.msra.mxu0 0.0
        %527 = vmatprep.subr.mxu0 0.0
        %528 = vmatpush1.msra.mxu0 0.0
        %529 = vmatprep.mubr.f32.mxu0 0.0
        %530 = vmatmul.mubr.f32.gmra.mrb[0].mxu0 %v354
        %v531 = vpop.f32.mrb[0].mxu0
        %v532 = vadd.f32 0.0, %v531
        %v533 = vpop.f32.mrb[0].mxu0
        %534 = vmatprep.mubr.f32.mxu0 0.0
        %535 = vmatmul.mubr.f32.gmra.mrb[0].mxu0 %v357
        %v536 = vpop.f32.mrb[0].mxu0
        %v537 = vadd.f32 0.0, %v536
        %v538 = vpop.f32.mrb[0].mxu0
        %539 = vmatprep.mubr.f32.mxu0 0.0
        %540 = vmatmul.mubr.f32.gmra.mrb[0].mxu0 %v360
        %v541 = vpop.f32.mrb[0].mxu0
        %v542 = vadd.f32 0.0, %v541
        %v543 = vpop.f32.mrb[0].mxu0
        %544 = vmatprep.mubr.f32.mxu0 0.0
        %545 = vmatmul.mubr.f32.gmra.mrb[0].mxu0 %v363
        %v546 = vpop.f32.mrb[0].mxu0
        %v547 = vadd.f32 0.0, %v546
        %v548 = vpop.f32.mrb[0].mxu0
        %549 = vmatprep.mubr.f32.mxu0 0.0
        %550 = vmatmul.mubr.f32.gmra.mrb[0].mxu0 %v366
        %v551 = vpop.f32.mrb[0].mxu0
        %v552 = vadd.f32 0.0, %v551
        %v553 = vpop.f32.mrb[0].mxu0
        %554 = vmatprep.mubr.f32.mxu0 0.0
        %555 = vmatmul.mubr.f32.gmra.mrb[0].mxu0 %v369
        %v556 = vpop.f32.mrb[0].mxu0
        %v557 = vadd.f32 0.0, %v556
        %v558 = vpop.f32.mrb[0].mxu0
        %559 = vmatprep.mubr.f32.mxu0 0.0
        %560 = vmatmul.mubr.f32.gmra.mrb[0].mxu0 %v372
        %v561 = vpop.f32.mrb[0].mxu0
        %v562 = vadd.f32 0.0, %v561
        %v563 = vpop.f32.mrb[0].mxu0
        %564 = vmatprep.mubr.f32.mxu0 0.0
        %565 = vmatmul.mubr.f32.gmra.mrb[0].mxu0 %v375
        %v566 = vpop.f32.mrb[0].mxu0
        %v567 = vadd.f32 0.0, %v566
        %v568 = vpop.f32.mrb[0].mxu0
        %569 = vmatprep.mubr.f32.mxu0 0.0
        %570 = vmatmul.mubr.f32.gmra.mrb[0].mxu0 %v378
        %v571 = vpop.f32.mrb[0].mxu0
        %v572 = vadd.f32 0.0, %v571
        %v573 = vpop.f32.mrb[0].mxu0
        %574 = vmatprep.mubr.f32.mxu0 0.0
        %575 = vmatmul.mubr.f32.gmra.mrb[0].mxu0 %v381
        %v576 = vpop.f32.mrb[0].mxu0
        %v577 = vadd.f32 0.0, %v576
        %v578 = vpop.f32.mrb[0].mxu0
        %579 = vmatprep.mubr.f32.mxu0 0.0
        %580 = vmatmul.mubr.f32.gmra.mrb[0].mxu0 %v384
        %v581 = vpop.f32.mrb[0].mxu0
        %v582 = vadd.f32 0.0, %v581
        %v583 = vpop.f32.mrb[0].mxu0
        %584 = vmatprep.mubr.f32.mxu0 0.0
        %585 = vmatmul.mubr.f32.gmra.mrb[0].mxu0 %v387
        %v586 = vpop.f32.mrb[0].mxu0
        %v587 = vadd.f32 0.0, %v586
        %v588 = vpop.f32.mrb[0].mxu0
        %589 = vmatprep.mubr.f32.mxu0 0.0
        %590 = vmatmul.mubr.f32.gmra.mrb[0].mxu0 %v390
        %v591 = vpop.f32.mrb[0].mxu0
        %v592 = vadd.f32 0.0, %v591
        %v593 = vpop.f32.mrb[0].mxu0
        %594 = vmatprep.mubr.f32.mxu0 0.0
        %595 = vmatmul.mubr.f32.gmra.mrb[0].mxu0 %v393
        %v596 = vpop.f32.mrb[0].mxu0
        %v597 = vadd.f32 0.0, %v596
        %v598 = vpop.f32.mrb[0].mxu0
        %599 = vmatprep.mubr.f32.mxu0 0.0
        %600 = vmatmul.mubr.f32.gmra.mrb[0].mxu0 %v396
        %v601 = vpop.f32.mrb[0].mxu0
        %v602 = vadd.f32 0.0, %v601
        %v603 = vpop.f32.mrb[0].mxu0
        %604 = vmatprep.mubr.f32.mxu0 0.0
        %605 = vmatmul.mubr.f32.gmra.mrb[0].mxu0 %v399
        %v606 = vpop.f32.mrb[0].mxu0
        %v607 = vadd.f32 0.0, %v606
        %v608 = vpop.f32.mrb[0].mxu0
        %609 = vmatprep.mubr.f32.mxu0 0.0
        %610 = vmatmul.mubr.f32.gmra.mrb[0].mxu0 %v402
        %v611 = vpop.f32.mrb[0].mxu0
        %v612 = vadd.f32 0.0, %v611
        %v613 = vpop.f32.mrb[0].mxu0
        %614 = vmatprep.mubr.f32.mxu0 0.0
        %615 = vmatmul.mubr.f32.gmra.mrb[0].mxu0 %v405
        %v616 = vpop.f32.mrb[0].mxu0
        %v617 = vadd.f32 0.0, %v616
        %v618 = vpop.f32.mrb[0].mxu0
        %619 = vmatprep.mubr.f32.mxu0 0.0
        %620 = vmatmul.mubr.f32.gmra.mrb[0].mxu0 %v408
        %v621 = vpop.f32.mrb[0].mxu0
        %v622 = vadd.f32 0.0, %v621
        %v623 = vpop.f32.mrb[0].mxu0
        %624 = vmatprep.mubr.f32.mxu0 0.0
        %625 = vmatmul.mubr.f32.gmra.mrb[0].mxu0 %v411
        %v626 = vpop.f32.mrb[0].mxu0
        %v627 = vadd.f32 0.0, %v626
        %v628 = vpop.f32.mrb[0].mxu0
        %629 = vmatprep.mubr.f32.mxu0 0.0
        %630 = vmatmul.mubr.f32.gmra.mrb[0].mxu0 %v414
        %v631 = vpop.f32.mrb[0].mxu0
        %v632 = vadd.f32 0.0, %v631
        %v633 = vpop.f32.mrb[0].mxu0
        %634 = vmatprep.mubr.f32.mxu0 0.0
        %635 = vmatmul.mubr.f32.gmra.mrb[0].mxu0 %v417
        %v636 = vpop.f32.mrb[0].mxu0
        %v637 = vadd.f32 0.0, %v636
        %v638 = vpop.f32.mrb[0].mxu0
        %639 = vmatprep.mubr.f32.mxu0 0.0
        %640 = vmatmul.mubr.f32.gmra.mrb[0].mxu0 %v420
        %v641 = vpop.f32.mrb[0].mxu0
        %v642 = vadd.f32 0.0, %v641
        %v643 = vpop.f32.mrb[0].mxu0
        %644 = vmatprep.mubr.f32.mxu0 0.0
        %645 = vmatmul.mubr.f32.gmra.mrb[0].mxu0 %v423
        %v646 = vpop.f32.mrb[0].mxu0
        %v647 = vadd.f32 0.0, %v646
        %v648 = vpop.f32.mrb[0].mxu0
        %649 = vmatprep.mubr.f32.mxu0 0.0
        %650 = vmatmul.mubr.f32.gmra.mrb[0].mxu0 %v426
        %v651 = vpop.f32.mrb[0].mxu0
        %v652 = vadd.f32 0.0, %v651
        %v653 = vpop.f32.mrb[0].mxu0
        %654 = vmatprep.mubr.f32.mxu0 0.0
        %655 = vmatmul.mubr.f32.gmra.mrb[0].mxu0 %v429
        %v656 = vpop.f32.mrb[0].mxu0
        %v657 = vadd.f32 0.0, %v656
        %v658 = vpop.f32.mrb[0].mxu0
        %659 = vmatprep.mubr.f32.mxu0 0.0
        %660 = vmatmul.mubr.f32.gmra.mrb[0].mxu0 %v432
        %v661 = vpop.f32.mrb[0].mxu0
        %v662 = vadd.f32 0.0, %v661
        %v663 = vpop.f32.mrb[0].mxu0
        %664 = vmatprep.mubr.f32.mxu0 0.0
        %665 = vmatmul.mubr.f32.gmra.mrb[0].mxu0 %v435
        %v666 = vpop.f32.mrb[0].mxu0
        %v667 = vadd.f32 0.0, %v666
        %v668 = vpop.f32.mrb[0].mxu0
        %669 = vmatprep.mubr.f32.mxu0 0.0
        %670 = vmatmul.mubr.f32.gmra.mrb[0].mxu0 %v438
        %v671 = vpop.f32.mrb[0].mxu0
        %v672 = vadd.f32 0.0, %v671
        %v673 = vpop.f32.mrb[0].mxu0
        %674 = vmatprep.mubr.f32.mxu0 0.0
        %675 = vmatmul.mubr.f32.gmra.mrb[0].mxu0 %v441
        %v676 = vpop.f32.mrb[0].mxu0
        %v677 = vadd.f32 0.0, %v676
        %v678 = vpop.f32.mrb[0].mxu0
        %679 = vmatprep.mubr.f32.mxu0 0.0
        %680 = vmatmul.mubr.f32.gmra.mrb[0].mxu0 %v444
        %v681 = vpop.f32.mrb[0].mxu0
        %v682 = vadd.f32 0.0, %v681
        %v683 = vpop.f32.mrb[0].mxu0
        %684 = vmatprep.mubr.f32.mxu0 0.0
        %685 = vmatmul.mubr.f32.gmra.mrb[0].mxu0 %v447
        %v686 = vpop.f32.mrb[0].mxu0
        %v687 = vadd.f32 0.0, %v686
        %v688 = vpop.f32.mrb[0].mxu0
        %689 = vmatprep.mubr.f32.mxu0 0.0
        %690 = vmatmul.mubr.f32.gmra.mrb[0].mxu0 %v450
        %v691 = vpop.f32.mrb[0].mxu0
        %v692 = vadd.f32 0.0, %v691
        %v693 = vpop.f32.mrb[0].mxu0
        %694 = vmatprep.mubr.f32.mxu0 0.0
        %695 = vmatmul.mubr.f32.gmra.mrb[0].mxu0 %v453
        %v696 = vpop.f32.mrb[0].mxu0
        %v697 = vadd.f32 0.0, %v696
        %v698 = vpop.f32.mrb[0].mxu0
        %699 = vmatprep.mubr.f32.mxu0 0.0
        %700 = vmatmul.mubr.f32.gmra.mrb[0].mxu0 %v456
        %v701 = vpop.f32.mrb[0].mxu0
        %v702 = vadd.f32 0.0, %v701
        %v703 = vpop.f32.mrb[0].mxu0
        %704 = vmatprep.mubr.f32.mxu0 0.0
        %705 = vmatmul.mubr.f32.gmra.mrb[0].mxu0 %v459
        %v706 = vpop.f32.mrb[0].mxu0
        %v707 = vadd.f32 0.0, %v706
        %v708 = vpop.f32.mrb[0].mxu0
        %709 = vdwg.mxu0
        %v711 = vsel %vm352, %v277, 0
        %v714 = vsel %vm352, %v278, 0
        %v717 = vsel %vm352, %v279, 0
        %v720 = vsel %vm352, %v280, 0
        %v723 = vsel %vm352, %v281, 0
        %v726 = vsel %vm352, %v282, 0
        %v729 = vsel %vm352, %v283, 0
        %v732 = vsel %vm352, %v284, 0
        %v735 = vsel %vm352, %v285, 0
        %v738 = vsel %vm352, %v286, 0
        %v741 = vsel %vm352, %v287, 0
        %v744 = vsel %vm352, %v288, 0
        %v747 = vsel %vm352, %v289, 0
        %v750 = vsel %vm352, %v290, 0
        %v753 = vsel %vm352, %v291, 0
        %v756 = vsel %vm352, %v292, 0
        %v759 = vsel %vm352, %v293, 0
        %v762 = vsel %vm352, %v294, 0
        %v765 = vsel %vm352, %v295, 0
        %v768 = vsel %vm352, %v296, 0
        %v771 = vsel %vm352, %v297, 0
        %v774 = vsel %vm352, %v298, 0
        %v777 = vsel %vm352, %v299, 0
        %v780 = vsel %vm352, %v300, 0
        %v783 = vsel %vm352, %v301, 0
        %v786 = vsel %vm352, %v302, 0
        %v789 = vsel %vm352, %v303, 0
        %v792 = vsel %vm352, %v304, 0
        %v795 = vsel %vm352, %v305, 0
        %v798 = vsel %vm352, %v306, 0
        %v801 = vsel %vm352, %v307, 0
        %v804 = vsel %vm352, %v308, 0
        %v807 = vsel %vm352, %v309, 0
        %v810 = vsel %vm352, %v310, 0
        %v813 = vsel %vm352, %v311, 0
        %v816 = vsel %vm352, %v312, 0
        %v819 = vsel %vm461, %v313, 0
        %821 = vmatprep.subr.mxu0 0.0
        %822 = vmatpush1.msra.mxu0 %v819
        %823 = vmatprep.subr.mxu0 0.0
        %824 = vmatpush1.msra.mxu0 0.0
        %825 = vmatprep.subr.mxu0 0.0
        %826 = vmatpush1.msra.mxu0 0.0
        %827 = vmatprep.subr.mxu0 0.0
        %828 = vmatpush1.msra.mxu0 0.0
        %829 = vmatprep.subr.mxu0 0.0
        %830 = vmatpush1.msra.mxu0 0.0
        %831 = vmatprep.subr.mxu0 0.0
        %832 = vmatpush1.msra.mxu0 0.0
        %833 = vmatprep.subr.mxu0 0.0
        %834 = vmatpush1.msra.mxu0 0.0
        %835 = vmatprep.subr.mxu0 0.0
        %836 = vmatpush1.msra.mxu0 0.0
        %837 = vmatprep.subr.mxu0 0.0
        %838 = vmatpush1.msra.mxu0 0.0
        %839 = vmatprep.subr.mxu0 0.0
        %840 = vmatpush1.msra.mxu0 0.0
        %841 = vmatprep.subr.mxu0 0.0
        %842 = vmatpush1.msra.mxu0 0.0
        %843 = vmatprep.subr.mxu0 0.0
        %844 = vmatpush1.msra.mxu0 0.0
        %845 = vmatprep.subr.mxu0 0.0
        %846 = vmatpush1.msra.mxu0 0.0
        %847 = vmatprep.subr.mxu0 0.0
        %848 = vmatpush1.msra.mxu0 0.0
        %849 = vmatprep.subr.mxu0 0.0
        %850 = vmatpush1.msra.mxu0 0.0
        %851 = vmatprep.subr.mxu0 0.0
        %852 = vmatpush1.msra.mxu0 0.0
        %853 = vmatprep.subr.mxu0 0.0
        %854 = vmatpush1.msra.mxu0 0.0
        %855 = vmatprep.subr.mxu0 0.0
        %856 = vmatpush1.msra.mxu0 0.0
        %857 = vmatprep.subr.mxu0 0.0
        %858 = vmatpush1.msra.mxu0 0.0
        %859 = vmatprep.subr.mxu0 0.0
        %860 = vmatpush1.msra.mxu0 0.0
        %861 = vmatprep.subr.mxu0 0.0
        %862 = vmatpush1.msra.mxu0 0.0
        %863 = vmatprep.subr.mxu0 0.0
        %864 = vmatpush1.msra.mxu0 0.0
        %865 = vmatprep.subr.mxu0 0.0
        %866 = vmatpush1.msra.mxu0 0.0
        %867 = vmatprep.subr.mxu0 0.0
        %868 = vmatpush1.msra.mxu0 0.0
        %869 = vmatprep.subr.mxu0 0.0
        %870 = vmatpush1.msra.mxu0 0.0
        %871 = vmatprep.subr.mxu0 0.0
        %872 = vmatpush1.msra.mxu0 0.0
        %873 = vmatprep.subr.mxu0 0.0
        %874 = vmatpush1.msra.mxu0 0.0
        %875 = vmatprep.subr.mxu0 0.0
        %876 = vmatpush1.msra.mxu0 0.0
        %877 = vmatprep.subr.mxu0 0.0
        %878 = vmatpush1.msra.mxu0 0.0
        %879 = vmatprep.subr.mxu0 0.0
        %880 = vmatpush1.msra.mxu0 0.0
        %881 = vmatprep.subr.mxu0 0.0
        %882 = vmatpush1.msra.mxu0 0.0
        %883 = vmatprep.subr.mxu0 0.0
        %884 = vmatpush1.msra.mxu0 0.0
        %885 = vmatprep.mubr.f32.mxu0 0.0
        %886 = vmatmul.mubr.f32.gmra.mrb[0].mxu0 %v711
        %v887 = vpop.f32.mrb[0].mxu0
        %v888 = vadd.f32 %v532, %v887
        %v889 = vpop.f32.mrb[0].mxu0
        %890 = vmatprep.mubr.f32.mxu0 0.0
        %891 = vmatmul.mubr.f32.gmra.mrb[0].mxu0 %v714
        %v892 = vpop.f32.mrb[0].mxu0
        %v893 = vadd.f32 %v537, %v892
        %v894 = vpop.f32.mrb[0].mxu0
        %895 = vmatprep.mubr.f32.mxu0 0.0
        %896 = vmatmul.mubr.f32.gmra.mrb[0].mxu0 %v717
        %v897 = vpop.f32.mrb[0].mxu0
        %v898 = vadd.f32 %v542, %v897
        %v899 = vpop.f32.mrb[0].mxu0
        %900 = vmatprep.mubr.f32.mxu0 0.0
        %901 = vmatmul.mubr.f32.gmra.mrb[0].mxu0 %v720
        %v902 = vpop.f32.mrb[0].mxu0
        %v903 = vadd.f32 %v547, %v902
        %v904 = vpop.f32.mrb[0].mxu0
        %905 = vmatprep.mubr.f32.mxu0 0.0
        %906 = vmatmul.mubr.f32.gmra.mrb[0].mxu0 %v723
        %v907 = vpop.f32.mrb[0].mxu0
        %v908 = vadd.f32 %v552, %v907
        %v909 = vpop.f32.mrb[0].mxu0
        %910 = vmatprep.mubr.f32.mxu0 0.0
        %911 = vmatmul.mubr.f32.gmra.mrb[0].mxu0 %v726
        %v912 = vpop.f32.mrb[0].mxu0
        %v913 = vadd.f32 %v557, %v912
        %v914 = vpop.f32.mrb[0].mxu0
        %915 = vmatprep.mubr.f32.mxu0 0.0
        %916 = vmatmul.mubr.f32.gmra.mrb[0].mxu0 %v729
        %v917 = vpop.f32.mrb[0].mxu0
        %v918 = vadd.f32 %v562, %v917
        %v919 = vpop.f32.mrb[0].mxu0
        %920 = vmatprep.mubr.f32.mxu0 0.0
        %921 = vmatmul.mubr.f32.gmra.mrb[0].mxu0 %v732
        %v922 = vpop.f32.mrb[0].mxu0
        %v923 = vadd.f32 %v567, %v922
        %v924 = vpop.f32.mrb[0].mxu0
        %925 = vmatprep.mubr.f32.mxu0 0.0
        %926 = vmatmul.mubr.f32.gmra.mrb[0].mxu0 %v735
        %v927 = vpop.f32.mrb[0].mxu0
        %v928 = vadd.f32 %v572, %v927
        %v929 = vpop.f32.mrb[0].mxu0
        %930 = vmatprep.mubr.f32.mxu0 0.0
        %931 = vmatmul.mubr.f32.gmra.mrb[0].mxu0 %v738
        %v932 = vpop.f32.mrb[0].mxu0
        %v933 = vadd.f32 %v577, %v932
        %v934 = vpop.f32.mrb[0].mxu0
        %935 = vmatprep.mubr.f32.mxu0 0.0
        %936 = vmatmul.mubr.f32.gmra.mrb[0].mxu0 %v741
        %v937 = vpop.f32.mrb[0].mxu0
        %v938 = vadd.f32 %v582, %v937
        %v939 = vpop.f32.mrb[0].mxu0
        %940 = vmatprep.mubr.f32.mxu0 0.0
        %941 = vmatmul.mubr.f32.gmra.mrb[0].mxu0 %v744
        %v942 = vpop.f32.mrb[0].mxu0
        %v943 = vadd.f32 %v587, %v942
        %v944 = vpop.f32.mrb[0].mxu0
        %945 = vmatprep.mubr.f32.mxu0 0.0
        %946 = vmatmul.mubr.f32.gmra.mrb[0].mxu0 %v747
        %v947 = vpop.f32.mrb[0].mxu0
        %v948 = vadd.f32 %v592, %v947
        %v949 = vpop.f32.mrb[0].mxu0
        %950 = vmatprep.mubr.f32.mxu0 0.0
        %951 = vmatmul.mubr.f32.gmra.mrb[0].mxu0 %v750
        %v952 = vpop.f32.mrb[0].mxu0
        %v953 = vadd.f32 %v597, %v952
        %v954 = vpop.f32.mrb[0].mxu0
        %955 = vmatprep.mubr.f32.mxu0 0.0
        %956 = vmatmul.mubr.f32.gmra.mrb[0].mxu0 %v753
        %v957 = vpop.f32.mrb[0].mxu0
        %v958 = vadd.f32 %v602, %v957
        %v959 = vpop.f32.mrb[0].mxu0
        %960 = vmatprep.mubr.f32.mxu0 0.0
        %961 = vmatmul.mubr.f32.gmra.mrb[0].mxu0 %v756
        %v962 = vpop.f32.mrb[0].mxu0
        %v963 = vadd.f32 %v607, %v962
        %v964 = vpop.f32.mrb[0].mxu0
        %965 = vmatprep.mubr.f32.mxu0 0.0
        %966 = vmatmul.mubr.f32.gmra.mrb[0].mxu0 %v759
        %v967 = vpop.f32.mrb[0].mxu0
        %v968 = vadd.f32 %v612, %v967
        %v969 = vpop.f32.mrb[0].mxu0
        %970 = vmatprep.mubr.f32.mxu0 0.0
        %971 = vmatmul.mubr.f32.gmra.mrb[0].mxu0 %v762
        %v972 = vpop.f32.mrb[0].mxu0
        %v973 = vadd.f32 %v617, %v972
        %v974 = vpop.f32.mrb[0].mxu0
        %975 = vmatprep.mubr.f32.mxu0 0.0
        %976 = vmatmul.mubr.f32.gmra.mrb[0].mxu0 %v765
        %v977 = vpop.f32.mrb[0].mxu0
        %v978 = vadd.f32 %v622, %v977
        %v979 = vpop.f32.mrb[0].mxu0
        %980 = vmatprep.mubr.f32.mxu0 0.0
        %981 = vmatmul.mubr.f32.gmra.mrb[0].mxu0 %v768
        %v982 = vpop.f32.mrb[0].mxu0
        %v983 = vadd.f32 %v627, %v982
        %v984 = vpop.f32.mrb[0].mxu0
        %985 = vmatprep.mubr.f32.mxu0 0.0
        %986 = vmatmul.mubr.f32.gmra.mrb[0].mxu0 %v771
        %v987 = vpop.f32.mrb[0].mxu0
        %v988 = vadd.f32 %v632, %v987
        %v989 = vpop.f32.mrb[0].mxu0
        %990 = vmatprep.mubr.f32.mxu0 0.0
        %991 = vmatmul.mubr.f32.gmra.mrb[0].mxu0 %v774
        %v992 = vpop.f32.mrb[0].mxu0
        %v993 = vadd.f32 %v637, %v992
        %v994 = vpop.f32.mrb[0].mxu0
        %995 = vmatprep.mubr.f32.mxu0 0.0
        %996 = vmatmul.mubr.f32.gmra.mrb[0].mxu0 %v777
        %v997 = vpop.f32.mrb[0].mxu0
        %v998 = vadd.f32 %v642, %v997
        %v999 = vpop.f32.mrb[0].mxu0
        %1000 = vmatprep.mubr.f32.mxu0 0.0
        %1001 = vmatmul.mubr.f32.gmra.mrb[0].mxu0 %v780
        %v1002 = vpop.f32.mrb[0].mxu0
        %v1003 = vadd.f32 %v647, %v1002
        %v1004 = vpop.f32.mrb[0].mxu0
        %1005 = vmatprep.mubr.f32.mxu0 0.0
        %1006 = vmatmul.mubr.f32.gmra.mrb[0].mxu0 %v783
        %v1007 = vpop.f32.mrb[0].mxu0
        %v1008 = vadd.f32 %v652, %v1007
        %v1009 = vpop.f32.mrb[0].mxu0
        %1010 = vmatprep.mubr.f32.mxu0 0.0
        %1011 = vmatmul.mubr.f32.gmra.mrb[0].mxu0 %v786
        %v1012 = vpop.f32.mrb[0].mxu0
        %v1013 = vadd.f32 %v657, %v1012
        %v1014 = vpop.f32.mrb[0].mxu0
        %1015 = vmatprep.mubr.f32.mxu0 0.0
        %1016 = vmatmul.mubr.f32.gmra.mrb[0].mxu0 %v789
        %v1017 = vpop.f32.mrb[0].mxu0
        %v1018 = vadd.f32 %v662, %v1017
        %v1019 = vpop.f32.mrb[0].mxu0
        %1020 = vmatprep.mubr.f32.mxu0 0.0
        %1021 = vmatmul.mubr.f32.gmra.mrb[0].mxu0 %v792
        %v1022 = vpop.f32.mrb[0].mxu0
        %v1023 = vadd.f32 %v667, %v1022
        %v1024 = vpop.f32.mrb[0].mxu0
        %1025 = vmatprep.mubr.f32.mxu0 0.0
        %1026 = vmatmul.mubr.f32.gmra.mrb[0].mxu0 %v795
        %v1027 = vpop.f32.mrb[0].mxu0
        %v1028 = vadd.f32 %v672, %v1027
        %v1029 = vpop.f32.mrb[0].mxu0
        %1030 = vmatprep.mubr.f32.mxu0 0.0
        %1031 = vmatmul.mubr.f32.gmra.mrb[0].mxu0 %v798
        %v1032 = vpop.f32.mrb[0].mxu0
        %v1033 = vadd.f32 %v677, %v1032
        %v1034 = vpop.f32.mrb[0].mxu0
        %1035 = vmatprep.mubr.f32.mxu0 0.0
        %1036 = vmatmul.mubr.f32.gmra.mrb[0].mxu0 %v801
        %v1037 = vpop.f32.mrb[0].mxu0
        %v1038 = vadd.f32 %v682, %v1037
        %v1039 = vpop.f32.mrb[0].mxu0
        %1040 = vmatprep.mubr.f32.mxu0 0.0
        %1041 = vmatmul.mubr.f32.gmra.mrb[0].mxu0 %v804
        %v1042 = vpop.f32.mrb[0].mxu0
        %v1043 = vadd.f32 %v687, %v1042
        %v1044 = vpop.f32.mrb[0].mxu0
        %1045 = vmatprep.mubr.f32.mxu0 0.0
        %1046 = vmatmul.mubr.f32.gmra.mrb[0].mxu0 %v807
        %v1047 = vpop.f32.mrb[0].mxu0
        %v1048 = vadd.f32 %v692, %v1047
        %v1049 = vpop.f32.mrb[0].mxu0
        %1050 = vmatprep.mubr.f32.mxu0 0.0
        %1051 = vmatmul.mubr.f32.gmra.mrb[0].mxu0 %v810
        %v1052 = vpop.f32.mrb[0].mxu0
        %v1053 = vadd.f32 %v697, %v1052
        %v1054 = vpop.f32.mrb[0].mxu0
        %1055 = vmatprep.mubr.f32.mxu0 0.0
        %1056 = vmatmul.mubr.f32.gmra.mrb[0].mxu0 %v813
        %v1057 = vpop.f32.mrb[0].mxu0
        %v1058 = vadd.f32 %v702, %v1057
        %v1059 = vpop.f32.mrb[0].mxu0
        %1060 = vmatprep.mubr.f32.mxu0 0.0
        %1061 = vmatmul.mubr.f32.gmra.mrb[0].mxu0 %v816
        %v1062 = vpop.f32.mrb[0].mxu0
        %v1063 = vadd.f32 %v707, %v1062
        %v1064 = vpop.f32.mrb[0].mxu0
        %1065 = vdwg.mxu0
        %v1066 = vld [vmem:[%s271 + $0x2] sm:$0xff]
        %v1067 = vld [vmem:[%s271 + $0xa] sm:$0xff]
        %v1068 = vld [vmem:[%s271 + $0x12] sm:$0xff]
        %v1069 = vld [vmem:[%s271 + $0x1a] sm:$0xff]
        %v1070 = vld [vmem:[%s271 + $0x22] sm:$0xff]
        %v1071 = vld [vmem:[%s271 + $0x2a] sm:$0xff]
        %v1072 = vld [vmem:[%s271 + $0x32] sm:$0xff]
        %v1073 = vld [vmem:[%s271 + $0x3a] sm:$0xff]
        %v1074 = vld [vmem:[%s271 + $0x42] sm:$0xff]
        %v1075 = vld [vmem:[%s271 + $0x4a] sm:$0xff]
        %v1076 = vld [vmem:[%s271 + $0x52] sm:$0xff]
        %v1077 = vld [vmem:[%s271 + $0x5a] sm:$0xff]
        %v1078 = vld [vmem:[%s271 + $0x62] sm:$0xff]
        %v1079 = vld [vmem:[%s271 + $0x6a] sm:$0xff]
        %v1080 = vld [vmem:[%s271 + $0x72] sm:$0xff]
        %v1081 = vld [vmem:[%s271 + $0x7a] sm:$0xff]
        %v1082 = vld [vmem:[%s271 + $0x82] sm:$0xff]
        %v1083 = vld [vmem:[%s271 + $0x8a] sm:$0xff]
        %v1084 = vld [vmem:[%s271 + $0x92] sm:$0xff]
        %v1085 = vld [vmem:[%s271 + $0x9a] sm:$0xff]
        %v1086 = vld [vmem:[%s271 + $0xa2] sm:$0xff]
        %v1087 = vld [vmem:[%s271 + $0xaa] sm:$0xff]
        %v1088 = vld [vmem:[%s271 + $0xb2] sm:$0xff]
        %v1089 = vld [vmem:[%s271 + $0xba] sm:$0xff]
        %v1090 = vld [vmem:[%s271 + $0xc2] sm:$0xff]
        %v1091 = vld [vmem:[%s271 + $0xca] sm:$0xff]
        %v1092 = vld [vmem:[%s271 + $0xd2] sm:$0xff]
        %v1093 = vld [vmem:[%s271 + $0xda] sm:$0xff]
        %v1094 = vld [vmem:[%s271 + $0xe2] sm:$0xff]
        %v1095 = vld [vmem:[%s271 + $0xea] sm:$0xff]
        %v1096 = vld [vmem:[%s271 + $0xf2] sm:$0xff]
        %v1097 = vld [vmem:[%s271 + $0xfa] sm:$0xff]
        %v1098 = vld [vmem:[%s271 + $0x102] sm:$0xff]
        %v1099 = vld [vmem:[%s271 + $0x10a] sm:$0xff]
        %v1100 = vld [vmem:[%s271 + $0x112] sm:$0xff]
        %v1101 = vld [vmem:[%s271 + $0x11a] sm:$0xff]
        %s1102 = scalar_lea.vmem %s2, 8
        %v1103 = vld [vmem:[%s1102] sm:$0xf]
        %v1105 = vsel %vm352, %v1066, 0
        %v1108 = vsel %vm352, %v1067, 0
        %v1111 = vsel %vm352, %v1068, 0
        %v1114 = vsel %vm352, %v1069, 0
        %v1117 = vsel %vm352, %v1070, 0
        %v1120 = vsel %vm352, %v1071, 0
        %v1123 = vsel %vm352, %v1072, 0
        %v1126 = vsel %vm352, %v1073, 0
        %v1129 = vsel %vm352, %v1074, 0
        %v1132 = vsel %vm352, %v1075, 0
        %v1135 = vsel %vm352, %v1076, 0
        %v1138 = vsel %vm352, %v1077, 0
        %v1141 = vsel %vm352, %v1078, 0
        %v1144 = vsel %vm352, %v1079, 0
        %v1147 = vsel %vm352, %v1080, 0
        %v1150 = vsel %vm352, %v1081, 0
        %v1153 = vsel %vm352, %v1082, 0
        %v1156 = vsel %vm352, %v1083, 0
        %v1159 = vsel %vm352, %v1084, 0
        %v1162 = vsel %vm352, %v1085, 0
        %v1165 = vsel %vm352, %v1086, 0
        %v1168 = vsel %vm352, %v1087, 0
        %v1171 = vsel %vm352, %v1088, 0
        %v1174 = vsel %vm352, %v1089, 0
        %v1177 = vsel %vm352, %v1090, 0
        %v1180 = vsel %vm352, %v1091, 0
        %v1183 = vsel %vm352, %v1092, 0
        %v1186 = vsel %vm352, %v1093, 0
        %v1189 = vsel %vm352, %v1094, 0
        %v1192 = vsel %vm352, %v1095, 0
        %v1195 = vsel %vm352, %v1096, 0
        %v1198 = vsel %vm352, %v1097, 0
        %v1201 = vsel %vm352, %v1098, 0
        %v1204 = vsel %vm352, %v1099, 0
        %v1207 = vsel %vm352, %v1100, 0
        %v1210 = vsel %vm352, %v1101, 0
        %v1213 = vsel %vm461, %v1103, 0
        %1215 = vmatprep.subr.mxu0 0.0
        %1216 = vmatpush1.msra.mxu0 %v1213
        %1217 = vmatprep.subr.mxu0 0.0
        %1218 = vmatpush1.msra.mxu0 0.0
        %1219 = vmatprep.subr.mxu0 0.0
        %1220 = vmatpush1.msra.mxu0 0.0
        %1221 = vmatprep.subr.mxu0 0.0
        %1222 = vmatpush1.msra.mxu0 0.0
        %1223 = vmatprep.subr.mxu0 0.0
        %1224 = vmatpush1.msra.mxu0 0.0
        %1225 = vmatprep.subr.mxu0 0.0
        %1226 = vmatpush1.msra.mxu0 0.0
        %1227 = vmatprep.subr.mxu0 0.0
        %1228 = vmatpush1.msra.mxu0 0.0
        %1229 = vmatprep.subr.mxu0 0.0
        %1230 = vmatpush1.msra.mxu0 0.0
        %1231 = vmatprep.subr.mxu0 0.0
        %1232 = vmatpush1.msra.mxu0 0.0
        %1233 = vmatprep.subr.mxu0 0.0
        %1234 = vmatpush1.msra.mxu0 0.0
        %1235 = vmatprep.subr.mxu0 0.0
        %1236 = vmatpush1.msra.mxu0 0.0
        %1237 = vmatprep.subr.mxu0 0.0
        %1238 = vmatpush1.msra.mxu0 0.0
        %1239 = vmatprep.subr.mxu0 0.0
        %1240 = vmatpush1.msra.mxu0 0.0
        %1241 = vmatprep.subr.mxu0 0.0
        %1242 = vmatpush1.msra.mxu0 0.0
        %1243 = vmatprep.subr.mxu0 0.0
        %1244 = vmatpush1.msra.mxu0 0.0
        %1245 = vmatprep.subr.mxu0 0.0
        %1246 = vmatpush1.msra.mxu0 0.0
        %1247 = vmatprep.subr.mxu0 0.0
        %1248 = vmatpush1.msra.mxu0 0.0
        %1249 = vmatprep.subr.mxu0 0.0
        %1250 = vmatpush1.msra.mxu0 0.0
        %1251 = vmatprep.subr.mxu0 0.0
        %1252 = vmatpush1.msra.mxu0 0.0
        %1253 = vmatprep.subr.mxu0 0.0
        %1254 = vmatpush1.msra.mxu0 0.0
        %1255 = vmatprep.subr.mxu0 0.0
        %1256 = vmatpush1.msra.mxu0 0.0
        %1257 = vmatprep.subr.mxu0 0.0
        %1258 = vmatpush1.msra.mxu0 0.0
        %1259 = vmatprep.subr.mxu0 0.0
        %1260 = vmatpush1.msra.mxu0 0.0
        %1261 = vmatprep.subr.mxu0 0.0
        %1262 = vmatpush1.msra.mxu0 0.0
        %1263 = vmatprep.subr.mxu0 0.0
        %1264 = vmatpush1.msra.mxu0 0.0
        %1265 = vmatprep.subr.mxu0 0.0
        %1266 = vmatpush1.msra.mxu0 0.0
        %1267 = vmatprep.subr.mxu0 0.0
        %1268 = vmatpush1.msra.mxu0 0.0
        %1269 = vmatprep.subr.mxu0 0.0
        %1270 = vmatpush1.msra.mxu0 0.0
        %1271 = vmatprep.subr.mxu0 0.0
        %1272 = vmatpush1.msra.mxu0 0.0
        %1273 = vmatprep.subr.mxu0 0.0
        %1274 = vmatpush1.msra.mxu0 0.0
        %1275 = vmatprep.subr.mxu0 0.0
        %1276 = vmatpush1.msra.mxu0 0.0
        %1277 = vmatprep.subr.mxu0 0.0
        %1278 = vmatpush1.msra.mxu0 0.0
        %1279 = vmatprep.mubr.f32.mxu0 0.0
        %1280 = vmatmul.mubr.f32.gmra.mrb[0].mxu0 %v1105
        %v1281 = vpop.f32.mrb[0].mxu0
        %v1282 = vadd.f32 0.0, %v1281
        %v1283 = vpop.f32.mrb[0].mxu0
        %1284 = vmatprep.mubr.f32.mxu0 0.0
        %1285 = vmatmul.mubr.f32.gmra.mrb[0].mxu0 %v1108
        %v1286 = vpop.f32.mrb[0].mxu0
        %v1287 = vadd.f32 0.0, %v1286
        %v1288 = vpop.f32.mrb[0].mxu0
        %1289 = vmatprep.mubr.f32.mxu0 0.0
        %1290 = vmatmul.mubr.f32.gmra.mrb[0].mxu0 %v1111
        %v1291 = vpop.f32.mrb[0].mxu0
        %v1292 = vadd.f32 0.0, %v1291
        %v1293 = vpop.f32.mrb[0].mxu0
        %1294 = vmatprep.mubr.f32.mxu0 0.0
        %1295 = vmatmul.mubr.f32.gmra.mrb[0].mxu0 %v1114
        %v1296 = vpop.f32.mrb[0].mxu0
        %v1297 = vadd.f32 0.0, %v1296
        %v1298 = vpop.f32.mrb[0].mxu0
        %1299 = vmatprep.mubr.f32.mxu0 0.0
        %1300 = vmatmul.mubr.f32.gmra.mrb[0].mxu0 %v1117
        %v1301 = vpop.f32.mrb[0].mxu0
        %v1302 = vadd.f32 0.0, %v1301
        %v1303 = vpop.f32.mrb[0].mxu0
        %1304 = vmatprep.mubr.f32.mxu0 0.0
        %1305 = vmatmul.mubr.f32.gmra.mrb[0].mxu0 %v1120
        %v1306 = vpop.f32.mrb[0].mxu0
        %v1307 = vadd.f32 0.0, %v1306
        %v1308 = vpop.f32.mrb[0].mxu0
        %1309 = vmatprep.mubr.f32.mxu0 0.0
        %1310 = vmatmul.mubr.f32.gmra.mrb[0].mxu0 %v1123
        %v1311 = vpop.f32.mrb[0].mxu0
        %v1312 = vadd.f32 0.0, %v1311
        %v1313 = vpop.f32.mrb[0].mxu0
        %1314 = vmatprep.mubr.f32.mxu0 0.0
        %1315 = vmatmul.mubr.f32.gmra.mrb[0].mxu0 %v1126
        %v1316 = vpop.f32.mrb[0].mxu0
        %v1317 = vadd.f32 0.0, %v1316
        %v1318 = vpop.f32.mrb[0].mxu0
        %1319 = vmatprep.mubr.f32.mxu0 0.0
        %1320 = vmatmul.mubr.f32.gmra.mrb[0].mxu0 %v1129
        %v1321 = vpop.f32.mrb[0].mxu0
        %v1322 = vadd.f32 0.0, %v1321
        %v1323 = vpop.f32.mrb[0].mxu0
        %1324 = vmatprep.mubr.f32.mxu0 0.0
        %1325 = vmatmul.mubr.f32.gmra.mrb[0].mxu0 %v1132
        %v1326 = vpop.f32.mrb[0].mxu0
        %v1327 = vadd.f32 0.0, %v1326
        %v1328 = vpop.f32.mrb[0].mxu0
        %1329 = vmatprep.mubr.f32.mxu0 0.0
        %1330 = vmatmul.mubr.f32.gmra.mrb[0].mxu0 %v1135
        %v1331 = vpop.f32.mrb[0].mxu0
        %v1332 = vadd.f32 0.0, %v1331
        %v1333 = vpop.f32.mrb[0].mxu0
        %1334 = vmatprep.mubr.f32.mxu0 0.0
        %1335 = vmatmul.mubr.f32.gmra.mrb[0].mxu0 %v1138
        %v1336 = vpop.f32.mrb[0].mxu0
        %v1337 = vadd.f32 0.0, %v1336
        %v1338 = vpop.f32.mrb[0].mxu0
        %1339 = vmatprep.mubr.f32.mxu0 0.0
        %1340 = vmatmul.mubr.f32.gmra.mrb[0].mxu0 %v1141
        %v1341 = vpop.f32.mrb[0].mxu0
        %v1342 = vadd.f32 0.0, %v1341
        %v1343 = vpop.f32.mrb[0].mxu0
        %1344 = vmatprep.mubr.f32.mxu0 0.0
        %1345 = vmatmul.mubr.f32.gmra.mrb[0].mxu0 %v1144
        %v1346 = vpop.f32.mrb[0].mxu0
        %v1347 = vadd.f32 0.0, %v1346
        %v1348 = vpop.f32.mrb[0].mxu0
        %1349 = vmatprep.mubr.f32.mxu0 0.0
        %1350 = vmatmul.mubr.f32.gmra.mrb[0].mxu0 %v1147
        %v1351 = vpop.f32.mrb[0].mxu0
        %v1352 = vadd.f32 0.0, %v1351
        %v1353 = vpop.f32.mrb[0].mxu0
        %1354 = vmatprep.mubr.f32.mxu0 0.0
        %1355 = vmatmul.mubr.f32.gmra.mrb[0].mxu0 %v1150
        %v1356 = vpop.f32.mrb[0].mxu0
        %v1357 = vadd.f32 0.0, %v1356
        %v1358 = vpop.f32.mrb[0].mxu0
        %1359 = vmatprep.mubr.f32.mxu0 0.0
        %1360 = vmatmul.mubr.f32.gmra.mrb[0].mxu0 %v1153
        %v1361 = vpop.f32.mrb[0].mxu0
        %v1362 = vadd.f32 0.0, %v1361
        %v1363 = vpop.f32.mrb[0].mxu0
        %1364 = vmatprep.mubr.f32.mxu0 0.0
        %1365 = vmatmul.mubr.f32.gmra.mrb[0].mxu0 %v1156
        %v1366 = vpop.f32.mrb[0].mxu0
        %v1367 = vadd.f32 0.0, %v1366
        %v1368 = vpop.f32.mrb[0].mxu0
        %1369 = vmatprep.mubr.f32.mxu0 0.0
        %1370 = vmatmul.mubr.f32.gmra.mrb[0].mxu0 %v1159
        %v1371 = vpop.f32.mrb[0].mxu0
        %v1372 = vadd.f32 0.0, %v1371
        %v1373 = vpop.f32.mrb[0].mxu0
        %1374 = vmatprep.mubr.f32.mxu0 0.0
        %1375 = vmatmul.mubr.f32.gmra.mrb[0].mxu0 %v1162
        %v1376 = vpop.f32.mrb[0].mxu0
        %v1377 = vadd.f32 0.0, %v1376
        %v1378 = vpop.f32.mrb[0].mxu0
        %1379 = vmatprep.mubr.f32.mxu0 0.0
        %1380 = vmatmul.mubr.f32.gmra.mrb[0].mxu0 %v1165
        %v1381 = vpop.f32.mrb[0].mxu0
        %v1382 = vadd.f32 0.0, %v1381
        %v1383 = vpop.f32.mrb[0].mxu0
        %1384 = vmatprep.mubr.f32.mxu0 0.0
        %1385 = vmatmul.mubr.f32.gmra.mrb[0].mxu0 %v1168
        %v1386 = vpop.f32.mrb[0].mxu0
        %v1387 = vadd.f32 0.0, %v1386
        %v1388 = vpop.f32.mrb[0].mxu0
        %1389 = vmatprep.mubr.f32.mxu0 0.0
        %1390 = vmatmul.mubr.f32.gmra.mrb[0].mxu0 %v1171
        %v1391 = vpop.f32.mrb[0].mxu0
        %v1392 = vadd.f32 0.0, %v1391
        %v1393 = vpop.f32.mrb[0].mxu0
        %1394 = vmatprep.mubr.f32.mxu0 0.0
        %1395 = vmatmul.mubr.f32.gmra.mrb[0].mxu0 %v1174
        %v1396 = vpop.f32.mrb[0].mxu0
        %v1397 = vadd.f32 0.0, %v1396
        %v1398 = vpop.f32.mrb[0].mxu0
        %1399 = vmatprep.mubr.f32.mxu0 0.0
        %1400 = vmatmul.mubr.f32.gmra.mrb[0].mxu0 %v1177
        %v1401 = vpop.f32.mrb[0].mxu0
        %v1402 = vadd.f32 0.0, %v1401
        %v1403 = vpop.f32.mrb[0].mxu0
        %1404 = vmatprep.mubr.f32.mxu0 0.0
        %1405 = vmatmul.mubr.f32.gmra.mrb[0].mxu0 %v1180
        %v1406 = vpop.f32.mrb[0].mxu0
        %v1407 = vadd.f32 0.0, %v1406
        %v1408 = vpop.f32.mrb[0].mxu0
        %1409 = vmatprep.mubr.f32.mxu0 0.0
        %1410 = vmatmul.mubr.f32.gmra.mrb[0].mxu0 %v1183
        %v1411 = vpop.f32.mrb[0].mxu0
        %v1412 = vadd.f32 0.0, %v1411
        %v1413 = vpop.f32.mrb[0].mxu0
        %1414 = vmatprep.mubr.f32.mxu0 0.0
        %1415 = vmatmul.mubr.f32.gmra.mrb[0].mxu0 %v1186
        %v1416 = vpop.f32.mrb[0].mxu0
        %v1417 = vadd.f32 0.0, %v1416
        %v1418 = vpop.f32.mrb[0].mxu0
        %1419 = vmatprep.mubr.f32.mxu0 0.0
        %1420 = vmatmul.mubr.f32.gmra.mrb[0].mxu0 %v1189
        %v1421 = vpop.f32.mrb[0].mxu0
        %v1422 = vadd.f32 0.0, %v1421
        %v1423 = vpop.f32.mrb[0].mxu0
        %1424 = vmatprep.mubr.f32.mxu0 0.0
        %1425 = vmatmul.mubr.f32.gmra.mrb[0].mxu0 %v1192
        %v1426 = vpop.f32.mrb[0].mxu0
        %v1427 = vadd.f32 0.0, %v1426
        %v1428 = vpop.f32.mrb[0].mxu0
        %1429 = vmatprep.mubr.f32.mxu0 0.0
        %1430 = vmatmul.mubr.f32.gmra.mrb[0].mxu0 %v1195
        %v1431 = vpop.f32.mrb[0].mxu0
        %v1432 = vadd.f32 0.0, %v1431
        %v1433 = vpop.f32.mrb[0].mxu0
        %1434 = vmatprep.mubr.f32.mxu0 0.0
        %1435 = vmatmul.mubr.f32.gmra.mrb[0].mxu0 %v1198
        %v1436 = vpop.f32.mrb[0].mxu0
        %v1437 = vadd.f32 0.0, %v1436
        %v1438 = vpop.f32.mrb[0].mxu0
        %1439 = vmatprep.mubr.f32.mxu0 0.0
        %1440 = vmatmul.mubr.f32.gmra.mrb[0].mxu0 %v1201
        %v1441 = vpop.f32.mrb[0].mxu0
        %v1442 = vadd.f32 0.0, %v1441
        %v1443 = vpop.f32.mrb[0].mxu0
        %1444 = vmatprep.mubr.f32.mxu0 0.0
        %1445 = vmatmul.mubr.f32.gmra.mrb[0].mxu0 %v1204
        %v1446 = vpop.f32.mrb[0].mxu0
        %v1447 = vadd.f32 0.0, %v1446
        %v1448 = vpop.f32.mrb[0].mxu0
        %1449 = vmatprep.mubr.f32.mxu0 0.0
        %1450 = vmatmul.mubr.f32.gmra.mrb[0].mxu0 %v1207
        %v1451 = vpop.f32.mrb[0].mxu0
        %v1452 = vadd.f32 0.0, %v1451
        %v1453 = vpop.f32.mrb[0].mxu0
        %1454 = vmatprep.mubr.f32.mxu0 0.0
        %1455 = vmatmul.mubr.f32.gmra.mrb[0].mxu0 %v1210
        %v1456 = vpop.f32.mrb[0].mxu0
        %v1457 = vadd.f32 0.0, %v1456
        %v1458 = vpop.f32.mrb[0].mxu0
        %1459 = vdwg.mxu0
        %v1460 = vadd.f32 %v888, %v1282
        %v1461 = vadd.f32 %v893, %v1287
        %v1462 = vadd.f32 %v898, %v1292
        %v1463 = vadd.f32 %v903, %v1297
        %v1464 = vadd.f32 %v908, %v1302
        %v1465 = vadd.f32 %v913, %v1307
        %v1466 = vadd.f32 %v918, %v1312
        %v1467 = vadd.f32 %v923, %v1317
        %v1468 = vadd.f32 %v928, %v1322
        %v1469 = vadd.f32 %v933, %v1327
        %v1470 = vadd.f32 %v938, %v1332
        %v1471 = vadd.f32 %v943, %v1337
        %v1472 = vadd.f32 %v948, %v1342
        %v1473 = vadd.f32 %v953, %v1347
        %v1474 = vadd.f32 %v958, %v1352
        %v1475 = vadd.f32 %v963, %v1357
        %v1476 = vadd.f32 %v968, %v1362
        %v1477 = vadd.f32 %v973, %v1367
        %v1478 = vadd.f32 %v978, %v1372
        %v1479 = vadd.f32 %v983, %v1377
        %v1480 = vadd.f32 %v988, %v1382
        %v1481 = vadd.f32 %v993, %v1387
        %v1482 = vadd.f32 %v998, %v1392
        %v1483 = vadd.f32 %v1003, %v1397
        %v1484 = vadd.f32 %v1008, %v1402
        %v1485 = vadd.f32 %v1013, %v1407
        %v1486 = vadd.f32 %v1018, %v1412
        %v1487 = vadd.f32 %v1023, %v1417
        %v1488 = vadd.f32 %v1028, %v1422
        %v1489 = vadd.f32 %v1033, %v1427
        %v1490 = vadd.f32 %v1038, %v1432
        %v1491 = vadd.f32 %v1043, %v1437
        %v1492 = vadd.f32 %v1048, %v1442
        %v1493 = vadd.f32 %v1053, %v1447
        %v1494 = vadd.f32 %v1058, %v1452
        %v1495 = vadd.f32 %v1063, %v1457
        %v1496 = vld [vmem:[%s271 + $0x12] sm:$0xff]
        %v1497 = vld [vmem:[%s271 + $0x1a] sm:$0xff]
        %v1498 = vld [vmem:[%s271 + $0x22] sm:$0xff]
        %v1499 = vld [vmem:[%s271 + $0x2a] sm:$0xff]
        %v1500 = vld [vmem:[%s271 + $0x32] sm:$0xff]
        %v1501 = vld [vmem:[%s271 + $0x3a] sm:$0xff]
        %v1502 = vld [vmem:[%s271 + $0x42] sm:$0xff]
        %v1503 = vld [vmem:[%s271 + $0x4a] sm:$0xff]
        %v1504 = vld [vmem:[%s271 + $0x52] sm:$0xff]
        %v1505 = vld [vmem:[%s271 + $0x5a] sm:$0xff]
        %v1506 = vld [vmem:[%s271 + $0x62] sm:$0xff]
        %v1507 = vld [vmem:[%s271 + $0x6a] sm:$0xff]
        %v1508 = vld [vmem:[%s271 + $0x72] sm:$0xff]
        %v1509 = vld [vmem:[%s271 + $0x7a] sm:$0xff]
        %v1510 = vld [vmem:[%s271 + $0x82] sm:$0xff]
        %v1511 = vld [vmem:[%s271 + $0x8a] sm:$0xff]
        %v1512 = vld [vmem:[%s271 + $0x92] sm:$0xff]
        %v1513 = vld [vmem:[%s271 + $0x9a] sm:$0xff]
        %v1514 = vld [vmem:[%s271 + $0xa2] sm:$0xff]
        %v1515 = vld [vmem:[%s271 + $0xaa] sm:$0xff]
        %v1516 = vld [vmem:[%s271 + $0xb2] sm:$0xff]
        %v1517 = vld [vmem:[%s271 + $0xba] sm:$0xff]
        %v1518 = vld [vmem:[%s271 + $0xc2] sm:$0xff]
        %v1519 = vld [vmem:[%s271 + $0xca] sm:$0xff]
        %v1520 = vld [vmem:[%s271 + $0xd2] sm:$0xff]
        %v1521 = vld [vmem:[%s271 + $0xda] sm:$0xff]
        %v1522 = vld [vmem:[%s271 + $0xe2] sm:$0xff]
        %v1523 = vld [vmem:[%s271 + $0xea] sm:$0xff]
        %v1524 = vld [vmem:[%s271 + $0xf2] sm:$0xff]
        %v1525 = vld [vmem:[%s271 + $0xfa] sm:$0xff]
        %v1526 = vld [vmem:[%s271 + $0x102] sm:$0xff]
        %v1527 = vld [vmem:[%s271 + $0x10a] sm:$0xff]
        %v1528 = vld [vmem:[%s271 + $0x112] sm:$0xff]
        %v1529 = vld [vmem:[%s271 + $0x11a] sm:$0xff]
        %v1530 = vld [vmem:[%s271 + $0x122] sm:$0xff]
        %v1531 = vld [vmem:[%s271 + $0x12a] sm:$0xff]
        %s1532 = scalar_lea.vmem %s2, 12
        %v1533 = vld [vmem:[%s1532] sm:$0xf]
        %v1535 = vsel %vm352, %v1496, 0
        %v1538 = vsel %vm352, %v1497, 0
        %v1541 = vsel %vm352, %v1498, 0
        %v1544 = vsel %vm352, %v1499, 0
        %v1547 = vsel %vm352, %v1500, 0
        %v1550 = vsel %vm352, %v1501, 0
        %v1553 = vsel %vm352, %v1502, 0
        %v1556 = vsel %vm352, %v1503, 0
        %v1559 = vsel %vm352, %v1504, 0
        %v1562 = vsel %vm352, %v1505, 0
        %v1565 = vsel %vm352, %v1506, 0
        %v1568 = vsel %vm352, %v1507, 0
        %v1571 = vsel %vm352, %v1508, 0
        %v1574 = vsel %vm352, %v1509, 0
        %v1577 = vsel %vm352, %v1510, 0
        %v1580 = vsel %vm352, %v1511, 0
        %v1583 = vsel %vm352, %v1512, 0
        %v1586 = vsel %vm352, %v1513, 0
        %v1589 = vsel %vm352, %v1514, 0
        %v1592 = vsel %vm352, %v1515, 0
        %v1595 = vsel %vm352, %v1516, 0
        %v1598 = vsel %vm352, %v1517, 0
        %v1601 = vsel %vm352, %v1518, 0
        %v1604 = vsel %vm352, %v1519, 0
        %v1607 = vsel %vm352, %v1520, 0
        %v1610 = vsel %vm352, %v1521, 0
        %v1613 = vsel %vm352, %v1522, 0
        %v1616 = vsel %vm352, %v1523, 0
        %v1619 = vsel %vm352, %v1524, 0
        %v1622 = vsel %vm352, %v1525, 0
        %v1625 = vsel %vm352, %v1526, 0
        %v1628 = vsel %vm352, %v1527, 0
        %v1631 = vsel %vm352, %v1528, 0
        %v1634 = vsel %vm352, %v1529, 0
        %v1637 = vsel %vm352, %v1530, 0
        %v1640 = vsel %vm352, %v1531, 0
        %v1643 = vsel %vm461, %v1533, 0
        %1645 = vmatprep.subr.mxu0 0.0
        %1646 = vmatpush1.msra.mxu0 %v1643
        %1647 = vmatprep.subr.mxu0 0.0
        %1648 = vmatpush1.msra.mxu0 0.0
        %1649 = vmatprep.subr.mxu0 0.0
        %1650 = vmatpush1.msra.mxu0 0.0
        %1651 = vmatprep.subr.mxu0 0.0
        %1652 = vmatpush1.msra.mxu0 0.0
        %1653 = vmatprep.subr.mxu0 0.0
        %1654 = vmatpush1.msra.mxu0 0.0
        %1655 = vmatprep.subr.mxu0 0.0
        %1656 = vmatpush1.msra.mxu0 0.0
        %1657 = vmatprep.subr.mxu0 0.0
        %1658 = vmatpush1.msra.mxu0 0.0
        %1659 = vmatprep.subr.mxu0 0.0
        %1660 = vmatpush1.msra.mxu0 0.0
        %1661 = vmatprep.subr.mxu0 0.0
        %1662 = vmatpush1.msra.mxu0 0.0
        %1663 = vmatprep.subr.mxu0 0.0
        %1664 = vmatpush1.msra.mxu0 0.0
        %1665 = vmatprep.subr.mxu0 0.0
        %1666 = vmatpush1.msra.mxu0 0.0
        %1667 = vmatprep.subr.mxu0 0.0
        %1668 = vmatpush1.msra.mxu0 0.0
        %1669 = vmatprep.subr.mxu0 0.0
        %1670 = vmatpush1.msra.mxu0 0.0
        %1671 = vmatprep.subr.mxu0 0.0
        %1672 = vmatpush1.msra.mxu0 0.0
        %1673 = vmatprep.subr.mxu0 0.0
        %1674 = vmatpush1.msra.mxu0 0.0
        %1675 = vmatprep.subr.mxu0 0.0
        %1676 = vmatpush1.msra.mxu0 0.0
        %1677 = vmatprep.subr.mxu0 0.0
        %1678 = vmatpush1.msra.mxu0 0.0
        %1679 = vmatprep.subr.mxu0 0.0
        %1680 = vmatpush1.msra.mxu0 0.0
        %1681 = vmatprep.subr.mxu0 0.0
        %1682 = vmatpush1.msra.mxu0 0.0
        %1683 = vmatprep.subr.mxu0 0.0
        %1684 = vmatpush1.msra.mxu0 0.0
        %1685 = vmatprep.subr.mxu0 0.0
        %1686 = vmatpush1.msra.mxu0 0.0
        %1687 = vmatprep.subr.mxu0 0.0
        %1688 = vmatpush1.msra.mxu0 0.0
        %1689 = vmatprep.subr.mxu0 0.0
        %1690 = vmatpush1.msra.mxu0 0.0
        %1691 = vmatprep.subr.mxu0 0.0
        %1692 = vmatpush1.msra.mxu0 0.0
        %1693 = vmatprep.subr.mxu0 0.0
        %1694 = vmatpush1.msra.mxu0 0.0
        %1695 = vmatprep.subr.mxu0 0.0
        %1696 = vmatpush1.msra.mxu0 0.0
        %1697 = vmatprep.subr.mxu0 0.0
        %1698 = vmatpush1.msra.mxu0 0.0
        %1699 = vmatprep.subr.mxu0 0.0
        %1700 = vmatpush1.msra.mxu0 0.0
        %1701 = vmatprep.subr.mxu0 0.0
        %1702 = vmatpush1.msra.mxu0 0.0
        %1703 = vmatprep.subr.mxu0 0.0
        %1704 = vmatpush1.msra.mxu0 0.0
        %1705 = vmatprep.subr.mxu0 0.0
        %1706 = vmatpush1.msra.mxu0 0.0
        %1707 = vmatprep.subr.mxu0 0.0
        %1708 = vmatpush1.msra.mxu0 0.0
        %1709 = vmatprep.mubr.f32.mxu0 0.0
        %1710 = vmatmul.mubr.f32.gmra.mrb[0].mxu0 %v1535
        %v1711 = vpop.f32.mrb[0].mxu0
        %v1712 = vadd.f32 0.0, %v1711
        %v1713 = vpop.f32.mrb[0].mxu0
        %1714 = vmatprep.mubr.f32.mxu0 0.0
        %1715 = vmatmul.mubr.f32.gmra.mrb[0].mxu0 %v1538
        %v1716 = vpop.f32.mrb[0].mxu0
        %v1717 = vadd.f32 0.0, %v1716
        %v1718 = vpop.f32.mrb[0].mxu0
        %1719 = vmatprep.mubr.f32.mxu0 0.0
        %1720 = vmatmul.mubr.f32.gmra.mrb[0].mxu0 %v1541
        %v1721 = vpop.f32.mrb[0].mxu0
        %v1722 = vadd.f32 0.0, %v1721
        %v1723 = vpop.f32.mrb[0].mxu0
        %1724 = vmatprep.mubr.f32.mxu0 0.0
        %1725 = vmatmul.mubr.f32.gmra.mrb[0].mxu0 %v1544
        %v1726 = vpop.f32.mrb[0].mxu0
        %v1727 = vadd.f32 0.0, %v1726
        %v1728 = vpop.f32.mrb[0].mxu0
        %1729 = vmatprep.mubr.f32.mxu0 0.0
        %1730 = vmatmul.mubr.f32.gmra.mrb[0].mxu0 %v1547
        %v1731 = vpop.f32.mrb[0].mxu0
        %v1732 = vadd.f32 0.0, %v1731
        %v1733 = vpop.f32.mrb[0].mxu0
        %1734 = vmatprep.mubr.f32.mxu0 0.0
        %1735 = vmatmul.mubr.f32.gmra.mrb[0].mxu0 %v1550
        %v1736 = vpop.f32.mrb[0].mxu0
        %v1737 = vadd.f32 0.0, %v1736
        %v1738 = vpop.f32.mrb[0].mxu0
        %1739 = vmatprep.mubr.f32.mxu0 0.0
        %1740 = vmatmul.mubr.f32.gmra.mrb[0].mxu0 %v1553
        %v1741 = vpop.f32.mrb[0].mxu0
        %v1742 = vadd.f32 0.0, %v1741
        %v1743 = vpop.f32.mrb[0].mxu0
        %1744 = vmatprep.mubr.f32.mxu0 0.0
        %1745 = vmatmul.mubr.f32.gmra.mrb[0].mxu0 %v1556
        %v1746 = vpop.f32.mrb[0].mxu0
        %v1747 = vadd.f32 0.0, %v1746
        %v1748 = vpop.f32.mrb[0].mxu0
        %1749 = vmatprep.mubr.f32.mxu0 0.0
        %1750 = vmatmul.mubr.f32.gmra.mrb[0].mxu0 %v1559
        %v1751 = vpop.f32.mrb[0].mxu0
        %v1752 = vadd.f32 0.0, %v1751
        %v1753 = vpop.f32.mrb[0].mxu0
        %1754 = vmatprep.mubr.f32.mxu0 0.0
        %1755 = vmatmul.mubr.f32.gmra.mrb[0].mxu0 %v1562
        %v1756 = vpop.f32.mrb[0].mxu0
        %v1757 = vadd.f32 0.0, %v1756
        %v1758 = vpop.f32.mrb[0].mxu0
        %1759 = vmatprep.mubr.f32.mxu0 0.0
        %1760 = vmatmul.mubr.f32.gmra.mrb[0].mxu0 %v1565
        %v1761 = vpop.f32.mrb[0].mxu0
        %v1762 = vadd.f32 0.0, %v1761
        %v1763 = vpop.f32.mrb[0].mxu0
        %1764 = vmatprep.mubr.f32.mxu0 0.0
        %1765 = vmatmul.mubr.f32.gmra.mrb[0].mxu0 %v1568
        %v1766 = vpop.f32.mrb[0].mxu0
        %v1767 = vadd.f32 0.0, %v1766
        %v1768 = vpop.f32.mrb[0].mxu0
        %1769 = vmatprep.mubr.f32.mxu0 0.0
        %1770 = vmatmul.mubr.f32.gmra.mrb[0].mxu0 %v1571
        %v1771 = vpop.f32.mrb[0].mxu0
        %v1772 = vadd.f32 0.0, %v1771
        %v1773 = vpop.f32.mrb[0].mxu0
        %1774 = vmatprep.mubr.f32.mxu0 0.0
        %1775 = vmatmul.mubr.f32.gmra.mrb[0].mxu0 %v1574
        %v1776 = vpop.f32.mrb[0].mxu0
        %v1777 = vadd.f32 0.0, %v1776
        %v1778 = vpop.f32.mrb[0].mxu0
        %1779 = vmatprep.mubr.f32.mxu0 0.0
        %1780 = vmatmul.mubr.f32.gmra.mrb[0].mxu0 %v1577
        %v1781 = vpop.f32.mrb[0].mxu0
        %v1782 = vadd.f32 0.0, %v1781
        %v1783 = vpop.f32.mrb[0].mxu0
        %1784 = vmatprep.mubr.f32.mxu0 0.0
        %1785 = vmatmul.mubr.f32.gmra.mrb[0].mxu0 %v1580
        %v1786 = vpop.f32.mrb[0].mxu0
        %v1787 = vadd.f32 0.0, %v1786
        %v1788 = vpop.f32.mrb[0].mxu0
        %1789 = vmatprep.mubr.f32.mxu0 0.0
        %1790 = vmatmul.mubr.f32.gmra.mrb[0].mxu0 %v1583
        %v1791 = vpop.f32.mrb[0].mxu0
        %v1792 = vadd.f32 0.0, %v1791
        %v1793 = vpop.f32.mrb[0].mxu0
        %1794 = vmatprep.mubr.f32.mxu0 0.0
        %1795 = vmatmul.mubr.f32.gmra.mrb[0].mxu0 %v1586
        %v1796 = vpop.f32.mrb[0].mxu0
        %v1797 = vadd.f32 0.0, %v1796
        %v1798 = vpop.f32.mrb[0].mxu0
        %1799 = vmatprep.mubr.f32.mxu0 0.0
        %1800 = vmatmul.mubr.f32.gmra.mrb[0].mxu0 %v1589
        %v1801 = vpop.f32.mrb[0].mxu0
        %v1802 = vadd.f32 0.0, %v1801
        %v1803 = vpop.f32.mrb[0].mxu0
        %1804 = vmatprep.mubr.f32.mxu0 0.0
        %1805 = vmatmul.mubr.f32.gmra.mrb[0].mxu0 %v1592
        %v1806 = vpop.f32.mrb[0].mxu0
        %v1807 = vadd.f32 0.0, %v1806
        %v1808 = vpop.f32.mrb[0].mxu0
        %1809 = vmatprep.mubr.f32.mxu0 0.0
        %1810 = vmatmul.mubr.f32.gmra.mrb[0].mxu0 %v1595
        %v1811 = vpop.f32.mrb[0].mxu0
        %v1812 = vadd.f32 0.0, %v1811
        %v1813 = vpop.f32.mrb[0].mxu0
        %1814 = vmatprep.mubr.f32.mxu0 0.0
        %1815 = vmatmul.mubr.f32.gmra.mrb[0].mxu0 %v1598
        %v1816 = vpop.f32.mrb[0].mxu0
        %v1817 = vadd.f32 0.0, %v1816
        %v1818 = vpop.f32.mrb[0].mxu0
        %1819 = vmatprep.mubr.f32.mxu0 0.0
        %1820 = vmatmul.mubr.f32.gmra.mrb[0].mxu0 %v1601
        %v1821 = vpop.f32.mrb[0].mxu0
        %v1822 = vadd.f32 0.0, %v1821
        %v1823 = vpop.f32.mrb[0].mxu0
        %1824 = vmatprep.mubr.f32.mxu0 0.0
        %1825 = vmatmul.mubr.f32.gmra.mrb[0].mxu0 %v1604
        %v1826 = vpop.f32.mrb[0].mxu0
        %v1827 = vadd.f32 0.0, %v1826
        %v1828 = vpop.f32.mrb[0].mxu0
        %1829 = vmatprep.mubr.f32.mxu0 0.0
        %1830 = vmatmul.mubr.f32.gmra.mrb[0].mxu0 %v1607
        %v1831 = vpop.f32.mrb[0].mxu0
        %v1832 = vadd.f32 0.0, %v1831
        %v1833 = vpop.f32.mrb[0].mxu0
        %1834 = vmatprep.mubr.f32.mxu0 0.0
        %1835 = vmatmul.mubr.f32.gmra.mrb[0].mxu0 %v1610
        %v1836 = vpop.f32.mrb[0].mxu0
        %v1837 = vadd.f32 0.0, %v1836
        %v1838 = vpop.f32.mrb[0].mxu0
        %1839 = vmatprep.mubr.f32.mxu0 0.0
        %1840 = vmatmul.mubr.f32.gmra.mrb[0].mxu0 %v1613
        %v1841 = vpop.f32.mrb[0].mxu0
        %v1842 = vadd.f32 0.0, %v1841
        %v1843 = vpop.f32.mrb[0].mxu0
        %1844 = vmatprep.mubr.f32.mxu0 0.0
        %1845 = vmatmul.mubr.f32.gmra.mrb[0].mxu0 %v1616
        %v1846 = vpop.f32.mrb[0].mxu0
        %v1847 = vadd.f32 0.0, %v1846
        %v1848 = vpop.f32.mrb[0].mxu0
        %1849 = vmatprep.mubr.f32.mxu0 0.0
        %1850 = vmatmul.mubr.f32.gmra.mrb[0].mxu0 %v1619
        %v1851 = vpop.f32.mrb[0].mxu0
        %v1852 = vadd.f32 0.0, %v1851
        %v1853 = vpop.f32.mrb[0].mxu0
        %1854 = vmatprep.mubr.f32.mxu0 0.0
        %1855 = vmatmul.mubr.f32.gmra.mrb[0].mxu0 %v1622
        %v1856 = vpop.f32.mrb[0].mxu0
        %v1857 = vadd.f32 0.0, %v1856
        %v1858 = vpop.f32.mrb[0].mxu0
        %1859 = vmatprep.mubr.f32.mxu0 0.0
        %1860 = vmatmul.mubr.f32.gmra.mrb[0].mxu0 %v1625
        %v1861 = vpop.f32.mrb[0].mxu0
        %v1862 = vadd.f32 0.0, %v1861
        %v1863 = vpop.f32.mrb[0].mxu0
        %1864 = vmatprep.mubr.f32.mxu0 0.0
        %1865 = vmatmul.mubr.f32.gmra.mrb[0].mxu0 %v1628
        %v1866 = vpop.f32.mrb[0].mxu0
        %v1867 = vadd.f32 0.0, %v1866
        %v1868 = vpop.f32.mrb[0].mxu0
        %1869 = vmatprep.mubr.f32.mxu0 0.0
        %1870 = vmatmul.mubr.f32.gmra.mrb[0].mxu0 %v1631
        %v1871 = vpop.f32.mrb[0].mxu0
        %v1872 = vadd.f32 0.0, %v1871
        %v1873 = vpop.f32.mrb[0].mxu0
        %1874 = vmatprep.mubr.f32.mxu0 0.0
        %1875 = vmatmul.mubr.f32.gmra.mrb[0].mxu0 %v1634
        %v1876 = vpop.f32.mrb[0].mxu0
        %v1877 = vadd.f32 0.0, %v1876
        %v1878 = vpop.f32.mrb[0].mxu0
        %1879 = vmatprep.mubr.f32.mxu0 0.0
        %1880 = vmatmul.mubr.f32.gmra.mrb[0].mxu0 %v1637
        %v1881 = vpop.f32.mrb[0].mxu0
        %v1882 = vadd.f32 0.0, %v1881
        %v1883 = vpop.f32.mrb[0].mxu0
        %1884 = vmatprep.mubr.f32.mxu0 0.0
        %1885 = vmatmul.mubr.f32.gmra.mrb[0].mxu0 %v1640
        %v1886 = vpop.f32.mrb[0].mxu0
        %v1887 = vadd.f32 0.0, %v1886
        %v1888 = vpop.f32.mrb[0].mxu0
        %1889 = vdwg.mxu0
        %v1890 = vadd.f32 %v1460, %v1712
        %v1891 = vadd.f32 %v1461, %v1717
        %v1892 = vadd.f32 %v1462, %v1722
        %v1893 = vadd.f32 %v1463, %v1727
        %v1894 = vadd.f32 %v1464, %v1732
        %v1895 = vadd.f32 %v1465, %v1737
        %v1896 = vadd.f32 %v1466, %v1742
        %v1897 = vadd.f32 %v1467, %v1747
        %v1898 = vadd.f32 %v1468, %v1752
        %v1899 = vadd.f32 %v1469, %v1757
        %v1900 = vadd.f32 %v1470, %v1762
        %v1901 = vadd.f32 %v1471, %v1767
        %v1902 = vadd.f32 %v1472, %v1772
        %v1903 = vadd.f32 %v1473, %v1777
        %v1904 = vadd.f32 %v1474, %v1782
        %v1905 = vadd.f32 %v1475, %v1787
        %v1906 = vadd.f32 %v1476, %v1792
        %v1907 = vadd.f32 %v1477, %v1797
        %v1908 = vadd.f32 %v1478, %v1802
        %v1909 = vadd.f32 %v1479, %v1807
        %v1910 = vadd.f32 %v1480, %v1812
        %v1911 = vadd.f32 %v1481, %v1817
        %v1912 = vadd.f32 %v1482, %v1822
        %v1913 = vadd.f32 %v1483, %v1827
        %v1914 = vadd.f32 %v1484, %v1832
        %v1915 = vadd.f32 %v1485, %v1837
        %v1916 = vadd.f32 %v1486, %v1842
        %v1917 = vadd.f32 %v1487, %v1847
        %v1918 = vadd.f32 %v1488, %v1852
        %v1919 = vadd.f32 %v1489, %v1857
        %v1920 = vadd.f32 %v1490, %v1862
        %v1921 = vadd.f32 %v1491, %v1867
        %v1922 = vadd.f32 %v1492, %v1872
        %v1923 = vadd.f32 %v1493, %v1877
        %v1924 = vadd.f32 %v1494, %v1882
        %v1925 = vadd.f32 %v1495, %v1887
        %v1926 = vld [vmem:[%s271 + $0x13] sm:$0xff]
        %v1927 = vld [vmem:[%s271 + $0x1b] sm:$0xff]
        %v1928 = vld [vmem:[%s271 + $0x23] sm:$0xff]
        %v1929 = vld [vmem:[%s271 + $0x2b] sm:$0xff]
        %v1930 = vld [vmem:[%s271 + $0x33] sm:$0xff]
        %v1931 = vld [vmem:[%s271 + $0x3b] sm:$0xff]
        %v1932 = vld [vmem:[%s271 + $0x43] sm:$0xff]
        %v1933 = vld [vmem:[%s271 + $0x4b] sm:$0xff]
        %v1934 = vld [vmem:[%s271 + $0x53] sm:$0xff]
        %v1935 = vld [vmem:[%s271 + $0x5b] sm:$0xff]
        %v1936 = vld [vmem:[%s271 + $0x63] sm:$0xff]
        %v1937 = vld [vmem:[%s271 + $0x6b] sm:$0xff]
        %v1938 = vld [vmem:[%s271 + $0x73] sm:$0xff]
        %v1939 = vld [vmem:[%s271 + $0x7b] sm:$0xff]
        %v1940 = vld [vmem:[%s271 + $0x83] sm:$0xff]
        %v1941 = vld [vmem:[%s271 + $0x8b] sm:$0xff]
        %v1942 = vld [vmem:[%s271 + $0x93] sm:$0xff]
        %v1943 = vld [vmem:[%s271 + $0x9b] sm:$0xff]
        %v1944 = vld [vmem:[%s271 + $0xa3] sm:$0xff]
        %v1945 = vld [vmem:[%s271 + $0xab] sm:$0xff]
        %v1946 = vld [vmem:[%s271 + $0xb3] sm:$0xff]
        %v1947 = vld [vmem:[%s271 + $0xbb] sm:$0xff]
        %v1948 = vld [vmem:[%s271 + $0xc3] sm:$0xff]
        %v1949 = vld [vmem:[%s271 + $0xcb] sm:$0xff]
        %v1950 = vld [vmem:[%s271 + $0xd3] sm:$0xff]
        %v1951 = vld [vmem:[%s271 + $0xdb] sm:$0xff]
        %v1952 = vld [vmem:[%s271 + $0xe3] sm:$0xff]
        %v1953 = vld [vmem:[%s271 + $0xeb] sm:$0xff]
        %v1954 = vld [vmem:[%s271 + $0xf3] sm:$0xff]
        %v1955 = vld [vmem:[%s271 + $0xfb] sm:$0xff]
        %v1956 = vld [vmem:[%s271 + $0x103] sm:$0xff]
        %v1957 = vld [vmem:[%s271 + $0x10b] sm:$0xff]
        %v1958 = vld [vmem:[%s271 + $0x113] sm:$0xff]
        %v1959 = vld [vmem:[%s271 + $0x11b] sm:$0xff]
        %v1960 = vld [vmem:[%s271 + $0x123] sm:$0xff]
        %v1961 = vld [vmem:[%s271 + $0x12b] sm:$0xff]
        %s1962 = scalar_lea.vmem %s2, 16
        %v1963 = vld [vmem:[%s1962] sm:$0xf]
        %v1965 = vsel %vm352, %v1926, 0
        %v1968 = vsel %vm352, %v1927, 0
        %v1971 = vsel %vm352, %v1928, 0
        %v1974 = vsel %vm352, %v1929, 0
        %v1977 = vsel %vm352, %v1930, 0
        %v1980 = vsel %vm352, %v1931, 0
        %v1983 = vsel %vm352, %v1932, 0
        %v1986 = vsel %vm352, %v1933, 0
        %v1989 = vsel %vm352, %v1934, 0
        %v1992 = vsel %vm352, %v1935, 0
        %v1995 = vsel %vm352, %v1936, 0
        %v1998 = vsel %vm352, %v1937, 0
        %v2001 = vsel %vm352, %v1938, 0
        %v2004 = vsel %vm352, %v1939, 0
        %v2007 = vsel %vm352, %v1940, 0
        %v2010 = vsel %vm352, %v1941, 0
        %v2013 = vsel %vm352, %v1942, 0
        %v2016 = vsel %vm352, %v1943, 0
        %v2019 = vsel %vm352, %v1944, 0
        %v2022 = vsel %vm352, %v1945, 0
        %v2025 = vsel %vm352, %v1946, 0
        %v2028 = vsel %vm352, %v1947, 0
        %v2031 = vsel %vm352, %v1948, 0
        %v2034 = vsel %vm352, %v1949, 0
        %v2037 = vsel %vm352, %v1950, 0
        %v2040 = vsel %vm352, %v1951, 0
        %v2043 = vsel %vm352, %v1952, 0
        %v2046 = vsel %vm352, %v1953, 0
        %v2049 = vsel %vm352, %v1954, 0
        %v2052 = vsel %vm352, %v1955, 0
        %v2055 = vsel %vm352, %v1956, 0
        %v2058 = vsel %vm352, %v1957, 0
        %v2061 = vsel %vm352, %v1958, 0
        %v2064 = vsel %vm352, %v1959, 0
        %v2067 = vsel %vm352, %v1960, 0
        %v2070 = vsel %vm352, %v1961, 0
        %v2073 = vsel %vm461, %v1963, 0
        %2075 = vmatprep.subr.mxu0 0.0
        %2076 = vmatpush1.msra.mxu0 %v2073
        %2077 = vmatprep.subr.mxu0 0.0
        %2078 = vmatpush1.msra.mxu0 0.0
        %2079 = vmatprep.subr.mxu0 0.0
        %2080 = vmatpush1.msra.mxu0 0.0
        %2081 = vmatprep.subr.mxu0 0.0
        %2082 = vmatpush1.msra.mxu0 0.0
        %2083 = vmatprep.subr.mxu0 0.0
        %2084 = vmatpush1.msra.mxu0 0.0
        %2085 = vmatprep.subr.mxu0 0.0
        %2086 = vmatpush1.msra.mxu0 0.0
        %2087 = vmatprep.subr.mxu0 0.0
        %2088 = vmatpush1.msra.mxu0 0.0
        %2089 = vmatprep.subr.mxu0 0.0
        %2090 = vmatpush1.msra.mxu0 0.0
        %2091 = vmatprep.subr.mxu0 0.0
        %2092 = vmatpush1.msra.mxu0 0.0
        %2093 = vmatprep.subr.mxu0 0.0
        %2094 = vmatpush1.msra.mxu0 0.0
        %2095 = vmatprep.subr.mxu0 0.0
        %2096 = vmatpush1.msra.mxu0 0.0
        %2097 = vmatprep.subr.mxu0 0.0
        %2098 = vmatpush1.msra.mxu0 0.0
        %2099 = vmatprep.subr.mxu0 0.0
        %2100 = vmatpush1.msra.mxu0 0.0
        %2101 = vmatprep.subr.mxu0 0.0
        %2102 = vmatpush1.msra.mxu0 0.0
        %2103 = vmatprep.subr.mxu0 0.0
        %2104 = vmatpush1.msra.mxu0 0.0
        %2105 = vmatprep.subr.mxu0 0.0
        %2106 = vmatpush1.msra.mxu0 0.0
        %2107 = vmatprep.subr.mxu0 0.0
        %2108 = vmatpush1.msra.mxu0 0.0
        %2109 = vmatprep.subr.mxu0 0.0
        %2110 = vmatpush1.msra.mxu0 0.0
        %2111 = vmatprep.subr.mxu0 0.0
        %2112 = vmatpush1.msra.mxu0 0.0
        %2113 = vmatprep.subr.mxu0 0.0
        %2114 = vmatpush1.msra.mxu0 0.0
        %2115 = vmatprep.subr.mxu0 0.0
        %2116 = vmatpush1.msra.mxu0 0.0
        %2117 = vmatprep.subr.mxu0 0.0
        %2118 = vmatpush1.msra.mxu0 0.0
        %2119 = vmatprep.subr.mxu0 0.0
        %2120 = vmatpush1.msra.mxu0 0.0
        %2121 = vmatprep.subr.mxu0 0.0
        %2122 = vmatpush1.msra.mxu0 0.0
        %2123 = vmatprep.subr.mxu0 0.0
        %2124 = vmatpush1.msra.mxu0 0.0
        %2125 = vmatprep.subr.mxu0 0.0
        %2126 = vmatpush1.msra.mxu0 0.0
        %2127 = vmatprep.subr.mxu0 0.0
        %2128 = vmatpush1.msra.mxu0 0.0
        %2129 = vmatprep.subr.mxu0 0.0
        %2130 = vmatpush1.msra.mxu0 0.0
        %2131 = vmatprep.subr.mxu0 0.0
        %2132 = vmatpush1.msra.mxu0 0.0
        %2133 = vmatprep.subr.mxu0 0.0
        %2134 = vmatpush1.msra.mxu0 0.0
        %2135 = vmatprep.subr.mxu0 0.0
        %2136 = vmatpush1.msra.mxu0 0.0
        %2137 = vmatprep.subr.mxu0 0.0
        %2138 = vmatpush1.msra.mxu0 0.0
        %2139 = vmatprep.mubr.f32.mxu0 0.0
        %2140 = vmatmul.mubr.f32.gmra.mrb[0].mxu0 %v1965
        %v2141 = vpop.f32.mrb[0].mxu0
        %v2142 = vadd.f32 0.0, %v2141
        %v2143 = vpop.f32.mrb[0].mxu0
        %2144 = vmatprep.mubr.f32.mxu0 0.0
        %2145 = vmatmul.mubr.f32.gmra.mrb[0].mxu0 %v1968
        %v2146 = vpop.f32.mrb[0].mxu0
        %v2147 = vadd.f32 0.0, %v2146
        %v2148 = vpop.f32.mrb[0].mxu0
        %2149 = vmatprep.mubr.f32.mxu0 0.0
        %2150 = vmatmul.mubr.f32.gmra.mrb[0].mxu0 %v1971
        %v2151 = vpop.f32.mrb[0].mxu0
        %v2152 = vadd.f32 0.0, %v2151
        %v2153 = vpop.f32.mrb[0].mxu0
        %2154 = vmatprep.mubr.f32.mxu0 0.0
        %2155 = vmatmul.mubr.f32.gmra.mrb[0].mxu0 %v1974
        %v2156 = vpop.f32.mrb[0].mxu0
        %v2157 = vadd.f32 0.0, %v2156
        %v2158 = vpop.f32.mrb[0].mxu0
        %2159 = vmatprep.mubr.f32.mxu0 0.0
        %2160 = vmatmul.mubr.f32.gmra.mrb[0].mxu0 %v1977
        %v2161 = vpop.f32.mrb[0].mxu0
        %v2162 = vadd.f32 0.0, %v2161
        %v2163 = vpop.f32.mrb[0].mxu0
        %2164 = vmatprep.mubr.f32.mxu0 0.0
        %2165 = vmatmul.mubr.f32.gmra.mrb[0].mxu0 %v1980
        %v2166 = vpop.f32.mrb[0].mxu0
        %v2167 = vadd.f32 0.0, %v2166
        %v2168 = vpop.f32.mrb[0].mxu0
        %2169 = vmatprep.mubr.f32.mxu0 0.0
        %2170 = vmatmul.mubr.f32.gmra.mrb[0].mxu0 %v1983
        %v2171 = vpop.f32.mrb[0].mxu0
        %v2172 = vadd.f32 0.0, %v2171
        %v2173 = vpop.f32.mrb[0].mxu0
        %2174 = vmatprep.mubr.f32.mxu0 0.0
        %2175 = vmatmul.mubr.f32.gmra.mrb[0].mxu0 %v1986
        %v2176 = vpop.f32.mrb[0].mxu0
        %v2177 = vadd.f32 0.0, %v2176
        %v2178 = vpop.f32.mrb[0].mxu0
        %2179 = vmatprep.mubr.f32.mxu0 0.0
        %2180 = vmatmul.mubr.f32.gmra.mrb[0].mxu0 %v1989
        %v2181 = vpop.f32.mrb[0].mxu0
        %v2182 = vadd.f32 0.0, %v2181
        %v2183 = vpop.f32.mrb[0].mxu0
        %2184 = vmatprep.mubr.f32.mxu0 0.0
        %2185 = vmatmul.mubr.f32.gmra.mrb[0].mxu0 %v1992
        %v2186 = vpop.f32.mrb[0].mxu0
        %v2187 = vadd.f32 0.0, %v2186
        %v2188 = vpop.f32.mrb[0].mxu0
        %2189 = vmatprep.mubr.f32.mxu0 0.0
        %2190 = vmatmul.mubr.f32.gmra.mrb[0].mxu0 %v1995
        %v2191 = vpop.f32.mrb[0].mxu0
        %v2192 = vadd.f32 0.0, %v2191
        %v2193 = vpop.f32.mrb[0].mxu0
        %2194 = vmatprep.mubr.f32.mxu0 0.0
        %2195 = vmatmul.mubr.f32.gmra.mrb[0].mxu0 %v1998
        %v2196 = vpop.f32.mrb[0].mxu0
        %v2197 = vadd.f32 0.0, %v2196
        %v2198 = vpop.f32.mrb[0].mxu0
        %2199 = vmatprep.mubr.f32.mxu0 0.0
        %2200 = vmatmul.mubr.f32.gmra.mrb[0].mxu0 %v2001
        %v2201 = vpop.f32.mrb[0].mxu0
        %v2202 = vadd.f32 0.0, %v2201
        %v2203 = vpop.f32.mrb[0].mxu0
        %2204 = vmatprep.mubr.f32.mxu0 0.0
        %2205 = vmatmul.mubr.f32.gmra.mrb[0].mxu0 %v2004
        %v2206 = vpop.f32.mrb[0].mxu0
        %v2207 = vadd.f32 0.0, %v2206
        %v2208 = vpop.f32.mrb[0].mxu0
        %2209 = vmatprep.mubr.f32.mxu0 0.0
        %2210 = vmatmul.mubr.f32.gmra.mrb[0].mxu0 %v2007
        %v2211 = vpop.f32.mrb[0].mxu0
        %v2212 = vadd.f32 0.0, %v2211
        %v2213 = vpop.f32.mrb[0].mxu0
        %2214 = vmatprep.mubr.f32.mxu0 0.0
        %2215 = vmatmul.mubr.f32.gmra.mrb[0].mxu0 %v2010
        %v2216 = vpop.f32.mrb[0].mxu0
        %v2217 = vadd.f32 0.0, %v2216
        %v2218 = vpop.f32.mrb[0].mxu0
        %2219 = vmatprep.mubr.f32.mxu0 0.0
        %2220 = vmatmul.mubr.f32.gmra.mrb[0].mxu0 %v2013
        %v2221 = vpop.f32.mrb[0].mxu0
        %v2222 = vadd.f32 0.0, %v2221
        %v2223 = vpop.f32.mrb[0].mxu0
        %2224 = vmatprep.mubr.f32.mxu0 0.0
        %2225 = vmatmul.mubr.f32.gmra.mrb[0].mxu0 %v2016
        %v2226 = vpop.f32.mrb[0].mxu0
        %v2227 = vadd.f32 0.0, %v2226
        %v2228 = vpop.f32.mrb[0].mxu0
        %2229 = vmatprep.mubr.f32.mxu0 0.0
        %2230 = vmatmul.mubr.f32.gmra.mrb[0].mxu0 %v2019
        %v2231 = vpop.f32.mrb[0].mxu0
        %v2232 = vadd.f32 0.0, %v2231
        %v2233 = vpop.f32.mrb[0].mxu0
        %2234 = vmatprep.mubr.f32.mxu0 0.0
        %2235 = vmatmul.mubr.f32.gmra.mrb[0].mxu0 %v2022
        %v2236 = vpop.f32.mrb[0].mxu0
        %v2237 = vadd.f32 0.0, %v2236
        %v2238 = vpop.f32.mrb[0].mxu0
        %2239 = vmatprep.mubr.f32.mxu0 0.0
        %2240 = vmatmul.mubr.f32.gmra.mrb[0].mxu0 %v2025
        %v2241 = vpop.f32.mrb[0].mxu0
        %v2242 = vadd.f32 0.0, %v2241
        %v2243 = vpop.f32.mrb[0].mxu0
        %2244 = vmatprep.mubr.f32.mxu0 0.0
        %2245 = vmatmul.mubr.f32.gmra.mrb[0].mxu0 %v2028
        %v2246 = vpop.f32.mrb[0].mxu0
        %v2247 = vadd.f32 0.0, %v2246
        %v2248 = vpop.f32.mrb[0].mxu0
        %2249 = vmatprep.mubr.f32.mxu0 0.0
        %2250 = vmatmul.mubr.f32.gmra.mrb[0].mxu0 %v2031
        %v2251 = vpop.f32.mrb[0].mxu0
        %v2252 = vadd.f32 0.0, %v2251
        %v2253 = vpop.f32.mrb[0].mxu0
        %2254 = vmatprep.mubr.f32.mxu0 0.0
        %2255 = vmatmul.mubr.f32.gmra.mrb[0].mxu0 %v2034
        %v2256 = vpop.f32.mrb[0].mxu0
        %v2257 = vadd.f32 0.0, %v2256
        %v2258 = vpop.f32.mrb[0].mxu0
        %2259 = vmatprep.mubr.f32.mxu0 0.0
        %2260 = vmatmul.mubr.f32.gmra.mrb[0].mxu0 %v2037
        %v2261 = vpop.f32.mrb[0].mxu0
        %v2262 = vadd.f32 0.0, %v2261
        %v2263 = vpop.f32.mrb[0].mxu0
        %2264 = vmatprep.mubr.f32.mxu0 0.0
        %2265 = vmatmul.mubr.f32.gmra.mrb[0].mxu0 %v2040
        %v2266 = vpop.f32.mrb[0].mxu0
        %v2267 = vadd.f32 0.0, %v2266
        %v2268 = vpop.f32.mrb[0].mxu0
        %2269 = vmatprep.mubr.f32.mxu0 0.0
        %2270 = vmatmul.mubr.f32.gmra.mrb[0].mxu0 %v2043
        %v2271 = vpop.f32.mrb[0].mxu0
        %v2272 = vadd.f32 0.0, %v2271
        %v2273 = vpop.f32.mrb[0].mxu0
        %2274 = vmatprep.mubr.f32.mxu0 0.0
        %2275 = vmatmul.mubr.f32.gmra.mrb[0].mxu0 %v2046
        %v2276 = vpop.f32.mrb[0].mxu0
        %v2277 = vadd.f32 0.0, %v2276
        %v2278 = vpop.f32.mrb[0].mxu0
        %2279 = vmatprep.mubr.f32.mxu0 0.0
        %2280 = vmatmul.mubr.f32.gmra.mrb[0].mxu0 %v2049
        %v2281 = vpop.f32.mrb[0].mxu0
        %v2282 = vadd.f32 0.0, %v2281
        %v2283 = vpop.f32.mrb[0].mxu0
        %2284 = vmatprep.mubr.f32.mxu0 0.0
        %2285 = vmatmul.mubr.f32.gmra.mrb[0].mxu0 %v2052
        %v2286 = vpop.f32.mrb[0].mxu0
        %v2287 = vadd.f32 0.0, %v2286
        %v2288 = vpop.f32.mrb[0].mxu0
        %2289 = vmatprep.mubr.f32.mxu0 0.0
        %2290 = vmatmul.mubr.f32.gmra.mrb[0].mxu0 %v2055
        %v2291 = vpop.f32.mrb[0].mxu0
        %v2292 = vadd.f32 0.0, %v2291
        %v2293 = vpop.f32.mrb[0].mxu0
        %2294 = vmatprep.mubr.f32.mxu0 0.0
        %2295 = vmatmul.mubr.f32.gmra.mrb[0].mxu0 %v2058
        %v2296 = vpop.f32.mrb[0].mxu0
        %v2297 = vadd.f32 0.0, %v2296
        %v2298 = vpop.f32.mrb[0].mxu0
        %2299 = vmatprep.mubr.f32.mxu0 0.0
        %2300 = vmatmul.mubr.f32.gmra.mrb[0].mxu0 %v2061
        %v2301 = vpop.f32.mrb[0].mxu0
        %v2302 = vadd.f32 0.0, %v2301
        %v2303 = vpop.f32.mrb[0].mxu0
        %2304 = vmatprep.mubr.f32.mxu0 0.0
        %2305 = vmatmul.mubr.f32.gmra.mrb[0].mxu0 %v2064
        %v2306 = vpop.f32.mrb[0].mxu0
        %v2307 = vadd.f32 0.0, %v2306
        %v2308 = vpop.f32.mrb[0].mxu0
        %2309 = vmatprep.mubr.f32.mxu0 0.0
        %2310 = vmatmul.mubr.f32.gmra.mrb[0].mxu0 %v2067
        %v2311 = vpop.f32.mrb[0].mxu0
        %v2312 = vadd.f32 0.0, %v2311
        %v2313 = vpop.f32.mrb[0].mxu0
        %2314 = vmatprep.mubr.f32.mxu0 0.0
        %2315 = vmatmul.mubr.f32.gmra.mrb[0].mxu0 %v2070
        %v2316 = vpop.f32.mrb[0].mxu0
        %v2317 = vadd.f32 0.0, %v2316
        %v2318 = vpop.f32.mrb[0].mxu0
        %2319 = vdwg.mxu0
        %v2320 = vadd.f32 %v1890, %v2142
        %v2321 = vadd.f32 %v1891, %v2147
        %v2322 = vadd.f32 %v1892, %v2152
        %v2323 = vadd.f32 %v1893, %v2157
        %v2324 = vadd.f32 %v1894, %v2162
        %v2325 = vadd.f32 %v1895, %v2167
        %v2326 = vadd.f32 %v1896, %v2172
        %v2327 = vadd.f32 %v1897, %v2177
        %v2328 = vadd.f32 %v1898, %v2182
        %v2329 = vadd.f32 %v1899, %v2187
        %v2330 = vadd.f32 %v1900, %v2192
        %v2331 = vadd.f32 %v1901, %v2197
        %v2332 = vadd.f32 %v1902, %v2202
        %v2333 = vadd.f32 %v1903, %v2207
        %v2334 = vadd.f32 %v1904, %v2212
        %v2335 = vadd.f32 %v1905, %v2217
        %v2336 = vadd.f32 %v1906, %v2222
        %v2337 = vadd.f32 %v1907, %v2227
        %v2338 = vadd.f32 %v1908, %v2232
        %v2339 = vadd.f32 %v1909, %v2237
        %v2340 = vadd.f32 %v1910, %v2242
        %v2341 = vadd.f32 %v1911, %v2247
        %v2342 = vadd.f32 %v1912, %v2252
        %v2343 = vadd.f32 %v1913, %v2257
        %v2344 = vadd.f32 %v1914, %v2262
        %v2345 = vadd.f32 %v1915, %v2267
        %v2346 = vadd.f32 %v1916, %v2272
        %v2347 = vadd.f32 %v1917, %v2277
        %v2348 = vadd.f32 %v1918, %v2282
        %v2349 = vadd.f32 %v1919, %v2287
        %v2350 = vadd.f32 %v1920, %v2292
        %v2351 = vadd.f32 %v1921, %v2297
        %v2352 = vadd.f32 %v1922, %v2302
        %v2353 = vadd.f32 %v1923, %v2307
        %v2354 = vadd.f32 %v1924, %v2312
        %v2355 = vadd.f32 %v1925, %v2317
        %v2356 = vld [vmem:[%s271 + $0x14] sm:$0xff]
        %v2357 = vld [vmem:[%s271 + $0x1c] sm:$0xff]
        %v2358 = vld [vmem:[%s271 + $0x24] sm:$0xff]
        %v2359 = vld [vmem:[%s271 + $0x2c] sm:$0xff]
        %v2360 = vld [vmem:[%s271 + $0x34] sm:$0xff]
        %v2361 = vld [vmem:[%s271 + $0x3c] sm:$0xff]
        %v2362 = vld [vmem:[%s271 + $0x44] sm:$0xff]
        %v2363 = vld [vmem:[%s271 + $0x4c] sm:$0xff]
        %v2364 = vld [vmem:[%s271 + $0x54] sm:$0xff]
        %v2365 = vld [vmem:[%s271 + $0x5c] sm:$0xff]
        %v2366 = vld [vmem:[%s271 + $0x64] sm:$0xff]
        %v2367 = vld [vmem:[%s271 + $0x6c] sm:$0xff]
        %v2368 = vld [vmem:[%s271 + $0x74] sm:$0xff]
        %v2369 = vld [vmem:[%s271 + $0x7c] sm:$0xff]
        %v2370 = vld [vmem:[%s271 + $0x84] sm:$0xff]
        %v2371 = vld [vmem:[%s271 + $0x8c] sm:$0xff]
        %v2372 = vld [vmem:[%s271 + $0x94] sm:$0xff]
        %v2373 = vld [vmem:[%s271 + $0x9c] sm:$0xff]
        %v2374 = vld [vmem:[%s271 + $0xa4] sm:$0xff]
        %v2375 = vld [vmem:[%s271 + $0xac] sm:$0xff]
        %v2376 = vld [vmem:[%s271 + $0xb4] sm:$0xff]
        %v2377 = vld [vmem:[%s271 + $0xbc] sm:$0xff]
        %v2378 = vld [vmem:[%s271 + $0xc4] sm:$0xff]
        %v2379 = vld [vmem:[%s271 + $0xcc] sm:$0xff]
        %v2380 = vld [vmem:[%s271 + $0xd4] sm:$0xff]
        %v2381 = vld [vmem:[%s271 + $0xdc] sm:$0xff]
        %v2382 = vld [vmem:[%s271 + $0xe4] sm:$0xff]
        %v2383 = vld [vmem:[%s271 + $0xec] sm:$0xff]
        %v2384 = vld [vmem:[%s271 + $0xf4] sm:$0xff]
        %v2385 = vld [vmem:[%s271 + $0xfc] sm:$0xff]
        %v2386 = vld [vmem:[%s271 + $0x104] sm:$0xff]
        %v2387 = vld [vmem:[%s271 + $0x10c] sm:$0xff]
        %v2388 = vld [vmem:[%s271 + $0x114] sm:$0xff]
        %v2389 = vld [vmem:[%s271 + $0x11c] sm:$0xff]
        %v2390 = vld [vmem:[%s271 + $0x124] sm:$0xff]
        %v2391 = vld [vmem:[%s271 + $0x12c] sm:$0xff]
        %s2392 = scalar_lea.vmem %s2, 20
        %v2393 = vld [vmem:[%s2392] sm:$0xf]
        %v2395 = vsel %vm352, %v2356, 0
        %v2398 = vsel %vm352, %v2357, 0
        %v2401 = vsel %vm352, %v2358, 0
        %v2404 = vsel %vm352, %v2359, 0
        %v2407 = vsel %vm352, %v2360, 0
        %v2410 = vsel %vm352, %v2361, 0
        %v2413 = vsel %vm352, %v2362, 0
        %v2416 = vsel %vm352, %v2363, 0
        %v2419 = vsel %vm352, %v2364, 0
        %v2422 = vsel %vm352, %v2365, 0
        %v2425 = vsel %vm352, %v2366, 0
        %v2428 = vsel %vm352, %v2367, 0
        %v2431 = vsel %vm352, %v2368, 0
        %v2434 = vsel %vm352, %v2369, 0
        %v2437 = vsel %vm352, %v2370, 0
        %v2440 = vsel %vm352, %v2371, 0
        %v2443 = vsel %vm352, %v2372, 0
        %v2446 = vsel %vm352, %v2373, 0
        %v2449 = vsel %vm352, %v2374, 0
        %v2452 = vsel %vm352, %v2375, 0
        %v2455 = vsel %vm352, %v2376, 0
        %v2458 = vsel %vm352, %v2377, 0
        %v2461 = vsel %vm352, %v2378, 0
        %v2464 = vsel %vm352, %v2379, 0
        %v2467 = vsel %vm352, %v2380, 0
        %v2470 = vsel %vm352, %v2381, 0
        %v2473 = vsel %vm352, %v2382, 0
        %v2476 = vsel %vm352, %v2383, 0
        %v2479 = vsel %vm352, %v2384, 0
        %v2482 = vsel %vm352, %v2385, 0
        %v2485 = vsel %vm352, %v2386, 0
        %v2488 = vsel %vm352, %v2387, 0
        %v2491 = vsel %vm352, %v2388, 0
        %v2494 = vsel %vm352, %v2389, 0
        %v2497 = vsel %vm352, %v2390, 0
        %v2500 = vsel %vm352, %v2391, 0
        %v2503 = vsel %vm461, %v2393, 0
        %2505 = vmatprep.subr.mxu0 0.0
        %2506 = vmatpush1.msra.mxu0 %v2503
        %2507 = vmatprep.subr.mxu0 0.0
        %2508 = vmatpush1.msra.mxu0 0.0
        %2509 = vmatprep.subr.mxu0 0.0
        %2510 = vmatpush1.msra.mxu0 0.0
        %2511 = vmatprep.subr.mxu0 0.0
        %2512 = vmatpush1.msra.mxu0 0.0
        %2513 = vmatprep.subr.mxu0 0.0
        %2514 = vmatpush1.msra.mxu0 0.0
        %2515 = vmatprep.subr.mxu0 0.0
        %2516 = vmatpush1.msra.mxu0 0.0
        %2517 = vmatprep.subr.mxu0 0.0
        %2518 = vmatpush1.msra.mxu0 0.0
        %2519 = vmatprep.subr.mxu0 0.0
        %2520 = vmatpush1.msra.mxu0 0.0
        %2521 = vmatprep.subr.mxu0 0.0
        %2522 = vmatpush1.msra.mxu0 0.0
        %2523 = vmatprep.subr.mxu0 0.0
        %2524 = vmatpush1.msra.mxu0 0.0
        %2525 = vmatprep.subr.mxu0 0.0
        %2526 = vmatpush1.msra.mxu0 0.0
        %2527 = vmatprep.subr.mxu0 0.0
        %2528 = vmatpush1.msra.mxu0 0.0
        %2529 = vmatprep.subr.mxu0 0.0
        %2530 = vmatpush1.msra.mxu0 0.0
        %2531 = vmatprep.subr.mxu0 0.0
        %2532 = vmatpush1.msra.mxu0 0.0
        %2533 = vmatprep.subr.mxu0 0.0
        %2534 = vmatpush1.msra.mxu0 0.0
        %2535 = vmatprep.subr.mxu0 0.0
        %2536 = vmatpush1.msra.mxu0 0.0
        %2537 = vmatprep.subr.mxu0 0.0
        %2538 = vmatpush1.msra.mxu0 0.0
        %2539 = vmatprep.subr.mxu0 0.0
        %2540 = vmatpush1.msra.mxu0 0.0
        %2541 = vmatprep.subr.mxu0 0.0
        %2542 = vmatpush1.msra.mxu0 0.0
        %2543 = vmatprep.subr.mxu0 0.0
        %2544 = vmatpush1.msra.mxu0 0.0
        %2545 = vmatprep.subr.mxu0 0.0
        %2546 = vmatpush1.msra.mxu0 0.0
        %2547 = vmatprep.subr.mxu0 0.0
        %2548 = vmatpush1.msra.mxu0 0.0
        %2549 = vmatprep.subr.mxu0 0.0
        %2550 = vmatpush1.msra.mxu0 0.0
        %2551 = vmatprep.subr.mxu0 0.0
        %2552 = vmatpush1.msra.mxu0 0.0
        %2553 = vmatprep.subr.mxu0 0.0
        %2554 = vmatpush1.msra.mxu0 0.0
        %2555 = vmatprep.subr.mxu0 0.0
        %2556 = vmatpush1.msra.mxu0 0.0
        %2557 = vmatprep.subr.mxu0 0.0
        %2558 = vmatpush1.msra.mxu0 0.0
        %2559 = vmatprep.subr.mxu0 0.0
        %2560 = vmatpush1.msra.mxu0 0.0
        %2561 = vmatprep.subr.mxu0 0.0
        %2562 = vmatpush1.msra.mxu0 0.0
        %2563 = vmatprep.subr.mxu0 0.0
        %2564 = vmatpush1.msra.mxu0 0.0
        %2565 = vmatprep.subr.mxu0 0.0
        %2566 = vmatpush1.msra.mxu0 0.0
        %2567 = vmatprep.subr.mxu0 0.0
        %2568 = vmatpush1.msra.mxu0 0.0
        %2569 = vmatprep.mubr.f32.mxu0 0.0
        %2570 = vmatmul.mubr.f32.gmra.mrb[0].mxu0 %v2395
        %v2571 = vpop.f32.mrb[0].mxu0
        %v2572 = vadd.f32 0.0, %v2571
        %v2573 = vpop.f32.mrb[0].mxu0
        %2574 = vmatprep.mubr.f32.mxu0 0.0
        %2575 = vmatmul.mubr.f32.gmra.mrb[0].mxu0 %v2398
        %v2576 = vpop.f32.mrb[0].mxu0
        %v2577 = vadd.f32 0.0, %v2576
        %v2578 = vpop.f32.mrb[0].mxu0
        %2579 = vmatprep.mubr.f32.mxu0 0.0
        %2580 = vmatmul.mubr.f32.gmra.mrb[0].mxu0 %v2401
        %v2581 = vpop.f32.mrb[0].mxu0
        %v2582 = vadd.f32 0.0, %v2581
        %v2583 = vpop.f32.mrb[0].mxu0
        %2584 = vmatprep.mubr.f32.mxu0 0.0
        %2585 = vmatmul.mubr.f32.gmra.mrb[0].mxu0 %v2404
        %v2586 = vpop.f32.mrb[0].mxu0
        %v2587 = vadd.f32 0.0, %v2586
        %v2588 = vpop.f32.mrb[0].mxu0
        %2589 = vmatprep.mubr.f32.mxu0 0.0
        %2590 = vmatmul.mubr.f32.gmra.mrb[0].mxu0 %v2407
        %v2591 = vpop.f32.mrb[0].mxu0
        %v2592 = vadd.f32 0.0, %v2591
        %v2593 = vpop.f32.mrb[0].mxu0
        %2594 = vmatprep.mubr.f32.mxu0 0.0
        %2595 = vmatmul.mubr.f32.gmra.mrb[0].mxu0 %v2410
        %v2596 = vpop.f32.mrb[0].mxu0
        %v2597 = vadd.f32 0.0, %v2596
        %v2598 = vpop.f32.mrb[0].mxu0
        %2599 = vmatprep.mubr.f32.mxu0 0.0
        %2600 = vmatmul.mubr.f32.gmra.mrb[0].mxu0 %v2413
        %v2601 = vpop.f32.mrb[0].mxu0
        %v2602 = vadd.f32 0.0, %v2601
        %v2603 = vpop.f32.mrb[0].mxu0
        %2604 = vmatprep.mubr.f32.mxu0 0.0
        %2605 = vmatmul.mubr.f32.gmra.mrb[0].mxu0 %v2416
        %v2606 = vpop.f32.mrb[0].mxu0
        %v2607 = vadd.f32 0.0, %v2606
        %v2608 = vpop.f32.mrb[0].mxu0
        %2609 = vmatprep.mubr.f32.mxu0 0.0
        %2610 = vmatmul.mubr.f32.gmra.mrb[0].mxu0 %v2419
        %v2611 = vpop.f32.mrb[0].mxu0
        %v2612 = vadd.f32 0.0, %v2611
        %v2613 = vpop.f32.mrb[0].mxu0
        %2614 = vmatprep.mubr.f32.mxu0 0.0
        %2615 = vmatmul.mubr.f32.gmra.mrb[0].mxu0 %v2422
        %v2616 = vpop.f32.mrb[0].mxu0
        %v2617 = vadd.f32 0.0, %v2616
        %v2618 = vpop.f32.mrb[0].mxu0
        %2619 = vmatprep.mubr.f32.mxu0 0.0
        %2620 = vmatmul.mubr.f32.gmra.mrb[0].mxu0 %v2425
        %v2621 = vpop.f32.mrb[0].mxu0
        %v2622 = vadd.f32 0.0, %v2621
        %v2623 = vpop.f32.mrb[0].mxu0
        %2624 = vmatprep.mubr.f32.mxu0 0.0
        %2625 = vmatmul.mubr.f32.gmra.mrb[0].mxu0 %v2428
        %v2626 = vpop.f32.mrb[0].mxu0
        %v2627 = vadd.f32 0.0, %v2626
        %v2628 = vpop.f32.mrb[0].mxu0
        %2629 = vmatprep.mubr.f32.mxu0 0.0
        %2630 = vmatmul.mubr.f32.gmra.mrb[0].mxu0 %v2431
        %v2631 = vpop.f32.mrb[0].mxu0
        %v2632 = vadd.f32 0.0, %v2631
        %v2633 = vpop.f32.mrb[0].mxu0
        %2634 = vmatprep.mubr.f32.mxu0 0.0
        %2635 = vmatmul.mubr.f32.gmra.mrb[0].mxu0 %v2434
        %v2636 = vpop.f32.mrb[0].mxu0
        %v2637 = vadd.f32 0.0, %v2636
        %v2638 = vpop.f32.mrb[0].mxu0
        %2639 = vmatprep.mubr.f32.mxu0 0.0
        %2640 = vmatmul.mubr.f32.gmra.mrb[0].mxu0 %v2437
        %v2641 = vpop.f32.mrb[0].mxu0
        %v2642 = vadd.f32 0.0, %v2641
        %v2643 = vpop.f32.mrb[0].mxu0
        %2644 = vmatprep.mubr.f32.mxu0 0.0
        %2645 = vmatmul.mubr.f32.gmra.mrb[0].mxu0 %v2440
        %v2646 = vpop.f32.mrb[0].mxu0
        %v2647 = vadd.f32 0.0, %v2646
        %v2648 = vpop.f32.mrb[0].mxu0
        %2649 = vmatprep.mubr.f32.mxu0 0.0
        %2650 = vmatmul.mubr.f32.gmra.mrb[0].mxu0 %v2443
        %v2651 = vpop.f32.mrb[0].mxu0
        %v2652 = vadd.f32 0.0, %v2651
        %v2653 = vpop.f32.mrb[0].mxu0
        %2654 = vmatprep.mubr.f32.mxu0 0.0
        %2655 = vmatmul.mubr.f32.gmra.mrb[0].mxu0 %v2446
        %v2656 = vpop.f32.mrb[0].mxu0
        %v2657 = vadd.f32 0.0, %v2656
        %v2658 = vpop.f32.mrb[0].mxu0
        %2659 = vmatprep.mubr.f32.mxu0 0.0
        %2660 = vmatmul.mubr.f32.gmra.mrb[0].mxu0 %v2449
        %v2661 = vpop.f32.mrb[0].mxu0
        %v2662 = vadd.f32 0.0, %v2661
        %v2663 = vpop.f32.mrb[0].mxu0
        %2664 = vmatprep.mubr.f32.mxu0 0.0
        %2665 = vmatmul.mubr.f32.gmra.mrb[0].mxu0 %v2452
        %v2666 = vpop.f32.mrb[0].mxu0
        %v2667 = vadd.f32 0.0, %v2666
        %v2668 = vpop.f32.mrb[0].mxu0
        %2669 = vmatprep.mubr.f32.mxu0 0.0
        %2670 = vmatmul.mubr.f32.gmra.mrb[0].mxu0 %v2455
        %v2671 = vpop.f32.mrb[0].mxu0
        %v2672 = vadd.f32 0.0, %v2671
        %v2673 = vpop.f32.mrb[0].mxu0
        %2674 = vmatprep.mubr.f32.mxu0 0.0
        %2675 = vmatmul.mubr.f32.gmra.mrb[0].mxu0 %v2458
        %v2676 = vpop.f32.mrb[0].mxu0
        %v2677 = vadd.f32 0.0, %v2676
        %v2678 = vpop.f32.mrb[0].mxu0
        %2679 = vmatprep.mubr.f32.mxu0 0.0
        %2680 = vmatmul.mubr.f32.gmra.mrb[0].mxu0 %v2461
        %v2681 = vpop.f32.mrb[0].mxu0
        %v2682 = vadd.f32 0.0, %v2681
        %v2683 = vpop.f32.mrb[0].mxu0
        %2684 = vmatprep.mubr.f32.mxu0 0.0
        %2685 = vmatmul.mubr.f32.gmra.mrb[0].mxu0 %v2464
        %v2686 = vpop.f32.mrb[0].mxu0
        %v2687 = vadd.f32 0.0, %v2686
        %v2688 = vpop.f32.mrb[0].mxu0
        %2689 = vmatprep.mubr.f32.mxu0 0.0
        %2690 = vmatmul.mubr.f32.gmra.mrb[0].mxu0 %v2467
        %v2691 = vpop.f32.mrb[0].mxu0
        %v2692 = vadd.f32 0.0, %v2691
        %v2693 = vpop.f32.mrb[0].mxu0
        %2694 = vmatprep.mubr.f32.mxu0 0.0
        %2695 = vmatmul.mubr.f32.gmra.mrb[0].mxu0 %v2470
        %v2696 = vpop.f32.mrb[0].mxu0
        %v2697 = vadd.f32 0.0, %v2696
        %v2698 = vpop.f32.mrb[0].mxu0
        %2699 = vmatprep.mubr.f32.mxu0 0.0
        %2700 = vmatmul.mubr.f32.gmra.mrb[0].mxu0 %v2473
        %v2701 = vpop.f32.mrb[0].mxu0
        %v2702 = vadd.f32 0.0, %v2701
        %v2703 = vpop.f32.mrb[0].mxu0
        %2704 = vmatprep.mubr.f32.mxu0 0.0
        %2705 = vmatmul.mubr.f32.gmra.mrb[0].mxu0 %v2476
        %v2706 = vpop.f32.mrb[0].mxu0
        %v2707 = vadd.f32 0.0, %v2706
        %v2708 = vpop.f32.mrb[0].mxu0
        %2709 = vmatprep.mubr.f32.mxu0 0.0
        %2710 = vmatmul.mubr.f32.gmra.mrb[0].mxu0 %v2479
        %v2711 = vpop.f32.mrb[0].mxu0
        %v2712 = vadd.f32 0.0, %v2711
        %v2713 = vpop.f32.mrb[0].mxu0
        %2714 = vmatprep.mubr.f32.mxu0 0.0
        %2715 = vmatmul.mubr.f32.gmra.mrb[0].mxu0 %v2482
        %v2716 = vpop.f32.mrb[0].mxu0
        %v2717 = vadd.f32 0.0, %v2716
        %v2718 = vpop.f32.mrb[0].mxu0
        %2719 = vmatprep.mubr.f32.mxu0 0.0
        %2720 = vmatmul.mubr.f32.gmra.mrb[0].mxu0 %v2485
        %v2721 = vpop.f32.mrb[0].mxu0
        %v2722 = vadd.f32 0.0, %v2721
        %v2723 = vpop.f32.mrb[0].mxu0
        %2724 = vmatprep.mubr.f32.mxu0 0.0
        %2725 = vmatmul.mubr.f32.gmra.mrb[0].mxu0 %v2488
        %v2726 = vpop.f32.mrb[0].mxu0
        %v2727 = vadd.f32 0.0, %v2726
        %v2728 = vpop.f32.mrb[0].mxu0
        %2729 = vmatprep.mubr.f32.mxu0 0.0
        %2730 = vmatmul.mubr.f32.gmra.mrb[0].mxu0 %v2491
        %v2731 = vpop.f32.mrb[0].mxu0
        %v2732 = vadd.f32 0.0, %v2731
        %v2733 = vpop.f32.mrb[0].mxu0
        %2734 = vmatprep.mubr.f32.mxu0 0.0
        %2735 = vmatmul.mubr.f32.gmra.mrb[0].mxu0 %v2494
        %v2736 = vpop.f32.mrb[0].mxu0
        %v2737 = vadd.f32 0.0, %v2736
        %v2738 = vpop.f32.mrb[0].mxu0
        %2739 = vmatprep.mubr.f32.mxu0 0.0
        %2740 = vmatmul.mubr.f32.gmra.mrb[0].mxu0 %v2497
        %v2741 = vpop.f32.mrb[0].mxu0
        %v2742 = vadd.f32 0.0, %v2741
        %v2743 = vpop.f32.mrb[0].mxu0
        %2744 = vmatprep.mubr.f32.mxu0 0.0
        %2745 = vmatmul.mubr.f32.gmra.mrb[0].mxu0 %v2500
        %v2746 = vpop.f32.mrb[0].mxu0
        %v2747 = vadd.f32 0.0, %v2746
        %v2748 = vpop.f32.mrb[0].mxu0
        %2749 = vdwg.mxu0
        %v2750 = vadd.f32 %v2320, %v2572
        %v2751 = vadd.f32 %v2321, %v2577
        %v2752 = vadd.f32 %v2322, %v2582
        %v2753 = vadd.f32 %v2323, %v2587
        %v2754 = vadd.f32 %v2324, %v2592
        %v2755 = vadd.f32 %v2325, %v2597
        %v2756 = vadd.f32 %v2326, %v2602
        %v2757 = vadd.f32 %v2327, %v2607
        %v2758 = vadd.f32 %v2328, %v2612
        %v2759 = vadd.f32 %v2329, %v2617
        %v2760 = vadd.f32 %v2330, %v2622
        %v2761 = vadd.f32 %v2331, %v2627
        %v2762 = vadd.f32 %v2332, %v2632
        %v2763 = vadd.f32 %v2333, %v2637
        %v2764 = vadd.f32 %v2334, %v2642
        %v2765 = vadd.f32 %v2335, %v2647
        %v2766 = vadd.f32 %v2336, %v2652
        %v2767 = vadd.f32 %v2337, %v2657
        %v2768 = vadd.f32 %v2338, %v2662
        %v2769 = vadd.f32 %v2339, %v2667
        %v2770 = vadd.f32 %v2340, %v2672
        %v2771 = vadd.f32 %v2341, %v2677
        %v2772 = vadd.f32 %v2342, %v2682
        %v2773 = vadd.f32 %v2343, %v2687
        %v2774 = vadd.f32 %v2344, %v2692
        %v2775 = vadd.f32 %v2345, %v2697
        %v2776 = vadd.f32 %v2346, %v2702
        %v2777 = vadd.f32 %v2347, %v2707
        %v2778 = vadd.f32 %v2348, %v2712
        %v2779 = vadd.f32 %v2349, %v2717
        %v2780 = vadd.f32 %v2350, %v2722
        %v2781 = vadd.f32 %v2351, %v2727
        %v2782 = vadd.f32 %v2352, %v2732
        %v2783 = vadd.f32 %v2353, %v2737
        %v2784 = vadd.f32 %v2354, %v2742
        %v2785 = vadd.f32 %v2355, %v2747
        %v2786 = vld [vmem:[%s271 + $0x24] sm:$0xff]
        %v2787 = vld [vmem:[%s271 + $0x2c] sm:$0xff]
        %v2788 = vld [vmem:[%s271 + $0x34] sm:$0xff]
        %v2789 = vld [vmem:[%s271 + $0x3c] sm:$0xff]
        %v2790 = vld [vmem:[%s271 + $0x44] sm:$0xff]
        %v2791 = vld [vmem:[%s271 + $0x4c] sm:$0xff]
        %v2792 = vld [vmem:[%s271 + $0x54] sm:$0xff]
        %v2793 = vld [vmem:[%s271 + $0x5c] sm:$0xff]
        %v2794 = vld [vmem:[%s271 + $0x64] sm:$0xff]
        %v2795 = vld [vmem:[%s271 + $0x6c] sm:$0xff]
        %v2796 = vld [vmem:[%s271 + $0x74] sm:$0xff]
        %v2797 = vld [vmem:[%s271 + $0x7c] sm:$0xff]
        %v2798 = vld [vmem:[%s271 + $0x84] sm:$0xff]
        %v2799 = vld [vmem:[%s271 + $0x8c] sm:$0xff]
        %v2800 = vld [vmem:[%s271 + $0x94] sm:$0xff]
        %v2801 = vld [vmem:[%s271 + $0x9c] sm:$0xff]
        %v2802 = vld [vmem:[%s271 + $0xa4] sm:$0xff]
        %v2803 = vld [vmem:[%s271 + $0xac] sm:$0xff]
        %v2804 = vld [vmem:[%s271 + $0xb4] sm:$0xff]
        %v2805 = vld [vmem:[%s271 + $0xbc] sm:$0xff]
        %v2806 = vld [vmem:[%s271 + $0xc4] sm:$0xff]
        %v2807 = vld [vmem:[%s271 + $0xcc] sm:$0xff]
        %v2808 = vld [vmem:[%s271 + $0xd4] sm:$0xff]
        %v2809 = vld [vmem:[%s271 + $0xdc] sm:$0xff]
        %v2810 = vld [vmem:[%s271 + $0xe4] sm:$0xff]
        %v2811 = vld [vmem:[%s271 + $0xec] sm:$0xff]
        %v2812 = vld [vmem:[%s271 + $0xf4] sm:$0xff]
        %v2813 = vld [vmem:[%s271 + $0xfc] sm:$0xff]
        %v2814 = vld [vmem:[%s271 + $0x104] sm:$0xff]
        %v2815 = vld [vmem:[%s271 + $0x10c] sm:$0xff]
        %v2816 = vld [vmem:[%s271 + $0x114] sm:$0xff]
        %v2817 = vld [vmem:[%s271 + $0x11c] sm:$0xff]
        %v2818 = vld [vmem:[%s271 + $0x124] sm:$0xff]
        %v2819 = vld [vmem:[%s271 + $0x12c] sm:$0xff]
        %v2820 = vld [vmem:[%s271 + $0x134] sm:$0xff]
        %v2821 = vld [vmem:[%s271 + $0x13c] sm:$0xff]
        %s2822 = scalar_lea.vmem %s2, 24
        %v2823 = vld [vmem:[%s2822] sm:$0xf]
        %v2825 = vsel %vm352, %v2786, 0
        %v2828 = vsel %vm352, %v2787, 0
        %v2831 = vsel %vm352, %v2788, 0
        %v2834 = vsel %vm352, %v2789, 0
        %v2837 = vsel %vm352, %v2790, 0
        %v2840 = vsel %vm352, %v2791, 0
        %v2843 = vsel %vm352, %v2792, 0
        %v2846 = vsel %vm352, %v2793, 0
        %v2849 = vsel %vm352, %v2794, 0
        %v2852 = vsel %vm352, %v2795, 0
        %v2855 = vsel %vm352, %v2796, 0
        %v2858 = vsel %vm352, %v2797, 0
        %v2861 = vsel %vm352, %v2798, 0
        %v2864 = vsel %vm352, %v2799, 0
        %v2867 = vsel %vm352, %v2800, 0
        %v2870 = vsel %vm352, %v2801, 0
        %v2873 = vsel %vm352, %v2802, 0
        %v2876 = vsel %vm352, %v2803, 0
        %v2879 = vsel %vm352, %v2804, 0
        %v2882 = vsel %vm352, %v2805, 0
        %v2885 = vsel %vm352, %v2806, 0
        %v2888 = vsel %vm352, %v2807, 0
        %v2891 = vsel %vm352, %v2808, 0
        %v2894 = vsel %vm352, %v2809, 0
        %v2897 = vsel %vm352, %v2810, 0
        %v2900 = vsel %vm352, %v2811, 0
        %v2903 = vsel %vm352, %v2812, 0
        %v2906 = vsel %vm352, %v2813, 0
        %v2909 = vsel %vm352, %v2814, 0
        %v2912 = vsel %vm352, %v2815, 0
        %v2915 = vsel %vm352, %v2816, 0
        %v2918 = vsel %vm352, %v2817, 0
        %v2921 = vsel %vm352, %v2818, 0
        %v2924 = vsel %vm352, %v2819, 0
        %v2927 = vsel %vm352, %v2820, 0
        %v2930 = vsel %vm352, %v2821, 0
        %v2933 = vsel %vm461, %v2823, 0
        %2935 = vmatprep.subr.mxu0 0.0
        %2936 = vmatpush1.msra.mxu0 %v2933
        %2937 = vmatprep.subr.mxu0 0.0
        %2938 = vmatpush1.msra.mxu0 0.0
        %2939 = vmatprep.subr.mxu0 0.0
        %2940 = vmatpush1.msra.mxu0 0.0
        %2941 = vmatprep.subr.mxu0 0.0
        %2942 = vmatpush1.msra.mxu0 0.0
        %2943 = vmatprep.subr.mxu0 0.0
        %2944 = vmatpush1.msra.mxu0 0.0
        %2945 = vmatprep.subr.mxu0 0.0
        %2946 = vmatpush1.msra.mxu0 0.0
        %2947 = vmatprep.subr.mxu0 0.0
        %2948 = vmatpush1.msra.mxu0 0.0
        %2949 = vmatprep.subr.mxu0 0.0
        %2950 = vmatpush1.msra.mxu0 0.0
        %2951 = vmatprep.subr.mxu0 0.0
        %2952 = vmatpush1.msra.mxu0 0.0
        %2953 = vmatprep.subr.mxu0 0.0
        %2954 = vmatpush1.msra.mxu0 0.0
        %2955 = vmatprep.subr.mxu0 0.0
        %2956 = vmatpush1.msra.mxu0 0.0
        %2957 = vmatprep.subr.mxu0 0.0
        %2958 = vmatpush1.msra.mxu0 0.0
        %2959 = vmatprep.subr.mxu0 0.0
        %2960 = vmatpush1.msra.mxu0 0.0
        %2961 = vmatprep.subr.mxu0 0.0
        %2962 = vmatpush1.msra.mxu0 0.0
        %2963 = vmatprep.subr.mxu0 0.0
        %2964 = vmatpush1.msra.mxu0 0.0
        %2965 = vmatprep.subr.mxu0 0.0
        %2966 = vmatpush1.msra.mxu0 0.0
        %2967 = vmatprep.subr.mxu0 0.0
        %2968 = vmatpush1.msra.mxu0 0.0
        %2969 = vmatprep.subr.mxu0 0.0
        %2970 = vmatpush1.msra.mxu0 0.0
        %2971 = vmatprep.subr.mxu0 0.0
        %2972 = vmatpush1.msra.mxu0 0.0
        %2973 = vmatprep.subr.mxu0 0.0
        %2974 = vmatpush1.msra.mxu0 0.0
        %2975 = vmatprep.subr.mxu0 0.0
        %2976 = vmatpush1.msra.mxu0 0.0
        %2977 = vmatprep.subr.mxu0 0.0
        %2978 = vmatpush1.msra.mxu0 0.0
        %2979 = vmatprep.subr.mxu0 0.0
        %2980 = vmatpush1.msra.mxu0 0.0
        %2981 = vmatprep.subr.mxu0 0.0
        %2982 = vmatpush1.msra.mxu0 0.0
        %2983 = vmatprep.subr.mxu0 0.0
        %2984 = vmatpush1.msra.mxu0 0.0
        %2985 = vmatprep.subr.mxu0 0.0
        %2986 = vmatpush1.msra.mxu0 0.0
        %2987 = vmatprep.subr.mxu0 0.0
        %2988 = vmatpush1.msra.mxu0 0.0
        %2989 = vmatprep.subr.mxu0 0.0
        %2990 = vmatpush1.msra.mxu0 0.0
        %2991 = vmatprep.subr.mxu0 0.0
        %2992 = vmatpush1.msra.mxu0 0.0
        %2993 = vmatprep.subr.mxu0 0.0
        %2994 = vmatpush1.msra.mxu0 0.0
        %2995 = vmatprep.subr.mxu0 0.0
        %2996 = vmatpush1.msra.mxu0 0.0
        %2997 = vmatprep.subr.mxu0 0.0
        %2998 = vmatpush1.msra.mxu0 0.0
        %2999 = vmatprep.mubr.f32.mxu0 0.0
        %3000 = vmatmul.mubr.f32.gmra.mrb[0].mxu0 %v2825
        %v3001 = vpop.f32.mrb[0].mxu0
        %v3002 = vadd.f32 0.0, %v3001
        %v3003 = vpop.f32.mrb[0].mxu0
        %3004 = vmatprep.mubr.f32.mxu0 0.0
        %3005 = vmatmul.mubr.f32.gmra.mrb[0].mxu0 %v2828
        %v3006 = vpop.f32.mrb[0].mxu0
        %v3007 = vadd.f32 0.0, %v3006
        %v3008 = vpop.f32.mrb[0].mxu0
        %3009 = vmatprep.mubr.f32.mxu0 0.0
        %3010 = vmatmul.mubr.f32.gmra.mrb[0].mxu0 %v2831
        %v3011 = vpop.f32.mrb[0].mxu0
        %v3012 = vadd.f32 0.0, %v3011
        %v3013 = vpop.f32.mrb[0].mxu0
        %3014 = vmatprep.mubr.f32.mxu0 0.0
        %3015 = vmatmul.mubr.f32.gmra.mrb[0].mxu0 %v2834
        %v3016 = vpop.f32.mrb[0].mxu0
        %v3017 = vadd.f32 0.0, %v3016
        %v3018 = vpop.f32.mrb[0].mxu0
        %3019 = vmatprep.mubr.f32.mxu0 0.0
        %3020 = vmatmul.mubr.f32.gmra.mrb[0].mxu0 %v2837
        %v3021 = vpop.f32.mrb[0].mxu0
        %v3022 = vadd.f32 0.0, %v3021
        %v3023 = vpop.f32.mrb[0].mxu0
        %3024 = vmatprep.mubr.f32.mxu0 0.0
        %3025 = vmatmul.mubr.f32.gmra.mrb[0].mxu0 %v2840
        %v3026 = vpop.f32.mrb[0].mxu0
        %v3027 = vadd.f32 0.0, %v3026
        %v3028 = vpop.f32.mrb[0].mxu0
        %3029 = vmatprep.mubr.f32.mxu0 0.0
        %3030 = vmatmul.mubr.f32.gmra.mrb[0].mxu0 %v2843
        %v3031 = vpop.f32.mrb[0].mxu0
        %v3032 = vadd.f32 0.0, %v3031
        %v3033 = vpop.f32.mrb[0].mxu0
        %3034 = vmatprep.mubr.f32.mxu0 0.0
        %3035 = vmatmul.mubr.f32.gmra.mrb[0].mxu0 %v2846
        %v3036 = vpop.f32.mrb[0].mxu0
        %v3037 = vadd.f32 0.0, %v3036
        %v3038 = vpop.f32.mrb[0].mxu0
        %3039 = vmatprep.mubr.f32.mxu0 0.0
        %3040 = vmatmul.mubr.f32.gmra.mrb[0].mxu0 %v2849
        %v3041 = vpop.f32.mrb[0].mxu0
        %v3042 = vadd.f32 0.0, %v3041
        %v3043 = vpop.f32.mrb[0].mxu0
        %3044 = vmatprep.mubr.f32.mxu0 0.0
        %3045 = vmatmul.mubr.f32.gmra.mrb[0].mxu0 %v2852
        %v3046 = vpop.f32.mrb[0].mxu0
        %v3047 = vadd.f32 0.0, %v3046
        %v3048 = vpop.f32.mrb[0].mxu0
        %3049 = vmatprep.mubr.f32.mxu0 0.0
        %3050 = vmatmul.mubr.f32.gmra.mrb[0].mxu0 %v2855
        %v3051 = vpop.f32.mrb[0].mxu0
        %v3052 = vadd.f32 0.0, %v3051
        %v3053 = vpop.f32.mrb[0].mxu0
        %3054 = vmatprep.mubr.f32.mxu0 0.0
        %3055 = vmatmul.mubr.f32.gmra.mrb[0].mxu0 %v2858
        %v3056 = vpop.f32.mrb[0].mxu0
        %v3057 = vadd.f32 0.0, %v3056
        %v3058 = vpop.f32.mrb[0].mxu0
        %3059 = vmatprep.mubr.f32.mxu0 0.0
        %3060 = vmatmul.mubr.f32.gmra.mrb[0].mxu0 %v2861
        %v3061 = vpop.f32.mrb[0].mxu0
        %v3062 = vadd.f32 0.0, %v3061
        %v3063 = vpop.f32.mrb[0].mxu0
        %3064 = vmatprep.mubr.f32.mxu0 0.0
        %3065 = vmatmul.mubr.f32.gmra.mrb[0].mxu0 %v2864
        %v3066 = vpop.f32.mrb[0].mxu0
        %v3067 = vadd.f32 0.0, %v3066
        %v3068 = vpop.f32.mrb[0].mxu0
        %3069 = vmatprep.mubr.f32.mxu0 0.0
        %3070 = vmatmul.mubr.f32.gmra.mrb[0].mxu0 %v2867
        %v3071 = vpop.f32.mrb[0].mxu0
        %v3072 = vadd.f32 0.0, %v3071
        %v3073 = vpop.f32.mrb[0].mxu0
        %3074 = vmatprep.mubr.f32.mxu0 0.0
        %3075 = vmatmul.mubr.f32.gmra.mrb[0].mxu0 %v2870
        %v3076 = vpop.f32.mrb[0].mxu0
        %v3077 = vadd.f32 0.0, %v3076
        %v3078 = vpop.f32.mrb[0].mxu0
        %3079 = vmatprep.mubr.f32.mxu0 0.0
        %3080 = vmatmul.mubr.f32.gmra.mrb[0].mxu0 %v2873
        %v3081 = vpop.f32.mrb[0].mxu0
        %v3082 = vadd.f32 0.0, %v3081
        %v3083 = vpop.f32.mrb[0].mxu0
        %3084 = vmatprep.mubr.f32.mxu0 0.0
        %3085 = vmatmul.mubr.f32.gmra.mrb[0].mxu0 %v2876
        %v3086 = vpop.f32.mrb[0].mxu0
        %v3087 = vadd.f32 0.0, %v3086
        %v3088 = vpop.f32.mrb[0].mxu0
        %3089 = vmatprep.mubr.f32.mxu0 0.0
        %3090 = vmatmul.mubr.f32.gmra.mrb[0].mxu0 %v2879
        %v3091 = vpop.f32.mrb[0].mxu0
        %v3092 = vadd.f32 0.0, %v3091
        %v3093 = vpop.f32.mrb[0].mxu0
        %3094 = vmatprep.mubr.f32.mxu0 0.0
        %3095 = vmatmul.mubr.f32.gmra.mrb[0].mxu0 %v2882
        %v3096 = vpop.f32.mrb[0].mxu0
        %v3097 = vadd.f32 0.0, %v3096
        %v3098 = vpop.f32.mrb[0].mxu0
        %3099 = vmatprep.mubr.f32.mxu0 0.0
        %3100 = vmatmul.mubr.f32.gmra.mrb[0].mxu0 %v2885
        %v3101 = vpop.f32.mrb[0].mxu0
        %v3102 = vadd.f32 0.0, %v3101
        %v3103 = vpop.f32.mrb[0].mxu0
        %3104 = vmatprep.mubr.f32.mxu0 0.0
        %3105 = vmatmul.mubr.f32.gmra.mrb[0].mxu0 %v2888
        %v3106 = vpop.f32.mrb[0].mxu0
        %v3107 = vadd.f32 0.0, %v3106
        %v3108 = vpop.f32.mrb[0].mxu0
        %3109 = vmatprep.mubr.f32.mxu0 0.0
        %3110 = vmatmul.mubr.f32.gmra.mrb[0].mxu0 %v2891
        %v3111 = vpop.f32.mrb[0].mxu0
        %v3112 = vadd.f32 0.0, %v3111
        %v3113 = vpop.f32.mrb[0].mxu0
        %3114 = vmatprep.mubr.f32.mxu0 0.0
        %3115 = vmatmul.mubr.f32.gmra.mrb[0].mxu0 %v2894
        %v3116 = vpop.f32.mrb[0].mxu0
        %v3117 = vadd.f32 0.0, %v3116
        %v3118 = vpop.f32.mrb[0].mxu0
        %3119 = vmatprep.mubr.f32.mxu0 0.0
        %3120 = vmatmul.mubr.f32.gmra.mrb[0].mxu0 %v2897
        %v3121 = vpop.f32.mrb[0].mxu0
        %v3122 = vadd.f32 0.0, %v3121
        %v3123 = vpop.f32.mrb[0].mxu0
        %3124 = vmatprep.mubr.f32.mxu0 0.0
        %3125 = vmatmul.mubr.f32.gmra.mrb[0].mxu0 %v2900
        %v3126 = vpop.f32.mrb[0].mxu0
        %v3127 = vadd.f32 0.0, %v3126
        %v3128 = vpop.f32.mrb[0].mxu0
        %3129 = vmatprep.mubr.f32.mxu0 0.0
        %3130 = vmatmul.mubr.f32.gmra.mrb[0].mxu0 %v2903
        %v3131 = vpop.f32.mrb[0].mxu0
        %v3132 = vadd.f32 0.0, %v3131
        %v3133 = vpop.f32.mrb[0].mxu0
        %3134 = vmatprep.mubr.f32.mxu0 0.0
        %3135 = vmatmul.mubr.f32.gmra.mrb[0].mxu0 %v2906
        %v3136 = vpop.f32.mrb[0].mxu0
        %v3137 = vadd.f32 0.0, %v3136
        %v3138 = vpop.f32.mrb[0].mxu0
        %3139 = vmatprep.mubr.f32.mxu0 0.0
        %3140 = vmatmul.mubr.f32.gmra.mrb[0].mxu0 %v2909
        %v3141 = vpop.f32.mrb[0].mxu0
        %v3142 = vadd.f32 0.0, %v3141
        %v3143 = vpop.f32.mrb[0].mxu0
        %3144 = vmatprep.mubr.f32.mxu0 0.0
        %3145 = vmatmul.mubr.f32.gmra.mrb[0].mxu0 %v2912
        %v3146 = vpop.f32.mrb[0].mxu0
        %v3147 = vadd.f32 0.0, %v3146
        %v3148 = vpop.f32.mrb[0].mxu0
        %3149 = vmatprep.mubr.f32.mxu0 0.0
        %3150 = vmatmul.mubr.f32.gmra.mrb[0].mxu0 %v2915
        %v3151 = vpop.f32.mrb[0].mxu0
        %v3152 = vadd.f32 0.0, %v3151
        %v3153 = vpop.f32.mrb[0].mxu0
        %3154 = vmatprep.mubr.f32.mxu0 0.0
        %3155 = vmatmul.mubr.f32.gmra.mrb[0].mxu0 %v2918
        %v3156 = vpop.f32.mrb[0].mxu0
        %v3157 = vadd.f32 0.0, %v3156
        %v3158 = vpop.f32.mrb[0].mxu0
        %3159 = vmatprep.mubr.f32.mxu0 0.0
        %3160 = vmatmul.mubr.f32.gmra.mrb[0].mxu0 %v2921
        %v3161 = vpop.f32.mrb[0].mxu0
        %v3162 = vadd.f32 0.0, %v3161
        %v3163 = vpop.f32.mrb[0].mxu0
        %3164 = vmatprep.mubr.f32.mxu0 0.0
        %3165 = vmatmul.mubr.f32.gmra.mrb[0].mxu0 %v2924
        %v3166 = vpop.f32.mrb[0].mxu0
        %v3167 = vadd.f32 0.0, %v3166
        %v3168 = vpop.f32.mrb[0].mxu0
        %3169 = vmatprep.mubr.f32.mxu0 0.0
        %3170 = vmatmul.mubr.f32.gmra.mrb[0].mxu0 %v2927
        %v3171 = vpop.f32.mrb[0].mxu0
        %v3172 = vadd.f32 0.0, %v3171
        %v3173 = vpop.f32.mrb[0].mxu0
        %3174 = vmatprep.mubr.f32.mxu0 0.0
        %3175 = vmatmul.mubr.f32.gmra.mrb[0].mxu0 %v2930
        %v3176 = vpop.f32.mrb[0].mxu0
        %v3177 = vadd.f32 0.0, %v3176
        %v3178 = vpop.f32.mrb[0].mxu0
        %3179 = vdwg.mxu0
        %v3180 = vadd.f32 %v2750, %v3002
        %v3181 = vadd.f32 %v2751, %v3007
        %v3182 = vadd.f32 %v2752, %v3012
        %v3183 = vadd.f32 %v2753, %v3017
        %v3184 = vadd.f32 %v2754, %v3022
        %v3185 = vadd.f32 %v2755, %v3027
        %v3186 = vadd.f32 %v2756, %v3032
        %v3187 = vadd.f32 %v2757, %v3037
        %v3188 = vadd.f32 %v2758, %v3042
        %v3189 = vadd.f32 %v2759, %v3047
        %v3190 = vadd.f32 %v2760, %v3052
        %v3191 = vadd.f32 %v2761, %v3057
        %v3192 = vadd.f32 %v2762, %v3062
        %v3193 = vadd.f32 %v2763, %v3067
        %v3194 = vadd.f32 %v2764, %v3072
        %v3195 = vadd.f32 %v2765, %v3077
        %v3196 = vadd.f32 %v2766, %v3082
        %v3197 = vadd.f32 %v2767, %v3087
        %v3198 = vadd.f32 %v2768, %v3092
        %v3199 = vadd.f32 %v2769, %v3097
        %v3200 = vadd.f32 %v2770, %v3102
        %v3201 = vadd.f32 %v2771, %v3107
        %v3202 = vadd.f32 %v2772, %v3112
        %v3203 = vadd.f32 %v2773, %v3117
        %v3204 = vadd.f32 %v2774, %v3122
        %v3205 = vadd.f32 %v2775, %v3127
        %v3206 = vadd.f32 %v2776, %v3132
        %v3207 = vadd.f32 %v2777, %v3137
        %v3208 = vadd.f32 %v2778, %v3142
        %v3209 = vadd.f32 %v2779, %v3147
        %v3210 = vadd.f32 %v2780, %v3152
        %v3211 = vadd.f32 %v2781, %v3157
        %v3212 = vadd.f32 %v2782, %v3162
        %v3213 = vadd.f32 %v2783, %v3167
        %v3214 = vadd.f32 %v2784, %v3172
        %v3215 = vadd.f32 %v2785, %v3177
        %v3216 = vld [vmem:[%s271 + $0x25] sm:$0xff]
        %v3217 = vld [vmem:[%s271 + $0x2d] sm:$0xff]
        %v3218 = vld [vmem:[%s271 + $0x35] sm:$0xff]
        %v3219 = vld [vmem:[%s271 + $0x3d] sm:$0xff]
        %v3220 = vld [vmem:[%s271 + $0x45] sm:$0xff]
        %v3221 = vld [vmem:[%s271 + $0x4d] sm:$0xff]
        %v3222 = vld [vmem:[%s271 + $0x55] sm:$0xff]
        %v3223 = vld [vmem:[%s271 + $0x5d] sm:$0xff]
        %v3224 = vld [vmem:[%s271 + $0x65] sm:$0xff]
        %v3225 = vld [vmem:[%s271 + $0x6d] sm:$0xff]
        %v3226 = vld [vmem:[%s271 + $0x75] sm:$0xff]
        %v3227 = vld [vmem:[%s271 + $0x7d] sm:$0xff]
        %v3228 = vld [vmem:[%s271 + $0x85] sm:$0xff]
        %v3229 = vld [vmem:[%s271 + $0x8d] sm:$0xff]
        %v3230 = vld [vmem:[%s271 + $0x95] sm:$0xff]
        %v3231 = vld [vmem:[%s271 + $0x9d] sm:$0xff]
        %v3232 = vld [vmem:[%s271 + $0xa5] sm:$0xff]
        %v3233 = vld [vmem:[%s271 + $0xad] sm:$0xff]
        %v3234 = vld [vmem:[%s271 + $0xb5] sm:$0xff]
        %v3235 = vld [vmem:[%s271 + $0xbd] sm:$0xff]
        %v3236 = vld [vmem:[%s271 + $0xc5] sm:$0xff]
        %v3237 = vld [vmem:[%s271 + $0xcd] sm:$0xff]
        %v3238 = vld [vmem:[%s271 + $0xd5] sm:$0xff]
        %v3239 = vld [vmem:[%s271 + $0xdd] sm:$0xff]
        %v3240 = vld [vmem:[%s271 + $0xe5] sm:$0xff]
        %v3241 = vld [vmem:[%s271 + $0xed] sm:$0xff]
        %v3242 = vld [vmem:[%s271 + $0xf5] sm:$0xff]
        %v3243 = vld [vmem:[%s271 + $0xfd] sm:$0xff]
        %v3244 = vld [vmem:[%s271 + $0x105] sm:$0xff]
        %v3245 = vld [vmem:[%s271 + $0x10d] sm:$0xff]
        %v3246 = vld [vmem:[%s271 + $0x115] sm:$0xff]
        %v3247 = vld [vmem:[%s271 + $0x11d] sm:$0xff]
        %v3248 = vld [vmem:[%s271 + $0x125] sm:$0xff]
        %v3249 = vld [vmem:[%s271 + $0x12d] sm:$0xff]
        %v3250 = vld [vmem:[%s271 + $0x135] sm:$0xff]
        %v3251 = vld [vmem:[%s271 + $0x13d] sm:$0xff]
        %s3252 = scalar_lea.vmem %s2, 28
        %v3253 = vld [vmem:[%s3252] sm:$0xf]
        %v3255 = vsel %vm352, %v3216, 0
        %v3258 = vsel %vm352, %v3217, 0
        %v3261 = vsel %vm352, %v3218, 0
        %v3264 = vsel %vm352, %v3219, 0
        %v3267 = vsel %vm352, %v3220, 0
        %v3270 = vsel %vm352, %v3221, 0
        %v3273 = vsel %vm352, %v3222, 0
        %v3276 = vsel %vm352, %v3223, 0
        %v3279 = vsel %vm352, %v3224, 0
        %v3282 = vsel %vm352, %v3225, 0
        %v3285 = vsel %vm352, %v3226, 0
        %v3288 = vsel %vm352, %v3227, 0
        %v3291 = vsel %vm352, %v3228, 0
        %v3294 = vsel %vm352, %v3229, 0
        %v3297 = vsel %vm352, %v3230, 0
        %v3300 = vsel %vm352, %v3231, 0
        %v3303 = vsel %vm352, %v3232, 0
        %v3306 = vsel %vm352, %v3233, 0
        %v3309 = vsel %vm352, %v3234, 0
        %v3312 = vsel %vm352, %v3235, 0
        %v3315 = vsel %vm352, %v3236, 0
        %v3318 = vsel %vm352, %v3237, 0
        %v3321 = vsel %vm352, %v3238, 0
        %v3324 = vsel %vm352, %v3239, 0
        %v3327 = vsel %vm352, %v3240, 0
        %v3330 = vsel %vm352, %v3241, 0
        %v3333 = vsel %vm352, %v3242, 0
        %v3336 = vsel %vm352, %v3243, 0
        %v3339 = vsel %vm352, %v3244, 0
        %v3342 = vsel %vm352, %v3245, 0
        %v3345 = vsel %vm352, %v3246, 0
        %v3348 = vsel %vm352, %v3247, 0
        %v3351 = vsel %vm352, %v3248, 0
        %v3354 = vsel %vm352, %v3249, 0
        %v3357 = vsel %vm352, %v3250, 0
        %v3360 = vsel %vm352, %v3251, 0
        %v3363 = vsel %vm461, %v3253, 0
        %3365 = vmatprep.subr.mxu0 0.0
        %3366 = vmatpush1.msra.mxu0 %v3363
        %3367 = vmatprep.subr.mxu0 0.0
        %3368 = vmatpush1.msra.mxu0 0.0
        %3369 = vmatprep.subr.mxu0 0.0
        %3370 = vmatpush1.msra.mxu0 0.0
        %3371 = vmatprep.subr.mxu0 0.0
        %3372 = vmatpush1.msra.mxu0 0.0
        %3373 = vmatprep.subr.mxu0 0.0
        %3374 = vmatpush1.msra.mxu0 0.0
        %3375 = vmatprep.subr.mxu0 0.0
        %3376 = vmatpush1.msra.mxu0 0.0
        %3377 = vmatprep.subr.mxu0 0.0
        %3378 = vmatpush1.msra.mxu0 0.0
        %3379 = vmatprep.subr.mxu0 0.0
        %3380 = vmatpush1.msra.mxu0 0.0
        %3381 = vmatprep.subr.mxu0 0.0
        %3382 = vmatpush1.msra.mxu0 0.0
        %3383 = vmatprep.subr.mxu0 0.0
        %3384 = vmatpush1.msra.mxu0 0.0
        %3385 = vmatprep.subr.mxu0 0.0
        %3386 = vmatpush1.msra.mxu0 0.0
        %3387 = vmatprep.subr.mxu0 0.0
        %3388 = vmatpush1.msra.mxu0 0.0
        %3389 = vmatprep.subr.mxu0 0.0
        %3390 = vmatpush1.msra.mxu0 0.0
        %3391 = vmatprep.subr.mxu0 0.0
        %3392 = vmatpush1.msra.mxu0 0.0
        %3393 = vmatprep.subr.mxu0 0.0
        %3394 = vmatpush1.msra.mxu0 0.0
        %3395 = vmatprep.subr.mxu0 0.0
        %3396 = vmatpush1.msra.mxu0 0.0
        %3397 = vmatprep.subr.mxu0 0.0
        %3398 = vmatpush1.msra.mxu0 0.0
        %3399 = vmatprep.subr.mxu0 0.0
        %3400 = vmatpush1.msra.mxu0 0.0
        %3401 = vmatprep.subr.mxu0 0.0
        %3402 = vmatpush1.msra.mxu0 0.0
        %3403 = vmatprep.subr.mxu0 0.0
        %3404 = vmatpush1.msra.mxu0 0.0
        %3405 = vmatprep.subr.mxu0 0.0
        %3406 = vmatpush1.msra.mxu0 0.0
        %3407 = vmatprep.subr.mxu0 0.0
        %3408 = vmatpush1.msra.mxu0 0.0
        %3409 = vmatprep.subr.mxu0 0.0
        %3410 = vmatpush1.msra.mxu0 0.0
        %3411 = vmatprep.subr.mxu0 0.0
        %3412 = vmatpush1.msra.mxu0 0.0
        %3413 = vmatprep.subr.mxu0 0.0
        %3414 = vmatpush1.msra.mxu0 0.0
        %3415 = vmatprep.subr.mxu0 0.0
        %3416 = vmatpush1.msra.mxu0 0.0
        %3417 = vmatprep.subr.mxu0 0.0
        %3418 = vmatpush1.msra.mxu0 0.0
        %3419 = vmatprep.subr.mxu0 0.0
        %3420 = vmatpush1.msra.mxu0 0.0
        %3421 = vmatprep.subr.mxu0 0.0
        %3422 = vmatpush1.msra.mxu0 0.0
        %3423 = vmatprep.subr.mxu0 0.0
        %3424 = vmatpush1.msra.mxu0 0.0
        %3425 = vmatprep.subr.mxu0 0.0
        %3426 = vmatpush1.msra.mxu0 0.0
        %3427 = vmatprep.subr.mxu0 0.0
        %3428 = vmatpush1.msra.mxu0 0.0
        %3429 = vmatprep.mubr.f32.mxu0 0.0
        %3430 = vmatmul.mubr.f32.gmra.mrb[0].mxu0 %v3255
        %v3431 = vpop.f32.mrb[0].mxu0
        %v3432 = vadd.f32 0.0, %v3431
        %v3433 = vpop.f32.mrb[0].mxu0
        %3434 = vmatprep.mubr.f32.mxu0 0.0
        %3435 = vmatmul.mubr.f32.gmra.mrb[0].mxu0 %v3258
        %v3436 = vpop.f32.mrb[0].mxu0
        %v3437 = vadd.f32 0.0, %v3436
        %v3438 = vpop.f32.mrb[0].mxu0
        %3439 = vmatprep.mubr.f32.mxu0 0.0
        %3440 = vmatmul.mubr.f32.gmra.mrb[0].mxu0 %v3261
        %v3441 = vpop.f32.mrb[0].mxu0
        %v3442 = vadd.f32 0.0, %v3441
        %v3443 = vpop.f32.mrb[0].mxu0
        %3444 = vmatprep.mubr.f32.mxu0 0.0
        %3445 = vmatmul.mubr.f32.gmra.mrb[0].mxu0 %v3264
        %v3446 = vpop.f32.mrb[0].mxu0
        %v3447 = vadd.f32 0.0, %v3446
        %v3448 = vpop.f32.mrb[0].mxu0
        %3449 = vmatprep.mubr.f32.mxu0 0.0
        %3450 = vmatmul.mubr.f32.gmra.mrb[0].mxu0 %v3267
        %v3451 = vpop.f32.mrb[0].mxu0
        %v3452 = vadd.f32 0.0, %v3451
        %v3453 = vpop.f32.mrb[0].mxu0
        %3454 = vmatprep.mubr.f32.mxu0 0.0
        %3455 = vmatmul.mubr.f32.gmra.mrb[0].mxu0 %v3270
        %v3456 = vpop.f32.mrb[0].mxu0
        %v3457 = vadd.f32 0.0, %v3456
        %v3458 = vpop.f32.mrb[0].mxu0
        %3459 = vmatprep.mubr.f32.mxu0 0.0
        %3460 = vmatmul.mubr.f32.gmra.mrb[0].mxu0 %v3273
        %v3461 = vpop.f32.mrb[0].mxu0
        %v3462 = vadd.f32 0.0, %v3461
        %v3463 = vpop.f32.mrb[0].mxu0
        %3464 = vmatprep.mubr.f32.mxu0 0.0
        %3465 = vmatmul.mubr.f32.gmra.mrb[0].mxu0 %v3276
        %v3466 = vpop.f32.mrb[0].mxu0
        %v3467 = vadd.f32 0.0, %v3466
        %v3468 = vpop.f32.mrb[0].mxu0
        %3469 = vmatprep.mubr.f32.mxu0 0.0
        %3470 = vmatmul.mubr.f32.gmra.mrb[0].mxu0 %v3279
        %v3471 = vpop.f32.mrb[0].mxu0
        %v3472 = vadd.f32 0.0, %v3471
        %v3473 = vpop.f32.mrb[0].mxu0
        %3474 = vmatprep.mubr.f32.mxu0 0.0
        %3475 = vmatmul.mubr.f32.gmra.mrb[0].mxu0 %v3282
        %v3476 = vpop.f32.mrb[0].mxu0
        %v3477 = vadd.f32 0.0, %v3476
        %v3478 = vpop.f32.mrb[0].mxu0
        %3479 = vmatprep.mubr.f32.mxu0 0.0
        %3480 = vmatmul.mubr.f32.gmra.mrb[0].mxu0 %v3285
        %v3481 = vpop.f32.mrb[0].mxu0
        %v3482 = vadd.f32 0.0, %v3481
        %v3483 = vpop.f32.mrb[0].mxu0
        %3484 = vmatprep.mubr.f32.mxu0 0.0
        %3485 = vmatmul.mubr.f32.gmra.mrb[0].mxu0 %v3288
        %v3486 = vpop.f32.mrb[0].mxu0
        %v3487 = vadd.f32 0.0, %v3486
        %v3488 = vpop.f32.mrb[0].mxu0
        %3489 = vmatprep.mubr.f32.mxu0 0.0
        %3490 = vmatmul.mubr.f32.gmra.mrb[0].mxu0 %v3291
        %v3491 = vpop.f32.mrb[0].mxu0
        %v3492 = vadd.f32 0.0, %v3491
        %v3493 = vpop.f32.mrb[0].mxu0
        %3494 = vmatprep.mubr.f32.mxu0 0.0
        %3495 = vmatmul.mubr.f32.gmra.mrb[0].mxu0 %v3294
        %v3496 = vpop.f32.mrb[0].mxu0
        %v3497 = vadd.f32 0.0, %v3496
        %v3498 = vpop.f32.mrb[0].mxu0
        %3499 = vmatprep.mubr.f32.mxu0 0.0
        %3500 = vmatmul.mubr.f32.gmra.mrb[0].mxu0 %v3297
        %v3501 = vpop.f32.mrb[0].mxu0
        %v3502 = vadd.f32 0.0, %v3501
        %v3503 = vpop.f32.mrb[0].mxu0
        %3504 = vmatprep.mubr.f32.mxu0 0.0
        %3505 = vmatmul.mubr.f32.gmra.mrb[0].mxu0 %v3300
        %v3506 = vpop.f32.mrb[0].mxu0
        %v3507 = vadd.f32 0.0, %v3506
        %v3508 = vpop.f32.mrb[0].mxu0
        %3509 = vmatprep.mubr.f32.mxu0 0.0
        %3510 = vmatmul.mubr.f32.gmra.mrb[0].mxu0 %v3303
        %v3511 = vpop.f32.mrb[0].mxu0
        %v3512 = vadd.f32 0.0, %v3511
        %v3513 = vpop.f32.mrb[0].mxu0
        %3514 = vmatprep.mubr.f32.mxu0 0.0
        %3515 = vmatmul.mubr.f32.gmra.mrb[0].mxu0 %v3306
        %v3516 = vpop.f32.mrb[0].mxu0
        %v3517 = vadd.f32 0.0, %v3516
        %v3518 = vpop.f32.mrb[0].mxu0
        %3519 = vmatprep.mubr.f32.mxu0 0.0
        %3520 = vmatmul.mubr.f32.gmra.mrb[0].mxu0 %v3309
        %v3521 = vpop.f32.mrb[0].mxu0
        %v3522 = vadd.f32 0.0, %v3521
        %v3523 = vpop.f32.mrb[0].mxu0
        %3524 = vmatprep.mubr.f32.mxu0 0.0
        %3525 = vmatmul.mubr.f32.gmra.mrb[0].mxu0 %v3312
        %v3526 = vpop.f32.mrb[0].mxu0
        %v3527 = vadd.f32 0.0, %v3526
        %v3528 = vpop.f32.mrb[0].mxu0
        %3529 = vmatprep.mubr.f32.mxu0 0.0
        %3530 = vmatmul.mubr.f32.gmra.mrb[0].mxu0 %v3315
        %v3531 = vpop.f32.mrb[0].mxu0
        %v3532 = vadd.f32 0.0, %v3531
        %v3533 = vpop.f32.mrb[0].mxu0
        %3534 = vmatprep.mubr.f32.mxu0 0.0
        %3535 = vmatmul.mubr.f32.gmra.mrb[0].mxu0 %v3318
        %v3536 = vpop.f32.mrb[0].mxu0
        %v3537 = vadd.f32 0.0, %v3536
        %v3538 = vpop.f32.mrb[0].mxu0
        %3539 = vmatprep.mubr.f32.mxu0 0.0
        %3540 = vmatmul.mubr.f32.gmra.mrb[0].mxu0 %v3321
        %v3541 = vpop.f32.mrb[0].mxu0
        %v3542 = vadd.f32 0.0, %v3541
        %v3543 = vpop.f32.mrb[0].mxu0
        %3544 = vmatprep.mubr.f32.mxu0 0.0
        %3545 = vmatmul.mubr.f32.gmra.mrb[0].mxu0 %v3324
        %v3546 = vpop.f32.mrb[0].mxu0
        %v3547 = vadd.f32 0.0, %v3546
        %v3548 = vpop.f32.mrb[0].mxu0
        %3549 = vmatprep.mubr.f32.mxu0 0.0
        %3550 = vmatmul.mubr.f32.gmra.mrb[0].mxu0 %v3327
        %v3551 = vpop.f32.mrb[0].mxu0
        %v3552 = vadd.f32 0.0, %v3551
        %v3553 = vpop.f32.mrb[0].mxu0
        %3554 = vmatprep.mubr.f32.mxu0 0.0
        %3555 = vmatmul.mubr.f32.gmra.mrb[0].mxu0 %v3330
        %v3556 = vpop.f32.mrb[0].mxu0
        %v3557 = vadd.f32 0.0, %v3556
        %v3558 = vpop.f32.mrb[0].mxu0
        %3559 = vmatprep.mubr.f32.mxu0 0.0
        %3560 = vmatmul.mubr.f32.gmra.mrb[0].mxu0 %v3333
        %v3561 = vpop.f32.mrb[0].mxu0
        %v3562 = vadd.f32 0.0, %v3561
        %v3563 = vpop.f32.mrb[0].mxu0
        %3564 = vmatprep.mubr.f32.mxu0 0.0
        %3565 = vmatmul.mubr.f32.gmra.mrb[0].mxu0 %v3336
        %v3566 = vpop.f32.mrb[0].mxu0
        %v3567 = vadd.f32 0.0, %v3566
        %v3568 = vpop.f32.mrb[0].mxu0
        %3569 = vmatprep.mubr.f32.mxu0 0.0
        %3570 = vmatmul.mubr.f32.gmra.mrb[0].mxu0 %v3339
        %v3571 = vpop.f32.mrb[0].mxu0
        %v3572 = vadd.f32 0.0, %v3571
        %v3573 = vpop.f32.mrb[0].mxu0
        %3574 = vmatprep.mubr.f32.mxu0 0.0
        %3575 = vmatmul.mubr.f32.gmra.mrb[0].mxu0 %v3342
        %v3576 = vpop.f32.mrb[0].mxu0
        %v3577 = vadd.f32 0.0, %v3576
        %v3578 = vpop.f32.mrb[0].mxu0
        %3579 = vmatprep.mubr.f32.mxu0 0.0
        %3580 = vmatmul.mubr.f32.gmra.mrb[0].mxu0 %v3345
        %v3581 = vpop.f32.mrb[0].mxu0
        %v3582 = vadd.f32 0.0, %v3581
        %v3583 = vpop.f32.mrb[0].mxu0
        %3584 = vmatprep.mubr.f32.mxu0 0.0
        %3585 = vmatmul.mubr.f32.gmra.mrb[0].mxu0 %v3348
        %v3586 = vpop.f32.mrb[0].mxu0
        %v3587 = vadd.f32 0.0, %v3586
        %v3588 = vpop.f32.mrb[0].mxu0
        %3589 = vmatprep.mubr.f32.mxu0 0.0
        %3590 = vmatmul.mubr.f32.gmra.mrb[0].mxu0 %v3351
        %v3591 = vpop.f32.mrb[0].mxu0
        %v3592 = vadd.f32 0.0, %v3591
        %v3593 = vpop.f32.mrb[0].mxu0
        %3594 = vmatprep.mubr.f32.mxu0 0.0
        %3595 = vmatmul.mubr.f32.gmra.mrb[0].mxu0 %v3354
        %v3596 = vpop.f32.mrb[0].mxu0
        %v3597 = vadd.f32 0.0, %v3596
        %v3598 = vpop.f32.mrb[0].mxu0
        %3599 = vmatprep.mubr.f32.mxu0 0.0
        %3600 = vmatmul.mubr.f32.gmra.mrb[0].mxu0 %v3357
        %v3601 = vpop.f32.mrb[0].mxu0
        %v3602 = vadd.f32 0.0, %v3601
        %v3603 = vpop.f32.mrb[0].mxu0
        %3604 = vmatprep.mubr.f32.mxu0 0.0
        %3605 = vmatmul.mubr.f32.gmra.mrb[0].mxu0 %v3360
        %v3606 = vpop.f32.mrb[0].mxu0
        %v3607 = vadd.f32 0.0, %v3606
        %v3608 = vpop.f32.mrb[0].mxu0
        %3609 = vdwg.mxu0
        %v3610 = vadd.f32 %v3180, %v3432
        %v3611 = vadd.f32 %v3181, %v3437
        %v3612 = vadd.f32 %v3182, %v3442
        %v3613 = vadd.f32 %v3183, %v3447
        %v3614 = vadd.f32 %v3184, %v3452
        %v3615 = vadd.f32 %v3185, %v3457
        %v3616 = vadd.f32 %v3186, %v3462
        %v3617 = vadd.f32 %v3187, %v3467
        %v3618 = vadd.f32 %v3188, %v3472
        %v3619 = vadd.f32 %v3189, %v3477
        %v3620 = vadd.f32 %v3190, %v3482
        %v3621 = vadd.f32 %v3191, %v3487
        %v3622 = vadd.f32 %v3192, %v3492
        %v3623 = vadd.f32 %v3193, %v3497
        %v3624 = vadd.f32 %v3194, %v3502
        %v3625 = vadd.f32 %v3195, %v3507
        %v3626 = vadd.f32 %v3196, %v3512
        %v3627 = vadd.f32 %v3197, %v3517
        %v3628 = vadd.f32 %v3198, %v3522
        %v3629 = vadd.f32 %v3199, %v3527
        %v3630 = vadd.f32 %v3200, %v3532
        %v3631 = vadd.f32 %v3201, %v3537
        %v3632 = vadd.f32 %v3202, %v3542
        %v3633 = vadd.f32 %v3203, %v3547
        %v3634 = vadd.f32 %v3204, %v3552
        %v3635 = vadd.f32 %v3205, %v3557
        %v3636 = vadd.f32 %v3206, %v3562
        %v3637 = vadd.f32 %v3207, %v3567
        %v3638 = vadd.f32 %v3208, %v3572
        %v3639 = vadd.f32 %v3209, %v3577
        %v3640 = vadd.f32 %v3210, %v3582
        %v3641 = vadd.f32 %v3211, %v3587
        %v3642 = vadd.f32 %v3212, %v3592
        %v3643 = vadd.f32 %v3213, %v3597
        %v3644 = vadd.f32 %v3214, %v3602
        %v3645 = vadd.f32 %v3215, %v3607
        %v3646 = vld [vmem:[%s271 + $0x26] sm:$0xff]
        %v3647 = vld [vmem:[%s271 + $0x2e] sm:$0xff]
        %v3648 = vld [vmem:[%s271 + $0x36] sm:$0xff]
        %v3649 = vld [vmem:[%s271 + $0x3e] sm:$0xff]
        %v3650 = vld [vmem:[%s271 + $0x46] sm:$0xff]
        %v3651 = vld [vmem:[%s271 + $0x4e] sm:$0xff]
        %v3652 = vld [vmem:[%s271 + $0x56] sm:$0xff]
        %v3653 = vld [vmem:[%s271 + $0x5e] sm:$0xff]
        %v3654 = vld [vmem:[%s271 + $0x66] sm:$0xff]
        %v3655 = vld [vmem:[%s271 + $0x6e] sm:$0xff]
        %v3656 = vld [vmem:[%s271 + $0x76] sm:$0xff]
        %v3657 = vld [vmem:[%s271 + $0x7e] sm:$0xff]
        %v3658 = vld [vmem:[%s271 + $0x86] sm:$0xff]
        %v3659 = vld [vmem:[%s271 + $0x8e] sm:$0xff]
        %v3660 = vld [vmem:[%s271 + $0x96] sm:$0xff]
        %v3661 = vld [vmem:[%s271 + $0x9e] sm:$0xff]
        %v3662 = vld [vmem:[%s271 + $0xa6] sm:$0xff]
        %v3663 = vld [vmem:[%s271 + $0xae] sm:$0xff]
        %v3664 = vld [vmem:[%s271 + $0xb6] sm:$0xff]
        %v3665 = vld [vmem:[%s271 + $0xbe] sm:$0xff]
        %v3666 = vld [vmem:[%s271 + $0xc6] sm:$0xff]
        %v3667 = vld [vmem:[%s271 + $0xce] sm:$0xff]
        %v3668 = vld [vmem:[%s271 + $0xd6] sm:$0xff]
        %v3669 = vld [vmem:[%s271 + $0xde] sm:$0xff]
        %v3670 = vld [vmem:[%s271 + $0xe6] sm:$0xff]
        %v3671 = vld [vmem:[%s271 + $0xee] sm:$0xff]
        %v3672 = vld [vmem:[%s271 + $0xf6] sm:$0xff]
        %v3673 = vld [vmem:[%s271 + $0xfe] sm:$0xff]
        %v3674 = vld [vmem:[%s271 + $0x106] sm:$0xff]
        %v3675 = vld [vmem:[%s271 + $0x10e] sm:$0xff]
        %v3676 = vld [vmem:[%s271 + $0x116] sm:$0xff]
        %v3677 = vld [vmem:[%s271 + $0x11e] sm:$0xff]
        %v3678 = vld [vmem:[%s271 + $0x126] sm:$0xff]
        %v3679 = vld [vmem:[%s271 + $0x12e] sm:$0xff]
        %v3680 = vld [vmem:[%s271 + $0x136] sm:$0xff]
        %v3681 = vld [vmem:[%s271 + $0x13e] sm:$0xff]
        %s3682 = scalar_lea.vmem %s2, 32
        %v3683 = vld [vmem:[%s3682] sm:$0xf]
        %v3685 = vsel %vm352, %v3646, 0
        %v3688 = vsel %vm352, %v3647, 0
        %v3691 = vsel %vm352, %v3648, 0
        %v3694 = vsel %vm352, %v3649, 0
        %v3697 = vsel %vm352, %v3650, 0
        %v3700 = vsel %vm352, %v3651, 0
        %v3703 = vsel %vm352, %v3652, 0
        %v3706 = vsel %vm352, %v3653, 0
        %v3709 = vsel %vm352, %v3654, 0
        %v3712 = vsel %vm352, %v3655, 0
        %v3715 = vsel %vm352, %v3656, 0
        %v3718 = vsel %vm352, %v3657, 0
        %v3721 = vsel %vm352, %v3658, 0
        %v3724 = vsel %vm352, %v3659, 0
        %v3727 = vsel %vm352, %v3660, 0
        %v3730 = vsel %vm352, %v3661, 0
        %v3733 = vsel %vm352, %v3662, 0
        %v3736 = vsel %vm352, %v3663, 0
        %v3739 = vsel %vm352, %v3664, 0
        %v3742 = vsel %vm352, %v3665, 0
        %v3745 = vsel %vm352, %v3666, 0
        %v3748 = vsel %vm352, %v3667, 0
        %v3751 = vsel %vm352, %v3668, 0
        %v3754 = vsel %vm352, %v3669, 0
        %v3757 = vsel %vm352, %v3670, 0
        %v3760 = vsel %vm352, %v3671, 0
        %v3763 = vsel %vm352, %v3672, 0
        %v3766 = vsel %vm352, %v3673, 0
        %v3769 = vsel %vm352, %v3674, 0
        %v3772 = vsel %vm352, %v3675, 0
        %v3775 = vsel %vm352, %v3676, 0
        %v3778 = vsel %vm352, %v3677, 0
        %v3781 = vsel %vm352, %v3678, 0
        %v3784 = vsel %vm352, %v3679, 0
        %v3787 = vsel %vm352, %v3680, 0
        %v3790 = vsel %vm352, %v3681, 0
        %v3793 = vsel %vm461, %v3683, 0
        %3795 = vmatprep.subr.mxu0 0.0
        %3796 = vmatpush1.msra.mxu0 %v3793
        %3797 = vmatprep.subr.mxu0 0.0
        %3798 = vmatpush1.msra.mxu0 0.0
        %3799 = vmatprep.subr.mxu0 0.0
        %3800 = vmatpush1.msra.mxu0 0.0
        %3801 = vmatprep.subr.mxu0 0.0
        %3802 = vmatpush1.msra.mxu0 0.0
        %3803 = vmatprep.subr.mxu0 0.0
        %3804 = vmatpush1.msra.mxu0 0.0
        %3805 = vmatprep.subr.mxu0 0.0
        %3806 = vmatpush1.msra.mxu0 0.0
        %3807 = vmatprep.subr.mxu0 0.0
        %3808 = vmatpush1.msra.mxu0 0.0
        %3809 = vmatprep.subr.mxu0 0.0
        %3810 = vmatpush1.msra.mxu0 0.0
        %3811 = vmatprep.subr.mxu0 0.0
        %3812 = vmatpush1.msra.mxu0 0.0
        %3813 = vmatprep.subr.mxu0 0.0
        %3814 = vmatpush1.msra.mxu0 0.0
        %3815 = vmatprep.subr.mxu0 0.0
        %3816 = vmatpush1.msra.mxu0 0.0
        %3817 = vmatprep.subr.mxu0 0.0
        %3818 = vmatpush1.msra.mxu0 0.0
        %3819 = vmatprep.subr.mxu0 0.0
        %3820 = vmatpush1.msra.mxu0 0.0
        %3821 = vmatprep.subr.mxu0 0.0
        %3822 = vmatpush1.msra.mxu0 0.0
        %3823 = vmatprep.subr.mxu0 0.0
        %3824 = vmatpush1.msra.mxu0 0.0
        %3825 = vmatprep.subr.mxu0 0.0
        %3826 = vmatpush1.msra.mxu0 0.0
        %3827 = vmatprep.subr.mxu0 0.0
        %3828 = vmatpush1.msra.mxu0 0.0
        %3829 = vmatprep.subr.mxu0 0.0
        %3830 = vmatpush1.msra.mxu0 0.0
        %3831 = vmatprep.subr.mxu0 0.0
        %3832 = vmatpush1.msra.mxu0 0.0
        %3833 = vmatprep.subr.mxu0 0.0
        %3834 = vmatpush1.msra.mxu0 0.0
        %3835 = vmatprep.subr.mxu0 0.0
        %3836 = vmatpush1.msra.mxu0 0.0
        %3837 = vmatprep.subr.mxu0 0.0
        %3838 = vmatpush1.msra.mxu0 0.0
        %3839 = vmatprep.subr.mxu0 0.0
        %3840 = vmatpush1.msra.mxu0 0.0
        %3841 = vmatprep.subr.mxu0 0.0
        %3842 = vmatpush1.msra.mxu0 0.0
        %3843 = vmatprep.subr.mxu0 0.0
        %3844 = vmatpush1.msra.mxu0 0.0
        %3845 = vmatprep.subr.mxu0 0.0
        %3846 = vmatpush1.msra.mxu0 0.0
        %3847 = vmatprep.subr.mxu0 0.0
        %3848 = vmatpush1.msra.mxu0 0.0
        %3849 = vmatprep.subr.mxu0 0.0
        %3850 = vmatpush1.msra.mxu0 0.0
        %3851 = vmatprep.subr.mxu0 0.0
        %3852 = vmatpush1.msra.mxu0 0.0
        %3853 = vmatprep.subr.mxu0 0.0
        %3854 = vmatpush1.msra.mxu0 0.0
        %3855 = vmatprep.subr.mxu0 0.0
        %3856 = vmatpush1.msra.mxu0 0.0
        %3857 = vmatprep.subr.mxu0 0.0
        %3858 = vmatpush1.msra.mxu0 0.0
        %3859 = vmatprep.mubr.f32.mxu0 0.0
        %3860 = vmatmul.mubr.f32.gmra.mrb[0].mxu0 %v3685
        %v3861 = vpop.f32.mrb[0].mxu0
        %v3862 = vadd.f32 0.0, %v3861
        %v3863 = vpop.f32.mrb[0].mxu0
        %3864 = vmatprep.mubr.f32.mxu0 0.0
        %3865 = vmatmul.mubr.f32.gmra.mrb[0].mxu0 %v3688
        %v3866 = vpop.f32.mrb[0].mxu0
        %v3867 = vadd.f32 0.0, %v3866
        %v3868 = vpop.f32.mrb[0].mxu0
        %3869 = vmatprep.mubr.f32.mxu0 0.0
        %3870 = vmatmul.mubr.f32.gmra.mrb[0].mxu0 %v3691
        %v3871 = vpop.f32.mrb[0].mxu0
        %v3872 = vadd.f32 0.0, %v3871
        %v3873 = vpop.f32.mrb[0].mxu0
        %3874 = vmatprep.mubr.f32.mxu0 0.0
        %3875 = vmatmul.mubr.f32.gmra.mrb[0].mxu0 %v3694
        %v3876 = vpop.f32.mrb[0].mxu0
        %v3877 = vadd.f32 0.0, %v3876
        %v3878 = vpop.f32.mrb[0].mxu0
        %3879 = vmatprep.mubr.f32.mxu0 0.0
        %3880 = vmatmul.mubr.f32.gmra.mrb[0].mxu0 %v3697
        %v3881 = vpop.f32.mrb[0].mxu0
        %v3882 = vadd.f32 0.0, %v3881
        %v3883 = vpop.f32.mrb[0].mxu0
        %3884 = vmatprep.mubr.f32.mxu0 0.0
        %3885 = vmatmul.mubr.f32.gmra.mrb[0].mxu0 %v3700
        %v3886 = vpop.f32.mrb[0].mxu0
        %v3887 = vadd.f32 0.0, %v3886
        %v3888 = vpop.f32.mrb[0].mxu0
        %3889 = vmatprep.mubr.f32.mxu0 0.0
        %3890 = vmatmul.mubr.f32.gmra.mrb[0].mxu0 %v3703
        %v3891 = vpop.f32.mrb[0].mxu0
        %v3892 = vadd.f32 0.0, %v3891
        %v3893 = vpop.f32.mrb[0].mxu0
        %3894 = vmatprep.mubr.f32.mxu0 0.0
        %3895 = vmatmul.mubr.f32.gmra.mrb[0].mxu0 %v3706
        %v3896 = vpop.f32.mrb[0].mxu0
        %v3897 = vadd.f32 0.0, %v3896
        %v3898 = vpop.f32.mrb[0].mxu0
        %3899 = vmatprep.mubr.f32.mxu0 0.0
        %3900 = vmatmul.mubr.f32.gmra.mrb[0].mxu0 %v3709
        %v3901 = vpop.f32.mrb[0].mxu0
        %v3902 = vadd.f32 0.0, %v3901
        %v3903 = vpop.f32.mrb[0].mxu0
        %3904 = vmatprep.mubr.f32.mxu0 0.0
        %3905 = vmatmul.mubr.f32.gmra.mrb[0].mxu0 %v3712
        %v3906 = vpop.f32.mrb[0].mxu0
        %v3907 = vadd.f32 0.0, %v3906
        %v3908 = vpop.f32.mrb[0].mxu0
        %3909 = vmatprep.mubr.f32.mxu0 0.0
        %3910 = vmatmul.mubr.f32.gmra.mrb[0].mxu0 %v3715
        %v3911 = vpop.f32.mrb[0].mxu0
        %v3912 = vadd.f32 0.0, %v3911
        %v3913 = vpop.f32.mrb[0].mxu0
        %3914 = vmatprep.mubr.f32.mxu0 0.0
        %3915 = vmatmul.mubr.f32.gmra.mrb[0].mxu0 %v3718
        %v3916 = vpop.f32.mrb[0].mxu0
        %v3917 = vadd.f32 0.0, %v3916
        %v3918 = vpop.f32.mrb[0].mxu0
        %3919 = vmatprep.mubr.f32.mxu0 0.0
        %3920 = vmatmul.mubr.f32.gmra.mrb[0].mxu0 %v3721
        %v3921 = vpop.f32.mrb[0].mxu0
        %v3922 = vadd.f32 0.0, %v3921
        %v3923 = vpop.f32.mrb[0].mxu0
        %3924 = vmatprep.mubr.f32.mxu0 0.0
        %3925 = vmatmul.mubr.f32.gmra.mrb[0].mxu0 %v3724
        %v3926 = vpop.f32.mrb[0].mxu0
        %v3927 = vadd.f32 0.0, %v3926
        %v3928 = vpop.f32.mrb[0].mxu0
        %3929 = vmatprep.mubr.f32.mxu0 0.0
        %3930 = vmatmul.mubr.f32.gmra.mrb[0].mxu0 %v3727
        %v3931 = vpop.f32.mrb[0].mxu0
        %v3932 = vadd.f32 0.0, %v3931
        %v3933 = vpop.f32.mrb[0].mxu0
        %3934 = vmatprep.mubr.f32.mxu0 0.0
        %3935 = vmatmul.mubr.f32.gmra.mrb[0].mxu0 %v3730
        %v3936 = vpop.f32.mrb[0].mxu0
        %v3937 = vadd.f32 0.0, %v3936
        %v3938 = vpop.f32.mrb[0].mxu0
        %3939 = vmatprep.mubr.f32.mxu0 0.0
        %3940 = vmatmul.mubr.f32.gmra.mrb[0].mxu0 %v3733
        %v3941 = vpop.f32.mrb[0].mxu0
        %v3942 = vadd.f32 0.0, %v3941
        %v3943 = vpop.f32.mrb[0].mxu0
        %3944 = vmatprep.mubr.f32.mxu0 0.0
        %3945 = vmatmul.mubr.f32.gmra.mrb[0].mxu0 %v3736
        %v3946 = vpop.f32.mrb[0].mxu0
        %v3947 = vadd.f32 0.0, %v3946
        %v3948 = vpop.f32.mrb[0].mxu0
        %3949 = vmatprep.mubr.f32.mxu0 0.0
        %3950 = vmatmul.mubr.f32.gmra.mrb[0].mxu0 %v3739
        %v3951 = vpop.f32.mrb[0].mxu0
        %v3952 = vadd.f32 0.0, %v3951
        %v3953 = vpop.f32.mrb[0].mxu0
        %3954 = vmatprep.mubr.f32.mxu0 0.0
        %3955 = vmatmul.mubr.f32.gmra.mrb[0].mxu0 %v3742
        %v3956 = vpop.f32.mrb[0].mxu0
        %v3957 = vadd.f32 0.0, %v3956
        %v3958 = vpop.f32.mrb[0].mxu0
        %3959 = vmatprep.mubr.f32.mxu0 0.0
        %3960 = vmatmul.mubr.f32.gmra.mrb[0].mxu0 %v3745
        %v3961 = vpop.f32.mrb[0].mxu0
        %v3962 = vadd.f32 0.0, %v3961
        %v3963 = vpop.f32.mrb[0].mxu0
        %3964 = vmatprep.mubr.f32.mxu0 0.0
        %3965 = vmatmul.mubr.f32.gmra.mrb[0].mxu0 %v3748
        %v3966 = vpop.f32.mrb[0].mxu0
        %v3967 = vadd.f32 0.0, %v3966
        %v3968 = vpop.f32.mrb[0].mxu0
        %3969 = vmatprep.mubr.f32.mxu0 0.0
        %3970 = vmatmul.mubr.f32.gmra.mrb[0].mxu0 %v3751
        %v3971 = vpop.f32.mrb[0].mxu0
        %v3972 = vadd.f32 0.0, %v3971
        %v3973 = vpop.f32.mrb[0].mxu0
        %3974 = vmatprep.mubr.f32.mxu0 0.0
        %3975 = vmatmul.mubr.f32.gmra.mrb[0].mxu0 %v3754
        %v3976 = vpop.f32.mrb[0].mxu0
        %v3977 = vadd.f32 0.0, %v3976
        %v3978 = vpop.f32.mrb[0].mxu0
        %3979 = vmatprep.mubr.f32.mxu0 0.0
        %3980 = vmatmul.mubr.f32.gmra.mrb[0].mxu0 %v3757
        %v3981 = vpop.f32.mrb[0].mxu0
        %v3982 = vadd.f32 0.0, %v3981
        %v3983 = vpop.f32.mrb[0].mxu0
        %3984 = vmatprep.mubr.f32.mxu0 0.0
        %3985 = vmatmul.mubr.f32.gmra.mrb[0].mxu0 %v3760
        %v3986 = vpop.f32.mrb[0].mxu0
        %v3987 = vadd.f32 0.0, %v3986
        %v3988 = vpop.f32.mrb[0].mxu0
        %3989 = vmatprep.mubr.f32.mxu0 0.0
        %3990 = vmatmul.mubr.f32.gmra.mrb[0].mxu0 %v3763
        %v3991 = vpop.f32.mrb[0].mxu0
        %v3992 = vadd.f32 0.0, %v3991
        %v3993 = vpop.f32.mrb[0].mxu0
        %3994 = vmatprep.mubr.f32.mxu0 0.0
        %3995 = vmatmul.mubr.f32.gmra.mrb[0].mxu0 %v3766
        %v3996 = vpop.f32.mrb[0].mxu0
        %v3997 = vadd.f32 0.0, %v3996
        %v3998 = vpop.f32.mrb[0].mxu0
        %3999 = vmatprep.mubr.f32.mxu0 0.0
        %4000 = vmatmul.mubr.f32.gmra.mrb[0].mxu0 %v3769
        %v4001 = vpop.f32.mrb[0].mxu0
        %v4002 = vadd.f32 0.0, %v4001
        %v4003 = vpop.f32.mrb[0].mxu0
        %4004 = vmatprep.mubr.f32.mxu0 0.0
        %4005 = vmatmul.mubr.f32.gmra.mrb[0].mxu0 %v3772
        %v4006 = vpop.f32.mrb[0].mxu0
        %v4007 = vadd.f32 0.0, %v4006
        %v4008 = vpop.f32.mrb[0].mxu0
        %4009 = vmatprep.mubr.f32.mxu0 0.0
        %4010 = vmatmul.mubr.f32.gmra.mrb[0].mxu0 %v3775
        %v4011 = vpop.f32.mrb[0].mxu0
        %v4012 = vadd.f32 0.0, %v4011
        %v4013 = vpop.f32.mrb[0].mxu0
        %4014 = vmatprep.mubr.f32.mxu0 0.0
        %4015 = vmatmul.mubr.f32.gmra.mrb[0].mxu0 %v3778
        %v4016 = vpop.f32.mrb[0].mxu0
        %v4017 = vadd.f32 0.0, %v4016
        %v4018 = vpop.f32.mrb[0].mxu0
        %4019 = vmatprep.mubr.f32.mxu0 0.0
        %4020 = vmatmul.mubr.f32.gmra.mrb[0].mxu0 %v3781
        %v4021 = vpop.f32.mrb[0].mxu0
        %v4022 = vadd.f32 0.0, %v4021
        %v4023 = vpop.f32.mrb[0].mxu0
        %4024 = vmatprep.mubr.f32.mxu0 0.0
        %4025 = vmatmul.mubr.f32.gmra.mrb[0].mxu0 %v3784
        %v4026 = vpop.f32.mrb[0].mxu0
        %v4027 = vadd.f32 0.0, %v4026
        %v4028 = vpop.f32.mrb[0].mxu0
        %4029 = vmatprep.mubr.f32.mxu0 0.0
        %4030 = vmatmul.mubr.f32.gmra.mrb[0].mxu0 %v3787
        %v4031 = vpop.f32.mrb[0].mxu0
        %v4032 = vadd.f32 0.0, %v4031
        %v4033 = vpop.f32.mrb[0].mxu0
        %4034 = vmatprep.mubr.f32.mxu0 0.0
        %4035 = vmatmul.mubr.f32.gmra.mrb[0].mxu0 %v3790
        %v4036 = vpop.f32.mrb[0].mxu0
        %v4037 = vadd.f32 0.0, %v4036
        %v4038 = vpop.f32.mrb[0].mxu0
        %4039 = vdwg.mxu0
        %v4040 = vadd.f32 %v3610, %v3862
        %v4041 = vadd.f32 %v3611, %v3867
        %v4042 = vadd.f32 %v3612, %v3872
        %v4043 = vadd.f32 %v3613, %v3877
        %v4044 = vadd.f32 %v3614, %v3882
        %v4045 = vadd.f32 %v3615, %v3887
        %v4046 = vadd.f32 %v3616, %v3892
        %v4047 = vadd.f32 %v3617, %v3897
        %v4048 = vadd.f32 %v3618, %v3902
        %v4049 = vadd.f32 %v3619, %v3907
        %v4050 = vadd.f32 %v3620, %v3912
        %v4051 = vadd.f32 %v3621, %v3917
        %v4052 = vadd.f32 %v3622, %v3922
        %v4053 = vadd.f32 %v3623, %v3927
        %v4054 = vadd.f32 %v3624, %v3932
        %v4055 = vadd.f32 %v3625, %v3937
        %v4056 = vadd.f32 %v3626, %v3942
        %v4057 = vadd.f32 %v3627, %v3947
        %v4058 = vadd.f32 %v3628, %v3952
        %v4059 = vadd.f32 %v3629, %v3957
        %v4060 = vadd.f32 %v3630, %v3962
        %v4061 = vadd.f32 %v3631, %v3967
        %v4062 = vadd.f32 %v3632, %v3972
        %v4063 = vadd.f32 %v3633, %v3977
        %v4064 = vadd.f32 %v3634, %v3982
        %v4065 = vadd.f32 %v3635, %v3987
        %v4066 = vadd.f32 %v3636, %v3992
        %v4067 = vadd.f32 %v3637, %v3997
        %v4068 = vadd.f32 %v3638, %v4002
        %v4069 = vadd.f32 %v3639, %v4007
        %v4070 = vadd.f32 %v3640, %v4012
        %v4071 = vadd.f32 %v3641, %v4017
        %v4072 = vadd.f32 %v3642, %v4022
        %v4073 = vadd.f32 %v3643, %v4027
        %v4074 = vadd.f32 %v3644, %v4032
        %v4075 = vadd.f32 %v3645, %v4037
        %v4076 = vld [vmem:[%s3] sm:$0x1]
        %v4078 = vlaneseq
        %v4079 = vshrl.u32 %v4078, 7
        %v4080 = vsub.s32 0, %v4079
        %v4081 = vrot.slane %v4076, %v4080
        %v4083 = vadd.f32 %v4040, %v4081
        %v4084 = vadd.f32 %v4041, %v4081
        %v4085 = vadd.f32 %v4042, %v4081
        %v4086 = vadd.f32 %v4043, %v4081
        %v4087 = vadd.f32 %v4044, %v4081
        %v4088 = vadd.f32 %v4045, %v4081
        %v4089 = vadd.f32 %v4046, %v4081
        %v4090 = vadd.f32 %v4047, %v4081
        %v4091 = vadd.f32 %v4048, %v4081
        %v4092 = vadd.f32 %v4049, %v4081
        %v4093 = vadd.f32 %v4050, %v4081
        %v4094 = vadd.f32 %v4051, %v4081
        %v4095 = vadd.f32 %v4052, %v4081
        %v4096 = vadd.f32 %v4053, %v4081
        %v4097 = vadd.f32 %v4054, %v4081
        %v4098 = vadd.f32 %v4055, %v4081
        %v4099 = vadd.f32 %v4056, %v4081
        %v4100 = vadd.f32 %v4057, %v4081
        %v4101 = vadd.f32 %v4058, %v4081
        %v4102 = vadd.f32 %v4059, %v4081
        %v4103 = vadd.f32 %v4060, %v4081
        %v4104 = vadd.f32 %v4061, %v4081
        %v4105 = vadd.f32 %v4062, %v4081
        %v4106 = vadd.f32 %v4063, %v4081
        %v4107 = vadd.f32 %v4064, %v4081
        %v4108 = vadd.f32 %v4065, %v4081
        %v4109 = vadd.f32 %v4066, %v4081
        %v4110 = vadd.f32 %v4067, %v4081
        %v4111 = vadd.f32 %v4068, %v4081
        %v4112 = vadd.f32 %v4069, %v4081
        %v4113 = vadd.f32 %v4070, %v4081
        %v4114 = vadd.f32 %v4071, %v4081
        %v4115 = vadd.f32 %v4072, %v4081
        %v4116 = vadd.f32 %v4073, %v4081
        %v4117 = vadd.f32 %v4074, %v4081
        %v4118 = vadd.f32 %v4075, %v4081
        %p4119 = scmp.eq.s32.totalorder %s24, 0
        // Predicated region
        $region45: #{_fused_forward.1} parent=39 // pred_check
          %p4120 = pneg %p4119
        $region46: #{_fused_forward.1} parent=39 // pred_check_branch
          %4122 = sbr.rel (%p4120) target = $region48
        $region47: #{_fused_forward.1} parent=39 // pred_region
          %v4123 = vld [vmem:[%s4] sm:$0xff]
          %v4124 = vld [vmem:[%s4 + $0x8] sm:$0xff]
          %v4125 = vld [vmem:[%s4 + $0x10] sm:$0xff]
          %v4126 = vld [vmem:[%s4 + $0x18] sm:$0xff]
          %v4127 = vld [vmem:[%s4 + $0x20] sm:$0xff]
          %v4128 = vld [vmem:[%s4 + $0x28] sm:$0xff]
          %v4129 = vld [vmem:[%s4 + $0x30] sm:$0xff]
          %v4130 = vld [vmem:[%s4 + $0x38] sm:$0xff]
          %v4131 = vld [vmem:[%s4 + $0x40] sm:$0xff]
          %v4132 = vld [vmem:[%s4 + $0x48] sm:$0xff]
          %v4133 = vld [vmem:[%s4 + $0x50] sm:$0xff]
          %v4134 = vld [vmem:[%s4 + $0x58] sm:$0xff]
          %v4135 = vld [vmem:[%s4 + $0x60] sm:$0xff]
          %v4136 = vld [vmem:[%s4 + $0x68] sm:$0xff]
          %v4137 = vld [vmem:[%s4 + $0x70] sm:$0xff]
          %v4138 = vld [vmem:[%s4 + $0x78] sm:$0xff]
          %v4139 = vld [vmem:[%s4 + $0x80] sm:$0xff]
          %v4140 = vld [vmem:[%s4 + $0x88] sm:$0xff]
          %v4141 = vld [vmem:[%s4 + $0x90] sm:$0xff]
          %v4142 = vld [vmem:[%s4 + $0x98] sm:$0xff]
          %v4143 = vld [vmem:[%s4 + $0xa0] sm:$0xff]
          %v4144 = vld [vmem:[%s4 + $0xa8] sm:$0xff]
          %v4145 = vld [vmem:[%s4 + $0xb0] sm:$0xff]
          %v4146 = vld [vmem:[%s4 + $0xb8] sm:$0xff]
          %v4147 = vld [vmem:[%s4 + $0xc0] sm:$0xff]
          %v4148 = vld [vmem:[%s4 + $0xc8] sm:$0xff]
          %v4149 = vld [vmem:[%s4 + $0xd0] sm:$0xff]
          %v4150 = vld [vmem:[%s4 + $0xd8] sm:$0xff]
          %v4151 = vld [vmem:[%s4 + $0xe0] sm:$0xff]
          %v4152 = vld [vmem:[%s4 + $0xe8] sm:$0xff]
          %v4153 = vld [vmem:[%s4 + $0xf0] sm:$0xff]
          %v4154 = vld [vmem:[%s4 + $0xf8] sm:$0xff]
          %v4155 = vld [vmem:[%s4 + $0x100] sm:$0xff]
          %v4156 = vld [vmem:[%s4 + $0x108] sm:$0xff]
          %v4157 = vld [vmem:[%s4 + $0x110] sm:$0xff]
          %v4158 = vld [vmem:[%s4 + $0x118] sm:$0xff]
          %vm4159 = vcmp.gt.f32.partialorder %v4123, 0.5
          %vm4160 = vcmp.gt.f32.partialorder %v4124, 0.5
          %vm4161 = vcmp.gt.f32.partialorder %v4125, 0.5
          %vm4162 = vcmp.gt.f32.partialorder %v4126, 0.5
          %vm4163 = vcmp.gt.f32.partialorder %v4127, 0.5
          %vm4164 = vcmp.gt.f32.partialorder %v4128, 0.5
          %vm4165 = vcmp.gt.f32.partialorder %v4129, 0.5
          %vm4166 = vcmp.gt.f32.partialorder %v4130, 0.5
          %vm4167 = vcmp.gt.f32.partialorder %v4131, 0.5
          %vm4168 = vcmp.gt.f32.partialorder %v4132, 0.5
          %vm4169 = vcmp.gt.f32.partialorder %v4133, 0.5
          %vm4170 = vcmp.gt.f32.partialorder %v4134, 0.5
          %vm4171 = vcmp.gt.f32.partialorder %v4135, 0.5
          %vm4172 = vcmp.gt.f32.partialorder %v4136, 0.5
          %vm4173 = vcmp.gt.f32.partialorder %v4137, 0.5
          %vm4174 = vcmp.gt.f32.partialorder %v4138, 0.5
          %vm4175 = vcmp.gt.f32.partialorder %v4139, 0.5
          %vm4176 = vcmp.gt.f32.partialorder %v4140, 0.5
          %vm4177 = vcmp.gt.f32.partialorder %v4141, 0.5
          %vm4178 = vcmp.gt.f32.partialorder %v4142, 0.5
          %vm4179 = vcmp.gt.f32.partialorder %v4143, 0.5
          %vm4180 = vcmp.gt.f32.partialorder %v4144, 0.5
          %vm4181 = vcmp.gt.f32.partialorder %v4145, 0.5
          %vm4182 = vcmp.gt.f32.partialorder %v4146, 0.5
          %vm4183 = vcmp.gt.f32.partialorder %v4147, 0.5
          %vm4184 = vcmp.gt.f32.partialorder %v4148, 0.5
          %vm4185 = vcmp.gt.f32.partialorder %v4149, 0.5
          %vm4186 = vcmp.gt.f32.partialorder %v4150, 0.5
          %vm4187 = vcmp.gt.f32.partialorder %v4151, 0.5
          %vm4188 = vcmp.gt.f32.partialorder %v4152, 0.5
          %vm4189 = vcmp.gt.f32.partialorder %v4153, 0.5
          %vm4190 = vcmp.gt.f32.partialorder %v4154, 0.5
          %vm4191 = vcmp.gt.f32.partialorder %v4155, 0.5
          %vm4192 = vcmp.gt.f32.partialorder %v4156, 0.5
          %vm4193 = vcmp.gt.f32.partialorder %v4157, 0.5
          %vm4194 = vcmp.gt.f32.partialorder %v4158, 0.5
          %v4195 = vsel %vm4159, %v4083, inf
          %v4196 = vsel %vm4160, %v4084, inf
          %v4197 = vsel %vm4161, %v4085, inf
          %v4198 = vsel %vm4162, %v4086, inf
          %v4199 = vsel %vm4163, %v4087, inf
          %v4200 = vsel %vm4164, %v4088, inf
          %v4201 = vsel %vm4165, %v4089, inf
          %v4202 = vsel %vm4166, %v4090, inf
          %v4203 = vsel %vm4167, %v4091, inf
          %v4204 = vsel %vm4168, %v4092, inf
          %v4205 = vsel %vm4169, %v4093, inf
          %v4206 = vsel %vm4170, %v4094, inf
          %v4207 = vsel %vm4171, %v4095, inf
          %v4208 = vsel %vm4172, %v4096, inf
          %v4209 = vsel %vm4173, %v4097, inf
          %v4210 = vsel %vm4174, %v4098, inf
          %v4211 = vsel %vm4175, %v4099, inf
          %v4212 = vsel %vm4176, %v4100, inf
          %v4213 = vsel %vm4177, %v4101, inf
          %v4214 = vsel %vm4178, %v4102, inf
          %v4215 = vsel %vm4179, %v4103, inf
          %v4216 = vsel %vm4180, %v4104, inf
          %v4217 = vsel %vm4181, %v4105, inf
          %v4218 = vsel %vm4182, %v4106, inf
          %v4219 = vsel %vm4183, %v4107, inf
          %v4220 = vsel %vm4184, %v4108, inf
          %v4221 = vsel %vm4185, %v4109, inf
          %v4222 = vsel %vm4186, %v4110, inf
          %v4223 = vsel %vm4187, %v4111, inf
          %v4224 = vsel %vm4188, %v4112, inf
          %v4225 = vsel %vm4189, %v4113, inf
          %v4226 = vsel %vm4190, %v4114, inf
          %v4227 = vsel %vm4191, %v4115, inf
          %v4228 = vsel %vm4192, %v4116, inf
          %v4229 = vsel %vm4193, %v4117, inf
          %v4230 = vsel %vm4194, %v4118, inf
          %v4231 = vmin.f32 %v4195, %v4199
          %v4232 = vmin.f32 %v4196, %v4200
          %v4233 = vmin.f32 %v4197, %v4201
          %v4234 = vmin.f32 %v4198, %v4202
          %v4235 = vmin.f32 %v4231, %v4203
          %v4236 = vmin.f32 %v4232, %v4204
          %v4237 = vmin.f32 %v4233, %v4205
          %v4238 = vmin.f32 %v4234, %v4206
          %v4239 = vmin.f32 %v4235, %v4207
          %v4240 = vmin.f32 %v4236, %v4208
          %v4241 = vmin.f32 %v4237, %v4209
          %v4242 = vmin.f32 %v4238, %v4210
          %v4243 = vmin.f32 %v4239, %v4211
          %v4244 = vmin.f32 %v4240, %v4212
          %v4245 = vmin.f32 %v4241, %v4213
          %v4246 = vmin.f32 %v4242, %v4214
          %v4247 = vmin.f32 %v4243, %v4215
          %v4248 = vmin.f32 %v4244, %v4216
          %v4249 = vmin.f32 %v4245, %v4217
          %v4250 = vmin.f32 %v4246, %v4218
          %v4251 = vmin.f32 %v4247, %v4219
          %v4252 = vmin.f32 %v4248, %v4220
          %v4253 = vmin.f32 %v4249, %v4221
          %v4254 = vmin.f32 %v4250, %v4222
          %v4255 = vmin.f32 %v4251, %v4223
          %v4256 = vmin.f32 %v4252, %v4224
          %v4257 = vmin.f32 %v4253, %v4225
          %v4258 = vmin.f32 %v4254, %v4226
          %v4259 = vmin.f32 %v4255, %v4227
          %v4260 = vmin.f32 %v4256, %v4228
          %v4261 = vmin.f32 %v4257, %v4229
          %v4262 = vmin.f32 %v4258, %v4230
          %v4263 = vmin.f32 %v4259, %v4260
          %v4264 = vmin.f32 %v4261, %v4262
          %v4265 = vmin.f32 %v4263, %v4264
          %4266 = vmin.xlane.f32.xlu0 %v4265
          %v4267 = vpop.xlane.xlu0 %4266
          %v4268 = vrot.slane %v4267, 4
          %v4269 = vmin.f32 %v4267, %v4268
          %v4270 = vrot.slane %v4269, 2
          %v4271 = vmin.f32 %v4269, %v4270
          %v4272 = vrot.slane %v4271, 1
          %v4273 = vmin.f32 %v4271, %v4272
          %s4274 = vtos %v4273
          %v4275 = vsel %vm4159, %v4083, -inf
          %v4276 = vsel %vm4160, %v4084, -inf
          %v4277 = vsel %vm4161, %v4085, -inf
          %v4278 = vsel %vm4162, %v4086, -inf
          %v4279 = vsel %vm4163, %v4087, -inf
          %v4280 = vsel %vm4164, %v4088, -inf
          %v4281 = vsel %vm4165, %v4089, -inf
          %v4282 = vsel %vm4166, %v4090, -inf
          %v4283 = vsel %vm4167, %v4091, -inf
          %v4284 = vsel %vm4168, %v4092, -inf
          %v4285 = vsel %vm4169, %v4093, -inf
          %v4286 = vsel %vm4170, %v4094, -inf
          %v4287 = vsel %vm4171, %v4095, -inf
          %v4288 = vsel %vm4172, %v4096, -inf
          %v4289 = vsel %vm4173, %v4097, -inf
          %v4290 = vsel %vm4174, %v4098, -inf
          %v4291 = vsel %vm4175, %v4099, -inf
          %v4292 = vsel %vm4176, %v4100, -inf
          %v4293 = vsel %vm4177, %v4101, -inf
          %v4294 = vsel %vm4178, %v4102, -inf
          %v4295 = vsel %vm4179, %v4103, -inf
          %v4296 = vsel %vm4180, %v4104, -inf
          %v4297 = vsel %vm4181, %v4105, -inf
          %v4298 = vsel %vm4182, %v4106, -inf
          %v4299 = vsel %vm4183, %v4107, -inf
          %v4300 = vsel %vm4184, %v4108, -inf
          %v4301 = vsel %vm4185, %v4109, -inf
          %v4302 = vsel %vm4186, %v4110, -inf
          %v4303 = vsel %vm4187, %v4111, -inf
          %v4304 = vsel %vm4188, %v4112, -inf
          %v4305 = vsel %vm4189, %v4113, -inf
          %v4306 = vsel %vm4190, %v4114, -inf
          %v4307 = vsel %vm4191, %v4115, -inf
          %v4308 = vsel %vm4192, %v4116, -inf
          %v4309 = vsel %vm4193, %v4117, -inf
          %v4310 = vsel %vm4194, %v4118, -inf
          %v4311 = vmax.f32 %v4275, %v4279
          %v4312 = vmax.f32 %v4276, %v4280
          %v4313 = vmax.f32 %v4277, %v4281
          %v4314 = vmax.f32 %v4278, %v4282
          %v4315 = vmax.f32 %v4311, %v4283
          %v4316 = vmax.f32 %v4312, %v4284
          %v4317 = vmax.f32 %v4313, %v4285
          %v4318 = vmax.f32 %v4314, %v4286
          %v4319 = vmax.f32 %v4315, %v4287
          %v4320 = vmax.f32 %v4316, %v4288
          %v4321 = vmax.f32 %v4317, %v4289
          %v4322 = vmax.f32 %v4318, %v4290
          %v4323 = vmax.f32 %v4319, %v4291
          %v4324 = vmax.f32 %v4320, %v4292
          %v4325 = vmax.f32 %v4321, %v4293
          %v4326 = vmax.f32 %v4322, %v4294
          %v4327 = vmax.f32 %v4323, %v4295
          %v4328 = vmax.f32 %v4324, %v4296
          %v4329 = vmax.f32 %v4325, %v4297
          %v4330 = vmax.f32 %v4326, %v4298
          %v4331 = vmax.f32 %v4327, %v4299
          %v4332 = vmax.f32 %v4328, %v4300
          %v4333 = vmax.f32 %v4329, %v4301
          %v4334 = vmax.f32 %v4330, %v4302
          %v4335 = vmax.f32 %v4331, %v4303
          %v4336 = vmax.f32 %v4332, %v4304
          %v4337 = vmax.f32 %v4333, %v4305
          %v4338 = vmax.f32 %v4334, %v4306
          %v4339 = vmax.f32 %v4335, %v4307
          %v4340 = vmax.f32 %v4336, %v4308
          %v4341 = vmax.f32 %v4337, %v4309
          %v4342 = vmax.f32 %v4338, %v4310
          %v4343 = vmax.f32 %v4339, %v4340
          %v4344 = vmax.f32 %v4341, %v4342
          %v4345 = vmax.f32 %v4343, %v4344
          %4346 = vmax.xlane.f32.xlu0 %v4345
          %v4347 = vpop.xlane.xlu0 %4346
          %v4348 = vrot.slane %v4347, 4
          %v4349 = vmax.f32 %v4347, %v4348
          %v4350 = vrot.slane %v4349, 2
          %v4351 = vmax.f32 %v4349, %v4350
          %v4352 = vrot.slane %v4351, 1
          %v4353 = vmax.f32 %v4351, %v4352
          %s4354 = vtos %v4353
          %p4355 = scmp.eq.s32.totalorder %s25, 0
          // Predicated region
          $region49: #{_fused_forward.1} parent=47 // pred_check
            %p4356 = pneg %p4355
          $region50: #{_fused_forward.1} parent=47 // pred_check_branch
            %4358 = sbr.rel (%p4356) target = $region52
          $region51: #{_fused_forward.1} parent=47 // pred_region
            %s4359 = scalar_lea.smem [#allocation2], 0
            %4360 = sst [smem:[%s4359]] %s4274
            %s4361 = scalar_lea.smem [#allocation2], 1
            %4362 = sst [smem:[%s4361]] %s4354
          $region52: #{_fused_forward.1} parent=47 // pred_fallthru
            _
          %p4363 = scmp.gt.s32.totalorder %s25, 0
          // Predicated region
          $region53: #{_fused_forward.1} parent=47 // pred_check
            %p4364 = pneg %p4363
          $region54: #{_fused_forward.1} parent=47 // pred_check_branch
            %4366 = sbr.rel (%p4364) target = $region56
          $region55: #{_fused_forward.1} parent=47 // pred_region
            %s4367 = sld [smem:[#allocation2]]
            %s4368 = smin.f32 %s4367, %s4274
            %s4369 = scalar_lea.smem [#allocation2], 0
            %4370 = sst [smem:[%s4369]] %s4368
            %s4371 = sld [smem:[#allocation2 + $0x1]]
            %s4372 = smax.f32 %s4371, %s4354
            %s4373 = scalar_lea.smem [#allocation2], 1
            %4374 = sst [smem:[%s4373]] %s4372
          $region56: #{_fused_forward.1} parent=47 // pred_fallthru
            _
          %4375 = vst [vmem:[%s276] sm:$0xff] %v4083
          %4376 = vst [vmem:[%s276 + $0x8] sm:$0xff] %v4084
          %4377 = vst [vmem:[%s276 + $0x10] sm:$0xff] %v4085
          %4378 = vst [vmem:[%s276 + $0x18] sm:$0xff] %v4086
          %4379 = vst [vmem:[%s276 + $0x20] sm:$0xff] %v4087
          %4380 = vst [vmem:[%s276 + $0x28] sm:$0xff] %v4088
          %4381 = vst [vmem:[%s276 + $0x30] sm:$0xff] %v4089
          %4382 = vst [vmem:[%s276 + $0x38] sm:$0xff] %v4090
          %4383 = vst [vmem:[%s276 + $0x40] sm:$0xff] %v4091
          %4384 = vst [vmem:[%s276 + $0x48] sm:$0xff] %v4092
          %4385 = vst [vmem:[%s276 + $0x50] sm:$0xff] %v4093
          %4386 = vst [vmem:[%s276 + $0x58] sm:$0xff] %v4094
          %4387 = vst [vmem:[%s276 + $0x60] sm:$0xff] %v4095
          %4388 = vst [vmem:[%s276 + $0x68] sm:$0xff] %v4096
          %4389 = vst [vmem:[%s276 + $0x70] sm:$0xff] %v4097
          %4390 = vst [vmem:[%s276 + $0x78] sm:$0xff] %v4098
          %4391 = vst [vmem:[%s276 + $0x80] sm:$0xff] %v4099
          %4392 = vst [vmem:[%s276 + $0x88] sm:$0xff] %v4100
          %4393 = vst [vmem:[%s276 + $0x90] sm:$0xff] %v4101
          %4394 = vst [vmem:[%s276 + $0x98] sm:$0xff] %v4102
          %4395 = vst [vmem:[%s276 + $0xa0] sm:$0xff] %v4103
          %4396 = vst [vmem:[%s276 + $0xa8] sm:$0xff] %v4104
          %4397 = vst [vmem:[%s276 + $0xb0] sm:$0xff] %v4105
          %4398 = vst [vmem:[%s276 + $0xb8] sm:$0xff] %v4106
          %4399 = vst [vmem:[%s276 + $0xc0] sm:$0xff] %v4107
          %4400 = vst [vmem:[%s276 + $0xc8] sm:$0xff] %v4108
          %4401 = vst [vmem:[%s276 + $0xd0] sm:$0xff] %v4109
          %4402 = vst [vmem:[%s276 + $0xd8] sm:$0xff] %v4110
          %4403 = vst [vmem:[%s276 + $0xe0] sm:$0xff] %v4111
          %4404 = vst [vmem:[%s276 + $0xe8] sm:$0xff] %v4112
          %4405 = vst [vmem:[%s276 + $0xf0] sm:$0xff] %v4113
          %4406 = vst [vmem:[%s276 + $0xf8] sm:$0xff] %v4114
          %4407 = vst [vmem:[%s276 + $0x100] sm:$0xff] %v4115
          %4408 = vst [vmem:[%s276 + $0x108] sm:$0xff] %v4116
          %4409 = vst [vmem:[%s276 + $0x110] sm:$0xff] %v4117
          %4410 = vst [vmem:[%s276 + $0x118] sm:$0xff] %v4118
        $region48: #{_fused_forward.1} parent=39 // pred_fallthru
          _
        %p4411 = scmp.eq.s32.totalorder %s24, 1
        // Predicated region
        $region57: #{_fused_forward.1} parent=39 // pred_check
          %p4412 = pneg %p4411
        $region58: #{_fused_forward.1} parent=39 // pred_check_branch
          %4414 = sbr.rel (%p4412) target = $region60
        $region59: #{_fused_forward.1} parent=39 // pred_region
          %p4415 = scmp.eq.s32.totalorder %s25, 0
          // Predicated region
          $region61: #{_fused_forward.1} parent=59 // pred_check
            %p4416 = pneg %p4415
          $region62: #{_fused_forward.1} parent=59 // pred_check_branch
            %4418 = sbr.rel (%p4416) target = $region64
          $region63: #{_fused_forward.1} parent=59 // pred_region
            %s4419 = sld [smem:[#allocation2]]
            %s4420 = sld [smem:[#allocation2 + $0x1]]
            %s4421 = sld [smem:[#allocation3]]
            %s4422 = sld [smem:[#allocation3 + $0x1]]
            %s4423 = sld [smem:[#allocation3 + $0x2]]
            %s4424 = sld [smem:[#allocation3 + $0x3]]
            %s4425 = sld [smem:[#allocation3 + $0x4]]
            %s4426 = sld [smem:[#allocation3 + $0x5]]
            %s4427 = sld [smem:[#allocation3 + $0x6]]
            %s4428 = sld [smem:[#allocation3 + $0x7]]
            %p4429 = scmp.gt.f32.partialorder %s4428, 0.5
            %s4430 = sld [smem:[#allocation3 + $0x8]]
            %s4431 = smul.f32 %s4421, %s4425
            %s4432 = ssub.f32 1.0, %s4425
            %s4433 = smul.f32 %s4432, %s4419
            %s4434 = sadd.f32 %s4431, %s4433
            %s4435 = smul.f32 %s4422, %s4425
            %s4436 = smul.f32 %s4432, %s4420
            %s4437 = sadd.f32 %s4435, %s4436
            %v4438 = vstv %s4426
            %v4439 = vrcp.pop %v4438
            %s4440 = vtos %v4439
            %s4441 = smul.f32 %s4434, %s4440
            %v4442 = vstv %s4426
            %v4443 = vrcp.pop %v4442
            %s4444 = vtos %v4443
            %s4445 = smul.f32 %s4437, %s4444
            %s4446 = scalar_select %p4429, %s4434, %s4421
            %s4447 = scalar_select %p4429, %s4437, %s4422
            %s4448 = scalar_select %p4429, %s4441, %s4423
            %s4449 = scalar_select %p4429, %s4445, %s4424
            %s4450 = sand.u32 2147483647, %s4448
            %s4451 = sand.u32 2147483647, %s4449
            %s4452 = smax.f32 %s4450, %s4451
            %p4453 = scmp.eq.f32.partialorder %s4452, 0.0
            %s4454 = scalar_select %p4453, %s4427, %s4452
            %v4455 = vstv %s4454
            %v4456 = vrcp.pop %v4455
            %s4457 = vtos %v4456
            %s4458 = smul.f32 %s4427, %s4457
            %s4459 = scalar_select %p4429, %s4458, %s4430
            %v4460 = vstv %s4459
            %v4461 = vrcp.pop %v4460
            %s4462 = vtos %v4461
            %s4463 = scalar_lea.smem [#allocation2], 2
            %4464 = sst [smem:[%s4463]] %s4452
            %s4465 = scalar_lea.smem [#allocation2], 3
            %4466 = sst [smem:[%s4465]] %s4459
            %s4467 = scalar_lea.smem [#allocation2], 4
            %4468 = sst [smem:[%s4467]] %s4462
            %s4469 = scalar_lea.smem [#allocation6], 0
            %4470 = sst [smem:[%s4469]] %s4446
            %s4471 = scalar_lea.smem [#allocation6], 1
            %4472 = sst [smem:[%s4471]] %s4448
            %s4473 = scalar_lea.smem [#allocation6], 2
            %4474 = sst [smem:[%s4473]] %s4447
            %s4475 = scalar_lea.smem [#allocation6], 3
            %4476 = sst [smem:[%s4475]] %s4449
            %s4477 = scalar_lea.smem [#allocation6], 4
            %4478 = sst [smem:[%s4477]] %s4459
            %s4479 = scalar_lea.smem [#allocation6], 5
            %4480 = sst [smem:[%s4479]] 0.0
            %s4481 = scalar_lea.smem [#allocation6], 6
            %4482 = sst [smem:[%s4481]] %s4419
            %s4483 = scalar_lea.smem [#allocation6], 7
            %4484 = sst [smem:[%s4483]] %s4420
          $region64: #{_fused_forward.1} parent=59 // pred_fallthru
            _
          %s4485 = sld [smem:[#allocation2 + $0x2]]
          %s4486 = sld [smem:[#allocation2 + $0x3]]
          %s4487 = sld [smem:[#allocation2 + $0x4]]
          %s4488 = ssub.f32 0.0, %s4485
          %v4489 = vstv %s4488
          %v4490 = vmax.f32 %v4489, %v4083
          %v4491 = vmax.f32 %v4489, %v4084
          %v4492 = vmax.f32 %v4489, %v4085
          %v4493 = vmax.f32 %v4489, %v4086
          %v4494 = vmax.f32 %v4489, %v4087
          %v4495 = vmax.f32 %v4489, %v4088
          %v4496 = vmax.f32 %v4489, %v4089
          %v4497 = vmax.f32 %v4489, %v4090
          %v4498 = vmax.f32 %v4489, %v4091
          %v4499 = vmax.f32 %v4489, %v4092
          %v4500 = vmax.f32 %v4489, %v4093
          %v4501 = vmax.f32 %v4489, %v4094
          %v4502 = vmax.f32 %v4489, %v4095
          %v4503 = vmax.f32 %v4489, %v4096
          %v4504 = vmax.f32 %v4489, %v4097
          %v4505 = vmax.f32 %v4489, %v4098
          %v4506 = vmax.f32 %v4489, %v4099
          %v4507 = vmax.f32 %v4489, %v4100
          %v4508 = vmax.f32 %v4489, %v4101
          %v4509 = vmax.f32 %v4489, %v4102
          %v4510 = vmax.f32 %v4489, %v4103
          %v4511 = vmax.f32 %v4489, %v4104
          %v4512 = vmax.f32 %v4489, %v4105
          %v4513 = vmax.f32 %v4489, %v4106
          %v4514 = vmax.f32 %v4489, %v4107
          %v4515 = vmax.f32 %v4489, %v4108
          %v4516 = vmax.f32 %v4489, %v4109
          %v4517 = vmax.f32 %v4489, %v4110
          %v4518 = vmax.f32 %v4489, %v4111
          %v4519 = vmax.f32 %v4489, %v4112
          %v4520 = vmax.f32 %v4489, %v4113
          %v4521 = vmax.f32 %v4489, %v4114
          %v4522 = vmax.f32 %v4489, %v4115
          %v4523 = vmax.f32 %v4489, %v4116
          %v4524 = vmax.f32 %v4489, %v4117
          %v4525 = vmax.f32 %v4489, %v4118
          %v4526 = vstv %s4485
          %v4527 = vmin.f32 %v4526, %v4490
          %v4528 = vmin.f32 %v4526, %v4491
          %v4529 = vmin.f32 %v4526, %v4492
          %v4530 = vmin.f32 %v4526, %v4493
          %v4531 = vmin.f32 %v4526, %v4494
          %v4532 = vmin.f32 %v4526, %v4495
          %v4533 = vmin.f32 %v4526, %v4496
          %v4534 = vmin.f32 %v4526, %v4497
          %v4535 = vmin.f32 %v4526, %v4498
          %v4536 = vmin.f32 %v4526, %v4499
          %v4537 = vmin.f32 %v4526, %v4500
          %v4538 = vmin.f32 %v4526, %v4501
          %v4539 = vmin.f32 %v4526, %v4502
          %v4540 = vmin.f32 %v4526, %v4503
          %v4541 = vmin.f32 %v4526, %v4504
          %v4542 = vmin.f32 %v4526, %v4505
          %v4543 = vmin.f32 %v4526, %v4506
          %v4544 = vmin.f32 %v4526, %v4507
          %v4545 = vmin.f32 %v4526, %v4508
          %v4546 = vmin.f32 %v4526, %v4509
          %v4547 = vmin.f32 %v4526, %v4510
          %v4548 = vmin.f32 %v4526, %v4511
          %v4549 = vmin.f32 %v4526, %v4512
          %v4550 = vmin.f32 %v4526, %v4513
          %v4551 = vmin.f32 %v4526, %v4514
          %v4552 = vmin.f32 %v4526, %v4515
          %v4553 = vmin.f32 %v4526, %v4516
          %v4554 = vmin.f32 %v4526, %v4517
          %v4555 = vmin.f32 %v4526, %v4518
          %v4556 = vmin.f32 %v4526, %v4519
          %v4557 = vmin.f32 %v4526, %v4520
          %v4558 = vmin.f32 %v4526, %v4521
          %v4559 = vmin.f32 %v4526, %v4522
          %v4560 = vmin.f32 %v4526, %v4523
          %v4561 = vmin.f32 %v4526, %v4524
          %v4562 = vmin.f32 %v4526, %v4525
          %v4563 = vstv %s4486
          %v4564 = vmul.f32 %v4527, %v4563
          %v4565 = vmul.f32 %v4528, %v4563
          %v4566 = vmul.f32 %v4529, %v4563
          %v4567 = vmul.f32 %v4530, %v4563
          %v4568 = vmul.f32 %v4531, %v4563
          %v4569 = vmul.f32 %v4532, %v4563
          %v4570 = vmul.f32 %v4533, %v4563
          %v4571 = vmul.f32 %v4534, %v4563
          %v4572 = vmul.f32 %v4535, %v4563
          %v4573 = vmul.f32 %v4536, %v4563
          %v4574 = vmul.f32 %v4537, %v4563
          %v4575 = vmul.f32 %v4538, %v4563
          %v4576 = vmul.f32 %v4539, %v4563
          %v4577 = vmul.f32 %v4540, %v4563
          %v4578 = vmul.f32 %v4541, %v4563
          %v4579 = vmul.f32 %v4542, %v4563
          %v4580 = vmul.f32 %v4543, %v4563
          %v4581 = vmul.f32 %v4544, %v4563
          %v4582 = vmul.f32 %v4545, %v4563
          %v4583 = vmul.f32 %v4546, %v4563
          %v4584 = vmul.f32 %v4547, %v4563
          %v4585 = vmul.f32 %v4548, %v4563
          %v4586 = vmul.f32 %v4549, %v4563
          %v4587 = vmul.f32 %v4550, %v4563
          %v4588 = vmul.f32 %v4551, %v4563
          %v4589 = vmul.f32 %v4552, %v4563
          %v4590 = vmul.f32 %v4553, %v4563
          %v4591 = vmul.f32 %v4554, %v4563
          %v4592 = vmul.f32 %v4555, %v4563
          %v4593 = vmul.f32 %v4556, %v4563
          %v4594 = vmul.f32 %v4557, %v4563
          %v4595 = vmul.f32 %v4558, %v4563
          %v4596 = vmul.f32 %v4559, %v4563
          %v4597 = vmul.f32 %v4560, %v4563
          %v4598 = vmul.f32 %v4561, %v4563
          %v4599 = vmul.f32 %v4562, %v4563
          %v4600 = vround.ne.pseudo %v4564
          %v4601 = vround.ne.pseudo %v4565
          %v4602 = vround.ne.pseudo %v4566
          %v4603 = vround.ne.pseudo %v4567
          %v4604 = vround.ne.pseudo %v4568
          %v4605 = vround.ne.pseudo %v4569
          %v4606 = vround.ne.pseudo %v4570
          %v4607 = vround.ne.pseudo %v4571
          %v4608 = vround.ne.pseudo %v4572
          %v4609 = vround.ne.pseudo %v4573
          %v4610 = vround.ne.pseudo %v4574
          %v4611 = vround.ne.pseudo %v4575
          %v4612 = vround.ne.pseudo %v4576
          %v4613 = vround.ne.pseudo %v4577
          %v4614 = vround.ne.pseudo %v4578
          %v4615 = vround.ne.pseudo %v4579
          %v4616 = vround.ne.pseudo %v4580
          %v4617 = vround.ne.pseudo %v4581
          %v4618 = vround.ne.pseudo %v4582
          %v4619 = vround.ne.pseudo %v4583
          %v4620 = vround.ne.pseudo %v4584
          %v4621 = vround.ne.pseudo %v4585
          %v4622 = vround.ne.pseudo %v4586
          %v4623 = vround.ne.pseudo %v4587
          %v4624 = vround.ne.pseudo %v4588
          %v4625 = vround.ne.pseudo %v4589
          %v4626 = vround.ne.pseudo %v4590
          %v4627 = vround.ne.pseudo %v4591
          %v4628 = vround.ne.pseudo %v4592
          %v4629 = vround.ne.pseudo %v4593
          %v4630 = vround.ne.pseudo %v4594
          %v4631 = vround.ne.pseudo %v4595
          %v4632 = vround.ne.pseudo %v4596
          %v4633 = vround.ne.pseudo %v4597
          %v4634 = vround.ne.pseudo %v4598
          %v4635 = vround.ne.pseudo %v4599
          %v4636 = vstv %s4487
          %v4637 = vmul.f32 %v4600, %v4636
          %v4638 = vmul.f32 %v4601, %v4636
          %v4639 = vmul.f32 %v4602, %v4636
          %v4640 = vmul.f32 %v4603, %v4636
          %v4641 = vmul.f32 %v4604, %v4636
          %v4642 = vmul.f32 %v4605, %v4636
          %v4643 = vmul.f32 %v4606, %v4636
          %v4644 = vmul.f32 %v4607, %v4636
          %v4645 = vmul.f32 %v4608, %v4636
          %v4646 = vmul.f32 %v4609, %v4636
          %v4647 = vmul.f32 %v4610, %v4636
          %v4648 = vmul.f32 %v4611, %v4636
          %v4649 = vmul.f32 %v4612, %v4636
          %v4650 = vmul.f32 %v4613, %v4636
          %v4651 = vmul.f32 %v4614, %v4636
          %v4652 = vmul.f32 %v4615, %v4636
          %v4653 = vmul.f32 %v4616, %v4636
          %v4654 = vmul.f32 %v4617, %v4636
          %v4655 = vmul.f32 %v4618, %v4636
          %v4656 = vmul.f32 %v4619, %v4636
          %v4657 = vmul.f32 %v4620, %v4636
          %v4658 = vmul.f32 %v4621, %v4636
          %v4659 = vmul.f32 %v4622, %v4636
          %v4660 = vmul.f32 %v4623, %v4636
          %v4661 = vmul.f32 %v4624, %v4636
          %v4662 = vmul.f32 %v4625, %v4636
          %v4663 = vmul.f32 %v4626, %v4636
          %v4664 = vmul.f32 %v4627, %v4636
          %v4665 = vmul.f32 %v4628, %v4636
          %v4666 = vmul.f32 %v4629, %v4636
          %v4667 = vmul.f32 %v4630, %v4636
          %v4668 = vmul.f32 %v4631, %v4636
          %v4669 = vmul.f32 %v4632, %v4636
          %v4670 = vmul.f32 %v4633, %v4636
          %v4671 = vmul.f32 %v4634, %v4636
          %v4672 = vmul.f32 %v4635, %v4636
          %4673 = vst [vmem:[%s276] sm:$0xff] %v4637
          %4674 = vst [vmem:[%s276 + $0x8] sm:$0xff] %v4638
          %4675 = vst [vmem:[%s276 + $0x10] sm:$0xff] %v4639
          %4676 = vst [vmem:[%s276 + $0x18] sm:$0xff] %v4640
          %4677 = vst [vmem:[%s276 + $0x20] sm:$0xff] %v4641
          %4678 = vst [vmem:[%s276 + $0x28] sm:$0xff] %v4642
          %4679 = vst [vmem:[%s276 + $0x30] sm:$0xff] %v4643
          %4680 = vst [vmem:[%s276 + $0x38] sm:$0xff] %v4644
          %4681 = vst [vmem:[%s276 + $0x40] sm:$0xff] %v4645
          %4682 = vst [vmem:[%s276 + $0x48] sm:$0xff] %v4646
          %4683 = vst [vmem:[%s276 + $0x50] sm:$0xff] %v4647
          %4684 = vst [vmem:[%s276 + $0x58] sm:$0xff] %v4648
          %4685 = vst [vmem:[%s276 + $0x60] sm:$0xff] %v4649
          %4686 = vst [vmem:[%s276 + $0x68] sm:$0xff] %v4650
          %4687 = vst [vmem:[%s276 + $0x70] sm:$0xff] %v4651
          %4688 = vst [vmem:[%s276 + $0x78] sm:$0xff] %v4652
          %4689 = vst [vmem:[%s276 + $0x80] sm:$0xff] %v4653
          %4690 = vst [vmem:[%s276 + $0x88] sm:$0xff] %v4654
          %4691 = vst [vmem:[%s276 + $0x90] sm:$0xff] %v4655
          %4692 = vst [vmem:[%s276 + $0x98] sm:$0xff] %v4656
          %4693 = vst [vmem:[%s276 + $0xa0] sm:$0xff] %v4657
          %4694 = vst [vmem:[%s276 + $0xa8] sm:$0xff] %v4658
          %4695 = vst [vmem:[%s276 + $0xb0] sm:$0xff] %v4659
          %4696 = vst [vmem:[%s276 + $0xb8] sm:$0xff] %v4660
          %4697 = vst [vmem:[%s276 + $0xc0] sm:$0xff] %v4661
          %4698 = vst [vmem:[%s276 + $0xc8] sm:$0xff] %v4662
          %4699 = vst [vmem:[%s276 + $0xd0] sm:$0xff] %v4663
          %4700 = vst [vmem:[%s276 + $0xd8] sm:$0xff] %v4664
          %4701 = vst [vmem:[%s276 + $0xe0] sm:$0xff] %v4665
          %4702 = vst [vmem:[%s276 + $0xe8] sm:$0xff] %v4666
          %4703 = vst [vmem:[%s276 + $0xf0] sm:$0xff] %v4667
          %4704 = vst [vmem:[%s276 + $0xf8] sm:$0xff] %v4668
          %4705 = vst [vmem:[%s276 + $0x100] sm:$0xff] %v4669
          %4706 = vst [vmem:[%s276 + $0x108] sm:$0xff] %v4670
          %4707 = vst [vmem:[%s276 + $0x110] sm:$0xff] %v4671
          %4708 = vst [vmem:[%s276 + $0x118] sm:$0xff] %v4672
        $region60: #{_fused_forward.1} parent=39 // pred_fallthru
          _
        %p4709 = scmp.lt.s32.totalorder %s25, 1
        %s4710 = scalar_select %p4709, %s25, 1
        %s4711 = smul.addr %s4710, 36
        %s4712 = smul.addr %s4711, 8
        %s4713 = scalar_lea.vmem %s5, %s4712
        // Predicated region
        $region65: #{_fused_forward.1} parent=39 // pred_check
          %p4714 = pneg %p160
        $region66: #{_fused_forward.1} parent=39 // pred_check_branch
          %4716 = sbr.rel (%p4714) target = $region68
        $region67: #{_fused_forward.1} parent=39 // pred_region
          _
        $region68: #{_fused_forward.1} parent=39 // pred_fallthru
          _
        // Predicated region
        $region69: #{_fused_forward.1} parent=39 // pred_check
          %p4717 = pneg %p181
        $region70: #{_fused_forward.1} parent=39 // pred_check_branch
          %4719 = sbr.rel (%p4717) target = $region72
        $region71: #{_fused_forward.1} parent=39 // pred_region
          %s4721 = ssub.s32 16, 16
          %4722 = vsyncadd [#allocation4], %s4721
          %4725 = dma.smem_to_hbm [#allocation6], 16, %s6, [#allocation4]
        $region72: #{_fused_forward.1} parent=39 // pred_fallthru
          _
        // Predicated region
        $region73: #{_fused_forward.1} parent=39 // pred_check
          %p4726 = pneg %p181
        $region74: #{_fused_forward.1} parent=39 // pred_check_branch
          %4728 = sbr.rel (%p4726) target = $region76
        $region75: #{_fused_forward.1} parent=39 // pred_region
          %4729 = dma.done [#allocation4], 16
        $region76: #{_fused_forward.1} parent=39 // pred_fallthru
          _
        %4730 = sfence
      $region40: #{_fused_forward.1} parent=5 // pred_fallthru
        _
      %p4731 = scmp.le.s32.totalorder 2, %s15
      // Predicated region
      $region77: #{_fused_forward.1} parent=5 // pred_check
        %p4732 = pneg %p4731
      $region78: #{_fused_forward.1} parent=5 // pred_check_branch
        %4734 = sbr.rel (%p4732) target = $region80
      $region79: #{_fused_forward.1} parent=5 // pred_region
        %s4735 = ssub.s32 %s15, 2
        // Predicated region
        $region81: #{_fused_forward.1} parent=79 // pred_check
          %p4736 = pneg %p166
        $region82: #{_fused_forward.1} parent=79 // pred_check_branch
          %4738 = sbr.rel (%p4736) target = $region84
        $region83: #{_fused_forward.1} parent=79 // pred_region
          %p4739 = scmp.lt.s32.totalorder %s27, 1
          %s4740 = scalar_select %p4739, %s27, 1
          %s4741 = smul.addr %s4740, 36
          %s4742 = smul.addr %s4741, 8
          %s4743 = scalar_lea.vmem %s5, %s4742
        $region84: #{_fused_forward.1} parent=79 // pred_fallthru
          _
      $region80: #{_fused_forward.1} parent=5 // pred_fallthru
        _
    $region6: #{_fused_forward.1} parent=1 // loop_footer
      %s19 = sadd.s32 1, %s15
    $region7: #{_fused_forward.1} parent=1 // loop_footer_branch
      %14 = sbr.rel target = $region3
    $region8: #{_fused_forward.1} parent=1 // loop_exit
      _
    %4744 = vsyncpa [#allocation4], 1
    %s4745 = scalar_lea.sflag [#allocation4], 1
    %4746 = vsyncpa %s4745, 1
    %4747 = vsyncpa [#allocation5], 1
    %s4748 = scalar_lea.sflag [#allocation5], 1
    %4749 = vsyncpa %s4748, 1

</llo_original>
